<compile_context>
chip_gen: v7x
topology: tpu7x:2x2x1
jax: 0.10.0
libtpu: 0.0.40
codegen_flags: <defaults>
</compile_context>

<pallas_src>
import jax
import jax.numpy as jnp
from jax.experimental import pallas as pl
from jax.experimental.pallas import tpu as pltpu

# Small synthetic shapes consistent with the module's forward.
H = 16           # coarse feature height
W = 16           # coarse feature width
C_IN = 4         # in_channels
C_MID = 8        # mid_channels
DESC_LEN = 128   # descriptor_length (256 in real model); 128 keeps lanes dense
REDUCTION = 8    # reduction factor
N_PTS = 8        # number of keypoints

WP = W + 2                                   # padded width (conv pad=1)
NPIX = H * WP                                # rows of the shifted-flat conv output
_PAD_ROWS = (H + 2) * WP                     # rows of the padded, flattened input
NROWS = ((_PAD_ROWS + 2 + 7) // 8) * 8       # +2 so the (ky=2,kx=2) slab is in bounds


def _sp_descriptor_kernel(x_ref, w1_ref, b1_ref, w2_ref, b2_ref, grid_ref,
                          out_ref, hacc_ref, coarse_ref):
    """Fused SPHead + channel L2-norm + bilinear grid_sample + point L2-norm.

    x_ref     : (NROWS, C_IN)      zero-padded input, flattened row-major
                                   (H+2, W+2, C_IN) -> ((H+2)*(W+2), C_IN), tail-padded
    w1_ref    : (9, C_IN, C_MID)   3x3 conv weight, k = ky*3 + kx
    b1_ref    : (1, C_MID)
    w2_ref    : (C_MID, DESC_LEN)  1x1 conv weight
    b2_ref    : (1, DESC_LEN)
    grid_ref  : (N_PTS, 2)         normalized sample coords [x (width), y (height)]
    out_ref   : (N_PTS, DESC_LEN)  L2-normalized sampled descriptors
    hacc_ref  : (NPIX, C_MID)      VMEM scratch (conv3x3 accumulator)
    coarse_ref: (NPIX, DESC_LEN)   VMEM scratch (normalized coarse descriptors)
    """
    # ---- conv3x3 (pad=1) as 9 accumulating shifted matmuls (in-kernel im2col) ----
    # With the input flattened at stride WP = W+2, kernel tap (ky, kx) is a row
    # offset ky*WP + kx; contributions for output pixel (i, j) land on row i*WP+j.
    # Columns j >= W hold wrap-around garbage and are never sampled below.
    hacc_ref[...] = jnp.zeros_like(hacc_ref)
    for k in range(9):
        ky, kx = divmod(k, 3)
        off = ky * WP + kx
        xs = x_ref[off:off + NPIX, :]                         # (NPIX, C_IN)
        hacc_ref[...] += jnp.dot(xs, w1_ref[k],
                                 preferred_element_type=jnp.float32)
    h = jnp.maximum(hacc_ref[...] + b1_ref[...], 0.0)         # bias + ReLU

    # ---- conv1x1 + per-pixel L2 normalize (F.normalize, eps=1e-12) ----
    d = jnp.dot(h, w2_ref[...], preferred_element_type=jnp.float32) + b2_ref[...]
    ss = jnp.sum(d * d, axis=1, keepdims=True)
    coarse_ref[...] = d * jax.lax.rsqrt(jnp.maximum(ss, 1e-24))   # rsqrt -> EUP

    # ---- bilinear grid_sample (align_corners=False, zeros padding) ----
    gx = grid_ref[:, 0:1]                      # width direction
    gy = grid_ref[:, 1:2]                      # height direction
    ix = ((gx + 1.0) * W - 1.0) * 0.5          # unnormalize
    iy = ((gy + 1.0) * H - 1.0) * 0.5
    ix0 = jnp.floor(ix)
    iy0 = jnp.floor(iy)
    wx1 = ix - ix0
    wx0 = 1.0 - wx1
    wy1 = iy - iy0
    wy0 = 1.0 - wy1
    ix0i = ix0.astype(jnp.int32)
    iy0i = iy0.astype(jnp.int32)

    col = jax.lax.broadcasted_iota(jnp.int32, (N_PTS, NPIX), 1)

    def corner(iyc, ixc, wgt):
        valid = ((ixc >= 0) & (ixc < W) & (iyc >= 0) & (iyc < H)).astype(jnp.float32)
        # coarse rows are laid out with stride WP; clipped indices never touch
        # the garbage columns j in [W, W+2).
        flat = jnp.clip(iyc, 0, H - 1) * WP + jnp.clip(ixc, 0, W - 1)   # (N, 1)
        return (col == flat).astype(jnp.float32) * (wgt * valid)

    m = (corner(iy0i,     ix0i,     wy0 * wx0)
         + corner(iy0i,     ix0i + 1, wy0 * wx1)
         + corner(iy0i + 1, ix0i,     wy1 * wx0)
         + corner(iy0i + 1, ix0i + 1, wy1 * wx1))             # (N_PTS, NPIX)

    s = jnp.dot(m, coarse_ref[...], preferred_element_type=jnp.float32)  # (N, D)
    # descriptors /= ||descriptors||_2 per point.  Tiny floor only guards the
    # degenerate all-out-of-bounds case (torch would produce NaN there).
    nss = jnp.sum(s * s, axis=1, keepdims=True)
    out_ref[...] = s * jax.lax.rsqrt(jnp.maximum(nss, 1e-24))


def sp_descriptor_forward(x_hwc, pts, params):
    """x_hwc: (H, W, C_IN) f32, pts: (3, N) [x, y, conf].  Returns (DESC_LEN, N)."""
    w1, b1, w2, b2 = params

    # Zero-pad (conv pad=1) and flatten row-major; tail-pad so every shifted
    # (ky, kx) slab of NPIX rows stays in bounds.  This is 1x input traffic.
    xpad = jnp.pad(x_hwc, ((1, 1), (1, 1), (0, 0)))           # (H+2, W+2, C_IN)
    xflat = xpad.reshape((H + 2) * WP, C_IN)
    xflat = jnp.pad(xflat, ((0, NROWS - (H + 2) * WP), (0, 0)))

    w1_mat = w1.reshape(9, C_IN, C_MID)                       # (ky, kx, ci) -> k

    # Point normalization exactly as the PyTorch code (including its use of
    # x_height for the x coordinate and x_width for the y coordinate).
    sx = pts[0, :] / (float(H * REDUCTION) / 2.0) - 1.0
    sy = pts[1, :] / (float(W * REDUCTION) / 2.0) - 1.0
    grid = jnp.stack([sx, sy], axis=1).astype(jnp.float32)    # (N_PTS, 2)

    vmem = pl.BlockSpec(memory_space=pltpu.MemorySpace.VMEM)

    flops = (2 * NPIX * C_IN * C_MID * 9          # conv3x3 (9 shifted matmuls)
             + 2 * NPIX * C_MID * DESC_LEN        # conv1x1
             + 2 * N_PTS * NPIX * DESC_LEN        # gather-as-matmul
             + 4 * NPIX * DESC_LEN                # channel normalize
             + 4 * N_PTS * DESC_LEN)              # point normalize
    bytes_accessed = 4 * (NROWS * C_IN + 9 * C_IN * C_MID + C_MID
                          + C_MID * DESC_LEN + DESC_LEN + N_PTS * 2
                          + N_PTS * DESC_LEN)

    desc = pl.pallas_call(
        _sp_descriptor_kernel,
        out_shape=jax.ShapeDtypeStruct((N_PTS, DESC_LEN), jnp.float32),
        in_specs=[vmem] * 6,
        out_specs=vmem,
        scratch_shapes=[pltpu.VMEM((NPIX, C_MID), jnp.float32),
                        pltpu.VMEM((NPIX, DESC_LEN), jnp.float32)],
        cost_estimate=pl.CostEstimate(flops=flops,
                                      transcendentals=NPIX + N_PTS,
                                      bytes_accessed=bytes_accessed),
    )(xflat, w1_mat, b1.reshape(1, C_MID), w2, b2.reshape(1, DESC_LEN), grid)

    # PyTorch returns (DESC_LEN, N).  N=8 is lane-sparse, so the transpose is
    # left to XLA rather than forcing a sparse store inside the kernel.
    return desc.T


def make_params(key):
    """Deterministic synthetic parameters (torch conv shapes, channels-last here)."""
    k1, k2, k3, k4 = jax.random.split(key, 4)
    # conv3x3: torch weight (C_MID, C_IN, 3, 3) -> stored as (3, 3, C_IN, C_MID)
    w1 = 0.1 * jax.random.normal(k1, (3, 3, C_IN, C_MID), jnp.float32)
    b1 = 0.05 * jax.random.normal(k2, (C_MID,), jnp.float32)
    # conv1x1: torch weight (DESC_LEN, C_MID, 1, 1) -> stored as (C_MID, DESC_LEN)
    w2 = 0.1 * jax.random.normal(k3, (C_MID, DESC_LEN), jnp.float32)
    b2 = 0.05 * jax.random.normal(k4, (DESC_LEN,), jnp.float32)
    return w1, b1, w2, b2


if __name__ == "__main__":
    key = jax.random.PRNGKey(0)
    kx, kp, kc, kw = jax.random.split(key, 4)

    # x in PyTorch would be NCHW = (1, C_IN, H, W); build it and convert to HWC.
    x_nchw = jax.random.normal(kx, (1, C_IN, H, W), jnp.float32)
    x_hwc = jnp.transpose(x_nchw[0], (1, 2, 0))          # (H, W, C_IN)

    # Keypoints: 3 x N array [x, y, confidence], coords in the full-res image
    # (size H*REDUCTION x W*REDUCTION = 128 x 128).
    xy = jax.random.uniform(kp, (2, N_PTS), jnp.float32,
                            minval=0.0, maxval=float(H * REDUCTION - 1))
    conf = jax.random.uniform(kc, (1, N_PTS), jnp.float32)
    pts = jnp.concatenate([xy, conf], axis=0)            # (3, N_PTS)

    params = make_params(kw)

    fwd = jax.jit(sp_descriptor_forward)
    descriptors = jax.block_until_ready(fwd(x_hwc, pts, params))

    assert descriptors.shape == (DESC_LEN, N_PTS)
    assert bool(jnp.all(jnp.isfinite(descriptors)))
    # per-point descriptors are unit-norm after the final normalization
    norms = jnp.sqrt(jnp.sum(descriptors * descriptors, axis=0))
    assert bool(jnp.all(jnp.abs(norms - 1.0) < 1e-4))

    print("KERNEL_OK")
</pallas_src>

<mosaic_0001>
module attributes {stable_mosaic.version = 11 : i64} {
  func.func @_sp_descriptor_kernel(%arg0: memref<328x4xf32, #tpu.memory_space<vmem>>, %arg1: memref<9x4x8xf32, #tpu.memory_space<vmem>>, %arg2: memref<1x8xf32, #tpu.memory_space<vmem>>, %arg3: memref<8x128xf32, #tpu.memory_space<vmem>>, %arg4: memref<1x128xf32, #tpu.memory_space<vmem>>, %arg5: memref<8x2xf32, #tpu.memory_space<vmem>>, %arg6: memref<8x128xf32, #tpu.memory_space<vmem>>, %arg7: memref<288x8xf32, #tpu.memory_space<vmem>>, %arg8: memref<288x128xf32, #tpu.memory_space<vmem>>) attributes {dimension_semantics = [], scalar_prefetch = 0 : i64, scratch_operands = 2 : i64, tpu.core_type = #tpu.core_type<tc>} {
    %cst = arith.constant 0.000000e+00 : f32
    %0 = vector.broadcast %cst : f32 to vector<288x8xf32>
    %c0 = arith.constant 0 : index
    %c0_0 = arith.constant 0 : index
    %1 = vector.load %arg7[%c0, %c0_0] : memref<288x8xf32, #tpu.memory_space<vmem>>, vector<288x8xf32>
    tpu.vector_store %arg7[%c0, %c0_0], %0 {strides = array<i32>} : memref<288x8xf32, #tpu.memory_space<vmem>>, vector<288x8xf32>,
    %c0_1 = arith.constant 0 : index
    %c0_2 = arith.constant 0 : index
    %2 = vector.load %arg0[%c0_1, %c0_2] : memref<328x4xf32, #tpu.memory_space<vmem>>, vector<288x4xf32>
    %c0_3 = arith.constant 0 : index
    %c0_4 = arith.constant 0 : index
    %3 = vector.load %arg7[%c0_3, %c0_4] : memref<288x8xf32, #tpu.memory_space<vmem>>, vector<288x8xf32>
    %c0_5 = arith.constant 0 : index
    %c0_6 = arith.constant 0 : index
    %c0_7 = arith.constant 0 : index
    %4 = vector.load %arg1[%c0_5, %c0_6, %c0_7] : memref<9x4x8xf32, #tpu.memory_space<vmem>>, vector<1x4x8xf32>
    %5 = vector.shape_cast %4 : vector<1x4x8xf32> to vector<4x8xf32>
    %cst_8 = arith.constant dense<0.000000e+00> : vector<288x8xf32>
    %6 = tpu.matmul %2, %5, %cst_8 {dimension_numbers = #tpu.dot_dimension_numbers<[1], [0], [0], [1], [0, 0, 1, 1], [], []>} : vector<288x4xf32>, vector<4x8xf32>, vector<288x8xf32> -> vector<288x8xf32>
    %7 = arith.addf %3, %6 : vector<288x8xf32>
    %c0_9 = arith.constant 0 : index
    %c0_10 = arith.constant 0 : index
    %8 = vector.load %arg7[%c0_9, %c0_10] : memref<288x8xf32, #tpu.memory_space<vmem>>, vector<288x8xf32>
    tpu.vector_store %arg7[%c0_9, %c0_10], %7 {strides = array<i32>} : memref<288x8xf32, #tpu.memory_space<vmem>>, vector<288x8xf32>,
    %c1 = arith.constant 1 : index
    %c0_11 = arith.constant 0 : index
    %9 = vector.load %arg0[%c1, %c0_11] : memref<328x4xf32, #tpu.memory_space<vmem>>, vector<288x4xf32>
    %c0_12 = arith.constant 0 : index
    %c0_13 = arith.constant 0 : index
    %10 = vector.load %arg7[%c0_12, %c0_13] : memref<288x8xf32, #tpu.memory_space<vmem>>, vector<288x8xf32>
    %c1_14 = arith.constant 1 : index
    %c0_15 = arith.constant 0 : index
    %c0_16 = arith.constant 0 : index
    %11 = vector.load %arg1[%c1_14, %c0_15, %c0_16] : memref<9x4x8xf32, #tpu.memory_space<vmem>>, vector<1x4x8xf32>
    %12 = vector.shape_cast %11 : vector<1x4x8xf32> to vector<4x8xf32>
    %cst_17 = arith.constant dense<0.000000e+00> : vector<288x8xf32>
    %13 = tpu.matmul %9, %12, %cst_17 {dimension_numbers = #tpu.dot_dimension_numbers<[1], [0], [0], [1], [0, 0, 1, 1], [], []>} : vector<288x4xf32>, vector<4x8xf32>, vector<288x8xf32> -> vector<288x8xf32>
    %14 = arith.addf %10, %13 : vector<288x8xf32>
    %c0_18 = arith.constant 0 : index
    %c0_19 = arith.constant 0 : index
    %15 = vector.load %arg7[%c0_18, %c0_19] : memref<288x8xf32, #tpu.memory_space<vmem>>, vector<288x8xf32>
    tpu.vector_store %arg7[%c0_18, %c0_19], %14 {strides = array<i32>} : memref<288x8xf32, #tpu.memory_space<vmem>>, vector<288x8xf32>,
    %c2 = arith.constant 2 : index
    %c0_20 = arith.constant 0 : index
    %16 = vector.load %arg0[%c2, %c0_20] : memref<328x4xf32, #tpu.memory_space<vmem>>, vector<288x4xf32>
    %c0_21 = arith.constant 0 : index
    %c0_22 = arith.constant 0 : index
    %17 = vector.load %arg7[%c0_21, %c0_22] : memref<288x8xf32, #tpu.memory_space<vmem>>, vector<288x8xf32>
    %c2_23 = arith.constant 2 : index
    %c0_24 = arith.constant 0 : index
    %c0_25 = arith.constant 0 : index
    %18 = vector.load %arg1[%c2_23, %c0_24, %c0_25] : memref<9x4x8xf32, #tpu.memory_space<vmem>>, vector<1x4x8xf32>
    %19 = vector.shape_cast %18 : vector<1x4x8xf32> to vector<4x8xf32>
    %cst_26 = arith.constant dense<0.000000e+00> : vector<288x8xf32>
    %20 = tpu.matmul %16, %19, %cst_26 {dimension_numbers = #tpu.dot_dimension_numbers<[1], [0], [0], [1], [0, 0, 1, 1], [], []>} : vector<288x4xf32>, vector<4x8xf32>, vector<288x8xf32> -> vector<288x8xf32>
    %21 = arith.addf %17, %20 : vector<288x8xf32>
    %c0_27 = arith.constant 0 : index
    %c0_28 = arith.constant 0 : index
    %22 = vector.load %arg7[%c0_27, %c0_28] : memref<288x8xf32, #tpu.memory_space<vmem>>, vector<288x8xf32>
    tpu.vector_store %arg7[%c0_27, %c0_28], %21 {strides = array<i32>} : memref<288x8xf32, #tpu.memory_space<vmem>>, vector<288x8xf32>,
    %c18 = arith.constant 18 : index
    %c0_29 = arith.constant 0 : index
    %23 = vector.load %arg0[%c18, %c0_29] : memref<328x4xf32, #tpu.memory_space<vmem>>, vector<288x4xf32>
    %c0_30 = arith.constant 0 : index
    %c0_31 = arith.constant 0 : index
    %24 = vector.load %arg7[%c0_30, %c0_31] : memref<288x8xf32, #tpu.memory_space<vmem>>, vector<288x8xf32>
    %c3 = arith.constant 3 : index
    %c0_32 = arith.constant 0 : index
    %c0_33 = arith.constant 0 : index
    %25 = vector.load %arg1[%c3, %c0_32, %c0_33] : memref<9x4x8xf32, #tpu.memory_space<vmem>>, vector<1x4x8xf32>
    %26 = vector.shape_cast %25 : vector<1x4x8xf32> to vector<4x8xf32>
    %cst_34 = arith.constant dense<0.000000e+00> : vector<288x8xf32>
    %27 = tpu.matmul %23, %26, %cst_34 {dimension_numbers = #tpu.dot_dimension_numbers<[1], [0], [0], [1], [0, 0, 1, 1], [], []>} : vector<288x4xf32>, vector<4x8xf32>, vector<288x8xf32> -> vector<288x8xf32>
    %28 = arith.addf %24, %27 : vector<288x8xf32>
    %c0_35 = arith.constant 0 : index
    %c0_36 = arith.constant 0 : index
    %29 = vector.load %arg7[%c0_35, %c0_36] : memref<288x8xf32, #tpu.memory_space<vmem>>, vector<288x8xf32>
    tpu.vector_store %arg7[%c0_35, %c0_36], %28 {strides = array<i32>} : memref<288x8xf32, #tpu.memory_space<vmem>>, vector<288x8xf32>,
    %c19 = arith.constant 19 : index
    %c0_37 = arith.constant 0 : index
    %30 = vector.load %arg0[%c19, %c0_37] : memref<328x4xf32, #tpu.memory_space<vmem>>, vector<288x4xf32>
    %c0_38 = arith.constant 0 : index
    %c0_39 = arith.constant 0 : index
    %31 = vector.load %arg7[%c0_38, %c0_39] : memref<288x8xf32, #tpu.memory_space<vmem>>, vector<288x8xf32>
    %c4 = arith.constant 4 : index
    %c0_40 = arith.constant 0 : index
    %c0_41 = arith.constant 0 : index
    %32 = vector.load %arg1[%c4, %c0_40, %c0_41] : memref<9x4x8xf32, #tpu.memory_space<vmem>>, vector<1x4x8xf32>
    %33 = vector.shape_cast %32 : vector<1x4x8xf32> to vector<4x8xf32>
    %cst_42 = arith.constant dense<0.000000e+00> : vector<288x8xf32>
    %34 = tpu.matmul %30, %33, %cst_42 {dimension_numbers = #tpu.dot_dimension_numbers<[1], [0], [0], [1], [0, 0, 1, 1], [], []>} : vector<288x4xf32>, vector<4x8xf32>, vector<288x8xf32> -> vector<288x8xf32>
    %35 = arith.addf %31, %34 : vector<288x8xf32>
    %c0_43 = arith.constant 0 : index
    %c0_44 = arith.constant 0 : index
    %36 = vector.load %arg7[%c0_43, %c0_44] : memref<288x8xf32, #tpu.memory_space<vmem>>, vector<288x8xf32>
    tpu.vector_store %arg7[%c0_43, %c0_44], %35 {strides = array<i32>} : memref<288x8xf32, #tpu.memory_space<vmem>>, vector<288x8xf32>,
    %c20 = arith.constant 20 : index
    %c0_45 = arith.constant 0 : index
    %37 = vector.load %arg0[%c20, %c0_45] : memref<328x4xf32, #tpu.memory_space<vmem>>, vector<288x4xf32>
    %c0_46 = arith.constant 0 : index
    %c0_47 = arith.constant 0 : index
    %38 = vector.load %arg7[%c0_46, %c0_47] : memref<288x8xf32, #tpu.memory_space<vmem>>, vector<288x8xf32>
    %c5 = arith.constant 5 : index
    %c0_48 = arith.constant 0 : index
    %c0_49 = arith.constant 0 : index
    %39 = vector.load %arg1[%c5, %c0_48, %c0_49] : memref<9x4x8xf32, #tpu.memory_space<vmem>>, vector<1x4x8xf32>
    %40 = vector.shape_cast %39 : vector<1x4x8xf32> to vector<4x8xf32>
    %cst_50 = arith.constant dense<0.000000e+00> : vector<288x8xf32>
    %41 = tpu.matmul %37, %40, %cst_50 {dimension_numbers = #tpu.dot_dimension_numbers<[1], [0], [0], [1], [0, 0, 1, 1], [], []>} : vector<288x4xf32>, vector<4x8xf32>, vector<288x8xf32> -> vector<288x8xf32>
    %42 = arith.addf %38, %41 : vector<288x8xf32>
    %c0_51 = arith.constant 0 : index
    %c0_52 = arith.constant 0 : index
    %43 = vector.load %arg7[%c0_51, %c0_52] : memref<288x8xf32, #tpu.memory_space<vmem>>, vector<288x8xf32>
    tpu.vector_store %arg7[%c0_51, %c0_52], %42 {strides = array<i32>} : memref<288x8xf32, #tpu.memory_space<vmem>>, vector<288x8xf32>,
    %c36 = arith.constant 36 : index
    %c0_53 = arith.constant 0 : index
    %44 = vector.load %arg0[%c36, %c0_53] : memref<328x4xf32, #tpu.memory_space<vmem>>, vector<288x4xf32>
    %c0_54 = arith.constant 0 : index
    %c0_55 = arith.constant 0 : index
    %45 = vector.load %arg7[%c0_54, %c0_55] : memref<288x8xf32, #tpu.memory_space<vmem>>, vector<288x8xf32>
    %c6 = arith.constant 6 : index
    %c0_56 = arith.constant 0 : index
    %c0_57 = arith.constant 0 : index
    %46 = vector.load %arg1[%c6, %c0_56, %c0_57] : memref<9x4x8xf32, #tpu.memory_space<vmem>>, vector<1x4x8xf32>
    %47 = vector.shape_cast %46 : vector<1x4x8xf32> to vector<4x8xf32>
    %cst_58 = arith.constant dense<0.000000e+00> : vector<288x8xf32>
    %48 = tpu.matmul %44, %47, %cst_58 {dimension_numbers = #tpu.dot_dimension_numbers<[1], [0], [0], [1], [0, 0, 1, 1], [], []>} : vector<288x4xf32>, vector<4x8xf32>, vector<288x8xf32> -> vector<288x8xf32>
    %49 = arith.addf %45, %48 : vector<288x8xf32>
    %c0_59 = arith.constant 0 : index
    %c0_60 = arith.constant 0 : index
    %50 = vector.load %arg7[%c0_59, %c0_60] : memref<288x8xf32, #tpu.memory_space<vmem>>, vector<288x8xf32>
    tpu.vector_store %arg7[%c0_59, %c0_60], %49 {strides = array<i32>} : memref<288x8xf32, #tpu.memory_space<vmem>>, vector<288x8xf32>,
    %c37 = arith.constant 37 : index
    %c0_61 = arith.constant 0 : index
    %51 = vector.load %arg0[%c37, %c0_61] : memref<328x4xf32, #tpu.memory_space<vmem>>, vector<288x4xf32>
    %c0_62 = arith.constant 0 : index
    %c0_63 = arith.constant 0 : index
    %52 = vector.load %arg7[%c0_62, %c0_63] : memref<288x8xf32, #tpu.memory_space<vmem>>, vector<288x8xf32>
    %c7 = arith.constant 7 : index
    %c0_64 = arith.constant 0 : index
    %c0_65 = arith.constant 0 : index
    %53 = vector.load %arg1[%c7, %c0_64, %c0_65] : memref<9x4x8xf32, #tpu.memory_space<vmem>>, vector<1x4x8xf32>
    %54 = vector.shape_cast %53 : vector<1x4x8xf32> to vector<4x8xf32>
    %cst_66 = arith.constant dense<0.000000e+00> : vector<288x8xf32>
    %55 = tpu.matmul %51, %54, %cst_66 {dimension_numbers = #tpu.dot_dimension_numbers<[1], [0], [0], [1], [0, 0, 1, 1], [], []>} : vector<288x4xf32>, vector<4x8xf32>, vector<288x8xf32> -> vector<288x8xf32>
    %56 = arith.addf %52, %55 : vector<288x8xf32>
    %c0_67 = arith.constant 0 : index
    %c0_68 = arith.constant 0 : index
    %57 = vector.load %arg7[%c0_67, %c0_68] : memref<288x8xf32, #tpu.memory_space<vmem>>, vector<288x8xf32>
    tpu.vector_store %arg7[%c0_67, %c0_68], %56 {strides = array<i32>} : memref<288x8xf32, #tpu.memory_space<vmem>>, vector<288x8xf32>,
    %c38 = arith.constant 38 : index
    %c0_69 = arith.constant 0 : index
    %58 = vector.load %arg0[%c38, %c0_69] : memref<328x4xf32, #tpu.memory_space<vmem>>, vector<288x4xf32>
    %c0_70 = arith.constant 0 : index
    %c0_71 = arith.constant 0 : index
    %59 = vector.load %arg7[%c0_70, %c0_71] : memref<288x8xf32, #tpu.memory_space<vmem>>, vector<288x8xf32>
    %c8 = arith.constant 8 : index
    %c0_72 = arith.constant 0 : index
    %c0_73 = arith.constant 0 : index
    %60 = vector.load %arg1[%c8, %c0_72, %c0_73] : memref<9x4x8xf32, #tpu.memory_space<vmem>>, vector<1x4x8xf32>
    %61 = vector.shape_cast %60 : vector<1x4x8xf32> to vector<4x8xf32>
    %cst_74 = arith.constant dense<0.000000e+00> : vector<288x8xf32>
    %62 = tpu.matmul %58, %61, %cst_74 {dimension_numbers = #tpu.dot_dimension_numbers<[1], [0], [0], [1], [0, 0, 1, 1], [], []>} : vector<288x4xf32>, vector<4x8xf32>, vector<288x8xf32> -> vector<288x8xf32>
    %63 = arith.addf %59, %62 : vector<288x8xf32>
    %c0_75 = arith.constant 0 : index
    %c0_76 = arith.constant 0 : index
    %64 = vector.load %arg7[%c0_75, %c0_76] : memref<288x8xf32, #tpu.memory_space<vmem>>, vector<288x8xf32>
    tpu.vector_store %arg7[%c0_75, %c0_76], %63 {strides = array<i32>} : memref<288x8xf32, #tpu.memory_space<vmem>>, vector<288x8xf32>,
    %c0_77 = arith.constant 0 : index
    %c0_78 = arith.constant 0 : index
    %65 = vector.load %arg7[%c0_77, %c0_78] : memref<288x8xf32, #tpu.memory_space<vmem>>, vector<288x8xf32>
    %c0_79 = arith.constant 0 : index
    %c0_80 = arith.constant 0 : index
    %66 = vector.load %arg2[%c0_79, %c0_80] : memref<1x8xf32, #tpu.memory_space<vmem>>, vector<1x8xf32>
    %67 = vector.broadcast %66 : vector<1x8xf32> to vector<288x8xf32>
    %68 = arith.addf %65, %67 : vector<288x8xf32>
    %cst_81 = arith.constant 0.000000e+00 : f32
    %69 = vector.broadcast %cst_81 : f32 to vector<288x8xf32>
    %70 = arith.maximumf %68, %69 : vector<288x8xf32>
    %c0_82 = arith.constant 0 : index
    %c0_83 = arith.constant 0 : index
    %71 = vector.load %arg3[%c0_82, %c0_83] : memref<8x128xf32, #tpu.memory_space<vmem>>, vector<8x128xf32>
    %cst_84 = arith.constant dense<0.000000e+00> : vector<288x128xf32>
    %72 = tpu.matmul %70, %71, %cst_84 {dimension_numbers = #tpu.dot_dimension_numbers<[1], [0], [0], [1], [0, 0, 1, 1], [], []>} : vector<288x8xf32>, vector<8x128xf32>, vector<288x128xf32> -> vector<288x128xf32>
    %c0_85 = arith.constant 0 : index
    %c0_86 = arith.constant 0 : index
    %73 = vector.load %arg4[%c0_85, %c0_86] : memref<1x128xf32, #tpu.memory_space<vmem>>, vector<1x128xf32>
    %74 = vector.broadcast %73 : vector<1x128xf32> to vector<288x128xf32>
    %75 = arith.addf %72, %74 : vector<288x128xf32>
    %76 = arith.mulf %75, %75 : vector<288x128xf32>
    %cst_87 = arith.constant dense<0.000000e+00> : vector<288xf32>
    %77 = vector.multi_reduction <add>, %76, %cst_87 [1] : vector<288x128xf32> to vector<288xf32>
    %78 = vector.shape_cast %77 : vector<288xf32> to vector<288x1xf32>
    %cst_88 = arith.constant 1.000000e-24 : f32
    %79 = vector.broadcast %cst_88 : f32 to vector<288x1xf32>
    %80 = arith.maximumf %78, %79 : vector<288x1xf32>
    %81 = math.rsqrt %80 : vector<288x1xf32>
    %82 = vector.broadcast %81 : vector<288x1xf32> to vector<288x128xf32>
    %83 = arith.mulf %75, %82 : vector<288x128xf32>
    %c0_89 = arith.constant 0 : index
    %c0_90 = arith.constant 0 : index
    %84 = vector.load %arg8[%c0_89, %c0_90] : memref<288x128xf32, #tpu.memory_space<vmem>>, vector<288x128xf32>
    tpu.vector_store %arg8[%c0_89, %c0_90], %83 {strides = array<i32>} : memref<288x128xf32, #tpu.memory_space<vmem>>, vector<288x128xf32>,
    %c0_91 = arith.constant 0 : index
    %c0_92 = arith.constant 0 : index
    %85 = vector.load %arg5[%c0_91, %c0_92] : memref<8x2xf32, #tpu.memory_space<vmem>>, vector<8x1xf32>
    %c0_93 = arith.constant 0 : index
    %c1_94 = arith.constant 1 : index
    %86 = vector.load %arg5[%c0_93, %c1_94] : memref<8x2xf32, #tpu.memory_space<vmem>>, vector<8x1xf32>
    %cst_95 = arith.constant 1.000000e+00 : f32
    %87 = vector.broadcast %cst_95 : f32 to vector<8x1xf32>
    %88 = arith.addf %85, %87 : vector<8x1xf32>
    %cst_96 = arith.constant 1.600000e+01 : f32
    %89 = vector.broadcast %cst_96 : f32 to vector<8x1xf32>
    %90 = arith.mulf %88, %89 : vector<8x1xf32>
    %cst_97 = arith.constant 1.000000e+00 : f32
    %91 = vector.broadcast %cst_97 : f32 to vector<8x1xf32>
    %92 = arith.subf %90, %91 : vector<8x1xf32>
    %cst_98 = arith.constant 5.000000e-01 : f32
    %93 = vector.broadcast %cst_98 : f32 to vector<8x1xf32>
    %94 = arith.mulf %92, %93 : vector<8x1xf32>
    %cst_99 = arith.constant 1.000000e+00 : f32
    %95 = vector.broadcast %cst_99 : f32 to vector<8x1xf32>
    %96 = arith.addf %86, %95 : vector<8x1xf32>
    %cst_100 = arith.constant 1.600000e+01 : f32
    %97 = vector.broadcast %cst_100 : f32 to vector<8x1xf32>
    %98 = arith.mulf %96, %97 : vector<8x1xf32>
    %cst_101 = arith.constant 1.000000e+00 : f32
    %99 = vector.broadcast %cst_101 : f32 to vector<8x1xf32>
    %100 = arith.subf %98, %99 : vector<8x1xf32>
    %cst_102 = arith.constant 5.000000e-01 : f32
    %101 = vector.broadcast %cst_102 : f32 to vector<8x1xf32>
    %102 = arith.mulf %100, %101 : vector<8x1xf32>
    %103 = math.floor %94 : vector<8x1xf32>
    %104 = math.floor %102 : vector<8x1xf32>
    %105 = arith.subf %94, %103 : vector<8x1xf32>
    %cst_103 = arith.constant 1.000000e+00 : f32
    %106 = vector.broadcast %cst_103 : f32 to vector<8x1xf32>
    %107 = arith.subf %106, %105 : vector<8x1xf32>
    %108 = arith.subf %102, %104 : vector<8x1xf32>
    %cst_104 = arith.constant 1.000000e+00 : f32
    %109 = vector.broadcast %cst_104 : f32 to vector<8x1xf32>
    %110 = arith.subf %109, %108 : vector<8x1xf32>
    %111 = arith.fptosi %103 : vector<8x1xf32> to vector<8x1xi32>
    %112 = arith.fptosi %104 : vector<8x1xf32> to vector<8x1xi32>
    %113 = tpu.iota {dimensions = array<i32: 1>} : vector<8x288xi32>
    %114 = arith.mulf %110, %107 : vector<8x1xf32>
    %c0_i32 = arith.constant 0 : i32
    %115 = vector.broadcast %c0_i32 : i32 to vector<8x1xi32>
    %116 = arith.cmpi sge, %111, %115 : vector<8x1xi32>
    %c16_i32 = arith.constant 16 : i32
    %117 = vector.broadcast %c16_i32 : i32 to vector<8x1xi32>
    %118 = arith.cmpi slt, %111, %117 : vector<8x1xi32>
    %119 = arith.andi %116, %118 : vector<8x1xi1>
    %c0_i32_105 = arith.constant 0 : i32
    %120 = vector.broadcast %c0_i32_105 : i32 to vector<8x1xi32>
    %121 = arith.cmpi sge, %112, %120 : vector<8x1xi32>
    %122 = arith.andi %119, %121 : vector<8x1xi1>
    %c16_i32_106 = arith.constant 16 : i32
    %123 = vector.broadcast %c16_i32_106 : i32 to vector<8x1xi32>
    %124 = arith.cmpi slt, %112, %123 : vector<8x1xi32>
    %125 = arith.andi %122, %124 : vector<8x1xi1>
    %126 = arith.extui %125 : vector<8x1xi1> to vector<8x1xi32>
    %127 = arith.sitofp %126 : vector<8x1xi32> to vector<8x1xf32>
    %c0_i32_107 = arith.constant 0 : i32
    %c15_i32 = arith.constant 15 : i32
    %128 = vector.broadcast %c0_i32_107 : i32 to vector<8x1xi32>
    %129 = arith.maxsi %128, %112 : vector<8x1xi32>
    %130 = vector.broadcast %c15_i32 : i32 to vector<8x1xi32>
    %131 = arith.minsi %130, %129 : vector<8x1xi32>
    %c18_i32 = arith.constant 18 : i32
    %132 = vector.broadcast %c18_i32 : i32 to vector<8x1xi32>
    %133 = arith.muli %131, %132 : vector<8x1xi32>
    %c0_i32_108 = arith.constant 0 : i32
    %c15_i32_109 = arith.constant 15 : i32
    %134 = vector.broadcast %c0_i32_108 : i32 to vector<8x1xi32>
    %135 = arith.maxsi %134, %111 : vector<8x1xi32>
    %136 = vector.broadcast %c15_i32_109 : i32 to vector<8x1xi32>
    %137 = arith.minsi %136, %135 : vector<8x1xi32>
    %138 = arith.addi %133, %137 : vector<8x1xi32>
    %139 = vector.broadcast %138 : vector<8x1xi32> to vector<8x288xi32>
    %140 = arith.cmpi eq, %113, %139 : vector<8x288xi32>
    %141 = arith.extui %140 : vector<8x288xi1> to vector<8x288xi32>
    %142 = arith.sitofp %141 : vector<8x288xi32> to vector<8x288xf32>
    %143 = arith.mulf %114, %127 : vector<8x1xf32>
    %144 = vector.broadcast %143 : vector<8x1xf32> to vector<8x288xf32>
    %145 = arith.mulf %142, %144 : vector<8x288xf32>
    %c1_i32 = arith.constant 1 : i32
    %146 = vector.broadcast %c1_i32 : i32 to vector<8x1xi32>
    %147 = arith.addi %111, %146 : vector<8x1xi32>
    %148 = arith.mulf %110, %105 : vector<8x1xf32>
    %c0_i32_110 = arith.constant 0 : i32
    %149 = vector.broadcast %c0_i32_110 : i32 to vector<8x1xi32>
    %150 = arith.cmpi sge, %147, %149 : vector<8x1xi32>
    %c16_i32_111 = arith.constant 16 : i32
    %151 = vector.broadcast %c16_i32_111 : i32 to vector<8x1xi32>
    %152 = arith.cmpi slt, %147, %151 : vector<8x1xi32>
    %153 = arith.andi %150, %152 : vector<8x1xi1>
    %c0_i32_112 = arith.constant 0 : i32
    %154 = vector.broadcast %c0_i32_112 : i32 to vector<8x1xi32>
    %155 = arith.cmpi sge, %112, %154 : vector<8x1xi32>
    %156 = arith.andi %153, %155 : vector<8x1xi1>
    %c16_i32_113 = arith.constant 16 : i32
    %157 = vector.broadcast %c16_i32_113 : i32 to vector<8x1xi32>
    %158 = arith.cmpi slt, %112, %157 : vector<8x1xi32>
    %159 = arith.andi %156, %158 : vector<8x1xi1>
    %160 = arith.extui %159 : vector<8x1xi1> to vector<8x1xi32>
    %161 = arith.sitofp %160 : vector<8x1xi32> to vector<8x1xf32>
    %c0_i32_114 = arith.constant 0 : i32
    %c15_i32_115 = arith.constant 15 : i32
    %162 = vector.broadcast %c0_i32_114 : i32 to vector<8x1xi32>
    %163 = arith.maxsi %162, %112 : vector<8x1xi32>
    %164 = vector.broadcast %c15_i32_115 : i32 to vector<8x1xi32>
    %165 = arith.minsi %164, %163 : vector<8x1xi32>
    %c18_i32_116 = arith.constant 18 : i32
    %166 = vector.broadcast %c18_i32_116 : i32 to vector<8x1xi32>
    %167 = arith.muli %165, %166 : vector<8x1xi32>
    %c0_i32_117 = arith.constant 0 : i32
    %c15_i32_118 = arith.constant 15 : i32
    %168 = vector.broadcast %c0_i32_117 : i32 to vector<8x1xi32>
    %169 = arith.maxsi %168, %147 : vector<8x1xi32>
    %170 = vector.broadcast %c15_i32_118 : i32 to vector<8x1xi32>
    %171 = arith.minsi %170, %169 : vector<8x1xi32>
    %172 = arith.addi %167, %171 : vector<8x1xi32>
    %173 = vector.broadcast %172 : vector<8x1xi32> to vector<8x288xi32>
    %174 = arith.cmpi eq, %113, %173 : vector<8x288xi32>
    %175 = arith.extui %174 : vector<8x288xi1> to vector<8x288xi32>
    %176 = arith.sitofp %175 : vector<8x288xi32> to vector<8x288xf32>
    %177 = arith.mulf %148, %161 : vector<8x1xf32>
    %178 = vector.broadcast %177 : vector<8x1xf32> to vector<8x288xf32>
    %179 = arith.mulf %176, %178 : vector<8x288xf32>
    %180 = arith.addf %145, %179 : vector<8x288xf32>
    %c1_i32_119 = arith.constant 1 : i32
    %181 = vector.broadcast %c1_i32_119 : i32 to vector<8x1xi32>
    %182 = arith.addi %112, %181 : vector<8x1xi32>
    %183 = arith.mulf %108, %107 : vector<8x1xf32>
    %c0_i32_120 = arith.constant 0 : i32
    %184 = vector.broadcast %c0_i32_120 : i32 to vector<8x1xi32>
    %185 = arith.cmpi sge, %111, %184 : vector<8x1xi32>
    %c16_i32_121 = arith.constant 16 : i32
    %186 = vector.broadcast %c16_i32_121 : i32 to vector<8x1xi32>
    %187 = arith.cmpi slt, %111, %186 : vector<8x1xi32>
    %188 = arith.andi %185, %187 : vector<8x1xi1>
    %c0_i32_122 = arith.constant 0 : i32
    %189 = vector.broadcast %c0_i32_122 : i32 to vector<8x1xi32>
    %190 = arith.cmpi sge, %182, %189 : vector<8x1xi32>
    %191 = arith.andi %188, %190 : vector<8x1xi1>
    %c16_i32_123 = arith.constant 16 : i32
    %192 = vector.broadcast %c16_i32_123 : i32 to vector<8x1xi32>
    %193 = arith.cmpi slt, %182, %192 : vector<8x1xi32>
    %194 = arith.andi %191, %193 : vector<8x1xi1>
    %195 = arith.extui %194 : vector<8x1xi1> to vector<8x1xi32>
    %196 = arith.sitofp %195 : vector<8x1xi32> to vector<8x1xf32>
    %c0_i32_124 = arith.constant 0 : i32
    %c15_i32_125 = arith.constant 15 : i32
    %197 = vector.broadcast %c0_i32_124 : i32 to vector<8x1xi32>
    %198 = arith.maxsi %197, %182 : vector<8x1xi32>
    %199 = vector.broadcast %c15_i32_125 : i32 to vector<8x1xi32>
    %200 = arith.minsi %199, %198 : vector<8x1xi32>
    %c18_i32_126 = arith.constant 18 : i32
    %201 = vector.broadcast %c18_i32_126 : i32 to vector<8x1xi32>
    %202 = arith.muli %200, %201 : vector<8x1xi32>
    %c0_i32_127 = arith.constant 0 : i32
    %c15_i32_128 = arith.constant 15 : i32
    %203 = vector.broadcast %c0_i32_127 : i32 to vector<8x1xi32>
    %204 = arith.maxsi %203, %111 : vector<8x1xi32>
    %205 = vector.broadcast %c15_i32_128 : i32 to vector<8x1xi32>
    %206 = arith.minsi %205, %204 : vector<8x1xi32>
    %207 = arith.addi %202, %206 : vector<8x1xi32>
    %208 = vector.broadcast %207 : vector<8x1xi32> to vector<8x288xi32>
    %209 = arith.cmpi eq, %113, %208 : vector<8x288xi32>
    %210 = arith.extui %209 : vector<8x288xi1> to vector<8x288xi32>
    %211 = arith.sitofp %210 : vector<8x288xi32> to vector<8x288xf32>
    %212 = arith.mulf %183, %196 : vector<8x1xf32>
    %213 = vector.broadcast %212 : vector<8x1xf32> to vector<8x288xf32>
    %214 = arith.mulf %211, %213 : vector<8x288xf32>
    %215 = arith.addf %180, %214 : vector<8x288xf32>
    %c1_i32_129 = arith.constant 1 : i32
    %216 = vector.broadcast %c1_i32_129 : i32 to vector<8x1xi32>
    %217 = arith.addi %112, %216 : vector<8x1xi32>
    %c1_i32_130 = arith.constant 1 : i32
    %218 = vector.broadcast %c1_i32_130 : i32 to vector<8x1xi32>
    %219 = arith.addi %111, %218 : vector<8x1xi32>
    %220 = arith.mulf %108, %105 : vector<8x1xf32>
    %c0_i32_131 = arith.constant 0 : i32
    %221 = vector.broadcast %c0_i32_131 : i32 to vector<8x1xi32>
    %222 = arith.cmpi sge, %219, %221 : vector<8x1xi32>
    %c16_i32_132 = arith.constant 16 : i32
    %223 = vector.broadcast %c16_i32_132 : i32 to vector<8x1xi32>
    %224 = arith.cmpi slt, %219, %223 : vector<8x1xi32>
    %225 = arith.andi %222, %224 : vector<8x1xi1>
    %c0_i32_133 = arith.constant 0 : i32
    %226 = vector.broadcast %c0_i32_133 : i32 to vector<8x1xi32>
    %227 = arith.cmpi sge, %217, %226 : vector<8x1xi32>
    %228 = arith.andi %225, %227 : vector<8x1xi1>
    %c16_i32_134 = arith.constant 16 : i32
    %229 = vector.broadcast %c16_i32_134 : i32 to vector<8x1xi32>
    %230 = arith.cmpi slt, %217, %229 : vector<8x1xi32>
    %231 = arith.andi %228, %230 : vector<8x1xi1>
    %232 = arith.extui %231 : vector<8x1xi1> to vector<8x1xi32>
    %233 = arith.sitofp %232 : vector<8x1xi32> to vector<8x1xf32>
    %c0_i32_135 = arith.constant 0 : i32
    %c15_i32_136 = arith.constant 15 : i32
    %234 = vector.broadcast %c0_i32_135 : i32 to vector<8x1xi32>
    %235 = arith.maxsi %234, %217 : vector<8x1xi32>
    %236 = vector.broadcast %c15_i32_136 : i32 to vector<8x1xi32>
    %237 = arith.minsi %236, %235 : vector<8x1xi32>
    %c18_i32_137 = arith.constant 18 : i32
    %238 = vector.broadcast %c18_i32_137 : i32 to vector<8x1xi32>
    %239 = arith.muli %237, %238 : vector<8x1xi32>
    %c0_i32_138 = arith.constant 0 : i32
    %c15_i32_139 = arith.constant 15 : i32
    %240 = vector.broadcast %c0_i32_138 : i32 to vector<8x1xi32>
    %241 = arith.maxsi %240, %219 : vector<8x1xi32>
    %242 = vector.broadcast %c15_i32_139 : i32 to vector<8x1xi32>
    %243 = arith.minsi %242, %241 : vector<8x1xi32>
    %244 = arith.addi %239, %243 : vector<8x1xi32>
    %245 = vector.broadcast %244 : vector<8x1xi32> to vector<8x288xi32>
    %246 = arith.cmpi eq, %113, %245 : vector<8x288xi32>
    %247 = arith.extui %246 : vector<8x288xi1> to vector<8x288xi32>
    %248 = arith.sitofp %247 : vector<8x288xi32> to vector<8x288xf32>
    %249 = arith.mulf %220, %233 : vector<8x1xf32>
    %250 = vector.broadcast %249 : vector<8x1xf32> to vector<8x288xf32>
    %251 = arith.mulf %248, %250 : vector<8x288xf32>
    %252 = arith.addf %215, %251 : vector<8x288xf32>
    %c0_140 = arith.constant 0 : index
    %c0_141 = arith.constant 0 : index
    %253 = vector.load %arg8[%c0_140, %c0_141] : memref<288x128xf32, #tpu.memory_space<vmem>>, vector<288x128xf32>
    %cst_142 = arith.constant dense<0.000000e+00> : vector<8x128xf32>
    %254 = tpu.matmul %252, %253, %cst_142 {dimension_numbers = #tpu.dot_dimension_numbers<[1], [0], [0], [1], [0, 0, 1, 1], [], []>} : vector<8x288xf32>, vector<288x128xf32>, vector<8x128xf32> -> vector<8x128xf32>
    %255 = arith.mulf %254, %254 : vector<8x128xf32>
    %cst_143 = arith.constant dense<0.000000e+00> : vector<8xf32>
    %256 = vector.multi_reduction <add>, %255, %cst_143 [1] : vector<8x128xf32> to vector<8xf32>
    %257 = vector.shape_cast %256 : vector<8xf32> to vector<8x1xf32>
    %cst_144 = arith.constant 1.000000e-24 : f32
    %258 = vector.broadcast %cst_144 : f32 to vector<8x1xf32>
    %259 = arith.maximumf %257, %258 : vector<8x1xf32>
    %260 = math.rsqrt %259 : vector<8x1xf32>
    %261 = vector.broadcast %260 : vector<8x1xf32> to vector<8x128xf32>
    %262 = arith.mulf %254, %261 : vector<8x128xf32>
    %c0_145 = arith.constant 0 : index
    %c0_146 = arith.constant 0 : index
    %263 = vector.load %arg6[%c0_145, %c0_146] : memref<8x128xf32, #tpu.memory_space<vmem>>, vector<8x128xf32>
    tpu.vector_store %arg6[%c0_145, %c0_146], %262 {strides = array<i32>} : memref<8x128xf32, #tpu.memory_space<vmem>>, vector<8x128xf32>,
    return
  }
}

</mosaic_0001>

<llo_original>
// kernel: sp_descriptor_forward.1
$region0: #{sp_descriptor_forward.1}
  #allocation0 [shape = 'u32[]', space=smem, size = 0x4, offset = 0x4, fixed_abs, tag = 'smem constant byte address 0x4 - core index']
  #allocation1 [shape = 'u32[144,128]{1,0:T(1,128)}', space=vmem, size = 0x12000, scoped, tag = 'internal scratch']
  #allocation2 [shape = 'f32[288,8]{1,0:T(8,128)}', space=vmem, size = 0x24000, scoped, tag = 'scratch operand']
  #allocation3 [shape = 'f32[288,128]{1,0:T(8,128)}', space=vmem, size = 0x24000, scoped, tag = 'scratch operand']
  %s0 = inlined_call_operand.vmem [shape: f32[328,4], index: 0, kind: input, shape index: {}]
  %s1 = inlined_call_operand.vmem [shape: f32[9,4,8], index: 1, kind: input, shape index: {}]
  %s2 = inlined_call_operand.vmem [shape: f32[1,8], index: 2, kind: input, shape index: {}]
  %s3 = inlined_call_operand.vmem [shape: f32[8,128], index: 3, kind: input, shape index: {}]
  %s4 = inlined_call_operand.vmem [shape: f32[1,128], index: 4, kind: input, shape index: {}]
  %s5 = inlined_call_operand.vmem [shape: f32[8,2], index: 5, kind: input, shape index: {}]
  %s6 = inlined_call_operand.hbm [shape: f32[8,128], index: 6, kind: output, shape index: {}]
  %s7 = sld [smem:[#allocation0]]
  $region34: #{sp_descriptor_forward.1} parent=0
    _
  %s9 = ssub.s32 1, %s7
  %s10 = scalar_select 0, %s9, %s7
  $region1: #{sp_descriptor_forward.1} parent=0
    #allocation4 [shape = 'u8[4096]{0}', space=vmem, size = 0x1000, scoped, tag = 'output window, operand 0, single buffered']
    #allocation5 [shape = 's32[1]{0}', space=sflag, size = 0x4, scoped, tag = 'scoped memory for sp_descriptor_forward.1']
    %11 = vsyncpa [#allocation5], 0
    // Predicated region
    $region2: #{sp_descriptor_forward.1} parent=1 // pred_check
      _
    $region3: #{sp_descriptor_forward.1} parent=1 // pred_check_branch
      %13 = sbr.rel (0) target = $region5
    $region4: #{sp_descriptor_forward.1} parent=1 // pred_region
      _
    $region5: #{sp_descriptor_forward.1} parent=1 // pred_fallthru
      _
    // Predicated region
    $region6: #{sp_descriptor_forward.1} parent=1 // pred_check
      _
    $region7: #{sp_descriptor_forward.1} parent=1 // pred_check_branch
      %15 = sbr.rel (0) target = $region9
    $region8: #{sp_descriptor_forward.1} parent=1 // pred_region
      _
    $region9: #{sp_descriptor_forward.1} parent=1 // pred_fallthru
      _
    // Predicated region
    $region10: #{sp_descriptor_forward.1} parent=1 // pred_check
      _
    $region11: #{sp_descriptor_forward.1} parent=1 // pred_check_branch
      %17 = sbr.rel (0) target = $region13
    $region12: #{sp_descriptor_forward.1} parent=1 // pred_region
      _
    $region13: #{sp_descriptor_forward.1} parent=1 // pred_fallthru
      _
    // Predicated region
    $region14: #{sp_descriptor_forward.1} parent=1 // pred_check
      _
    $region15: #{sp_descriptor_forward.1} parent=1 // pred_check_branch
      %19 = sbr.rel (0) target = $region17
    $region16: #{sp_descriptor_forward.1} parent=1 // pred_region
      _
    $region17: #{sp_descriptor_forward.1} parent=1 // pred_fallthru
      _
    // Predicated region
    $region18: #{sp_descriptor_forward.1} parent=1 // pred_check
      _
    $region19: #{sp_descriptor_forward.1} parent=1 // pred_check_branch
      %21 = sbr.rel (0) target = $region21
    $region20: #{sp_descriptor_forward.1} parent=1 // pred_region
      _
    $region21: #{sp_descriptor_forward.1} parent=1 // pred_fallthru
      _
    // Predicated region
    $region22: #{sp_descriptor_forward.1} parent=1 // pred_check
      _
    $region23: #{sp_descriptor_forward.1} parent=1 // pred_check_branch
      %23 = sbr.rel (0) target = $region25
    $region24: #{sp_descriptor_forward.1} parent=1 // pred_region
      _
    $region25: #{sp_descriptor_forward.1} parent=1 // pred_fallthru
      _
    %vm24 = vcmask 64512
    %25 = vst.msk [vmem:[#allocation2] sm:$0xff] %vm24, 0.0
    %26 = vst.msk [vmem:[#allocation2 + $0x8] sm:$0xff] %vm24, 0.0
    %27 = vst.msk [vmem:[#allocation2 + $0x10] sm:$0xff] %vm24, 0.0
    %28 = vst.msk [vmem:[#allocation2 + $0x18] sm:$0xff] %vm24, 0.0
    %29 = vst.msk [vmem:[#allocation2 + $0x20] sm:$0xff] %vm24, 0.0
    %30 = vst.msk [vmem:[#allocation2 + $0x28] sm:$0xff] %vm24, 0.0
    %31 = vst.msk [vmem:[#allocation2 + $0x30] sm:$0xff] %vm24, 0.0
    %32 = vst.msk [vmem:[#allocation2 + $0x38] sm:$0xff] %vm24, 0.0
    %33 = vst.msk [vmem:[#allocation2 + $0x40] sm:$0xff] %vm24, 0.0
    %34 = vst.msk [vmem:[#allocation2 + $0x48] sm:$0xff] %vm24, 0.0
    %35 = vst.msk [vmem:[#allocation2 + $0x50] sm:$0xff] %vm24, 0.0
    %36 = vst.msk [vmem:[#allocation2 + $0x58] sm:$0xff] %vm24, 0.0
    %37 = vst.msk [vmem:[#allocation2 + $0x60] sm:$0xff] %vm24, 0.0
    %38 = vst.msk [vmem:[#allocation2 + $0x68] sm:$0xff] %vm24, 0.0
    %39 = vst.msk [vmem:[#allocation2 + $0x70] sm:$0xff] %vm24, 0.0
    %40 = vst.msk [vmem:[#allocation2 + $0x78] sm:$0xff] %vm24, 0.0
    %41 = vst.msk [vmem:[#allocation2 + $0x80] sm:$0xff] %vm24, 0.0
    %42 = vst.msk [vmem:[#allocation2 + $0x88] sm:$0xff] %vm24, 0.0
    %43 = vst.msk [vmem:[#allocation2 + $0x90] sm:$0xff] %vm24, 0.0
    %44 = vst.msk [vmem:[#allocation2 + $0x98] sm:$0xff] %vm24, 0.0
    %45 = vst.msk [vmem:[#allocation2 + $0xa0] sm:$0xff] %vm24, 0.0
    %46 = vst.msk [vmem:[#allocation2 + $0xa8] sm:$0xff] %vm24, 0.0
    %47 = vst.msk [vmem:[#allocation2 + $0xb0] sm:$0xff] %vm24, 0.0
    %48 = vst.msk [vmem:[#allocation2 + $0xb8] sm:$0xff] %vm24, 0.0
    %49 = vst.msk [vmem:[#allocation2 + $0xc0] sm:$0xff] %vm24, 0.0
    %50 = vst.msk [vmem:[#allocation2 + $0xc8] sm:$0xff] %vm24, 0.0
    %51 = vst.msk [vmem:[#allocation2 + $0xd0] sm:$0xff] %vm24, 0.0
    %52 = vst.msk [vmem:[#allocation2 + $0xd8] sm:$0xff] %vm24, 0.0
    %53 = vst.msk [vmem:[#allocation2 + $0xe0] sm:$0xff] %vm24, 0.0
    %54 = vst.msk [vmem:[#allocation2 + $0xe8] sm:$0xff] %vm24, 0.0
    %55 = vst.msk [vmem:[#allocation2 + $0xf0] sm:$0xff] %vm24, 0.0
    %56 = vst.msk [vmem:[#allocation2 + $0xf8] sm:$0xff] %vm24, 0.0
    %57 = vst.msk [vmem:[#allocation2 + $0x100] sm:$0xff] %vm24, 0.0
    %58 = vst.msk [vmem:[#allocation2 + $0x108] sm:$0xff] %vm24, 0.0
    %59 = vst.msk [vmem:[#allocation2 + $0x110] sm:$0xff] %vm24, 0.0
    %60 = vst.msk [vmem:[#allocation2 + $0x118] sm:$0xff] %vm24, 0.0
    %v61 = vld [vmem:[%s0] sm:$0xff]
    %v62 = vld [vmem:[%s0 + $0x8] sm:$0xff]
    %v63 = vld [vmem:[%s0 + $0x10] sm:$0xff]
    %v64 = vld [vmem:[%s0 + $0x18] sm:$0xff]
    %v65 = vld [vmem:[%s0 + $0x20] sm:$0xff]
    %v66 = vld [vmem:[%s0 + $0x28] sm:$0xff]
    %v67 = vld [vmem:[%s0 + $0x30] sm:$0xff]
    %v68 = vld [vmem:[%s0 + $0x38] sm:$0xff]
    %v69 = vld [vmem:[%s0 + $0x40] sm:$0xff]
    %v70 = vld [vmem:[%s0 + $0x48] sm:$0xff]
    %v71 = vld [vmem:[%s0 + $0x50] sm:$0xff]
    %v72 = vld [vmem:[%s0 + $0x58] sm:$0xff]
    %v73 = vld [vmem:[%s0 + $0x60] sm:$0xff]
    %v74 = vld [vmem:[%s0 + $0x68] sm:$0xff]
    %v75 = vld [vmem:[%s0 + $0x70] sm:$0xff]
    %v76 = vld [vmem:[%s0 + $0x78] sm:$0xff]
    %v77 = vld [vmem:[%s0 + $0x80] sm:$0xff]
    %v78 = vld [vmem:[%s0 + $0x88] sm:$0xff]
    %v79 = vld [vmem:[%s0 + $0x90] sm:$0xff]
    %v80 = vld [vmem:[%s0 + $0x98] sm:$0xff]
    %v81 = vld [vmem:[%s0 + $0xa0] sm:$0xff]
    %v82 = vld [vmem:[%s0 + $0xa8] sm:$0xff]
    %v83 = vld [vmem:[%s0 + $0xb0] sm:$0xff]
    %v84 = vld [vmem:[%s0 + $0xb8] sm:$0xff]
    %v85 = vld [vmem:[%s0 + $0xc0] sm:$0xff]
    %v86 = vld [vmem:[%s0 + $0xc8] sm:$0xff]
    %v87 = vld [vmem:[%s0 + $0xd0] sm:$0xff]
    %v88 = vld [vmem:[%s0 + $0xd8] sm:$0xff]
    %v89 = vld [vmem:[%s0 + $0xe0] sm:$0xff]
    %v90 = vld [vmem:[%s0 + $0xe8] sm:$0xff]
    %v91 = vld [vmem:[%s0 + $0xf0] sm:$0xff]
    %v92 = vld [vmem:[%s0 + $0xf8] sm:$0xff]
    %v93 = vld [vmem:[%s0 + $0x100] sm:$0xff]
    %v94 = vld [vmem:[%s0 + $0x108] sm:$0xff]
    %v95 = vld [vmem:[%s0 + $0x110] sm:$0xff]
    %v96 = vld [vmem:[%s0 + $0x118] sm:$0xff]
    %v97 = vld [vmem:[#allocation2] sm:$0xff]
    %v98 = vld [vmem:[#allocation2 + $0x8] sm:$0xff]
    %v99 = vld [vmem:[#allocation2 + $0x10] sm:$0xff]
    %v100 = vld [vmem:[#allocation2 + $0x18] sm:$0xff]
    %v101 = vld [vmem:[#allocation2 + $0x20] sm:$0xff]
    %v102 = vld [vmem:[#allocation2 + $0x28] sm:$0xff]
    %v103 = vld [vmem:[#allocation2 + $0x30] sm:$0xff]
    %v104 = vld [vmem:[#allocation2 + $0x38] sm:$0xff]
    %v105 = vld [vmem:[#allocation2 + $0x40] sm:$0xff]
    %v106 = vld [vmem:[#allocation2 + $0x48] sm:$0xff]
    %v107 = vld [vmem:[#allocation2 + $0x50] sm:$0xff]
    %v108 = vld [vmem:[#allocation2 + $0x58] sm:$0xff]
    %v109 = vld [vmem:[#allocation2 + $0x60] sm:$0xff]
    %v110 = vld [vmem:[#allocation2 + $0x68] sm:$0xff]
    %v111 = vld [vmem:[#allocation2 + $0x70] sm:$0xff]
    %v112 = vld [vmem:[#allocation2 + $0x78] sm:$0xff]
    %v113 = vld [vmem:[#allocation2 + $0x80] sm:$0xff]
    %v114 = vld [vmem:[#allocation2 + $0x88] sm:$0xff]
    %v115 = vld [vmem:[#allocation2 + $0x90] sm:$0xff]
    %v116 = vld [vmem:[#allocation2 + $0x98] sm:$0xff]
    %v117 = vld [vmem:[#allocation2 + $0xa0] sm:$0xff]
    %v118 = vld [vmem:[#allocation2 + $0xa8] sm:$0xff]
    %v119 = vld [vmem:[#allocation2 + $0xb0] sm:$0xff]
    %v120 = vld [vmem:[#allocation2 + $0xb8] sm:$0xff]
    %v121 = vld [vmem:[#allocation2 + $0xc0] sm:$0xff]
    %v122 = vld [vmem:[#allocation2 + $0xc8] sm:$0xff]
    %v123 = vld [vmem:[#allocation2 + $0xd0] sm:$0xff]
    %v124 = vld [vmem:[#allocation2 + $0xd8] sm:$0xff]
    %v125 = vld [vmem:[#allocation2 + $0xe0] sm:$0xff]
    %v126 = vld [vmem:[#allocation2 + $0xe8] sm:$0xff]
    %v127 = vld [vmem:[#allocation2 + $0xf0] sm:$0xff]
    %v128 = vld [vmem:[#allocation2 + $0xf8] sm:$0xff]
    %v129 = vld [vmem:[#allocation2 + $0x100] sm:$0xff]
    %v130 = vld [vmem:[#allocation2 + $0x108] sm:$0xff]
    %v131 = vld [vmem:[#allocation2 + $0x110] sm:$0xff]
    %v132 = vld [vmem:[#allocation2 + $0x118] sm:$0xff]
    %v133 = vld [vmem:[%s1] sm:$0xf]
    %vm134 = vcmask 31744
    %v136 = vsel %vm134, %v61, 0
    %v139 = vsel %vm134, %v62, 0
    %v142 = vsel %vm134, %v63, 0
    %v145 = vsel %vm134, %v64, 0
    %v148 = vsel %vm134, %v65, 0
    %v151 = vsel %vm134, %v66, 0
    %v154 = vsel %vm134, %v67, 0
    %v157 = vsel %vm134, %v68, 0
    %v160 = vsel %vm134, %v69, 0
    %v163 = vsel %vm134, %v70, 0
    %v166 = vsel %vm134, %v71, 0
    %v169 = vsel %vm134, %v72, 0
    %v172 = vsel %vm134, %v73, 0
    %v175 = vsel %vm134, %v74, 0
    %v178 = vsel %vm134, %v75, 0
    %v181 = vsel %vm134, %v76, 0
    %v184 = vsel %vm134, %v77, 0
    %v187 = vsel %vm134, %v78, 0
    %v190 = vsel %vm134, %v79, 0
    %v193 = vsel %vm134, %v80, 0
    %v196 = vsel %vm134, %v81, 0
    %v199 = vsel %vm134, %v82, 0
    %v202 = vsel %vm134, %v83, 0
    %v205 = vsel %vm134, %v84, 0
    %v208 = vsel %vm134, %v85, 0
    %v211 = vsel %vm134, %v86, 0
    %v214 = vsel %vm134, %v87, 0
    %v217 = vsel %vm134, %v88, 0
    %v220 = vsel %vm134, %v89, 0
    %v223 = vsel %vm134, %v90, 0
    %v226 = vsel %vm134, %v91, 0
    %v229 = vsel %vm134, %v92, 0
    %v232 = vsel %vm134, %v93, 0
    %v235 = vsel %vm134, %v94, 0
    %v238 = vsel %vm134, %v95, 0
    %v241 = vsel %vm134, %v96, 0
    %vm243 = vcmask 1043456
    %v245 = vsel %vm243, %v133, 0
    %247 = vmatprep.subr.mxu0 0.0
    %248 = vmatpush1.msra.mxu0 %v245
    %249 = vmatprep.subr.mxu0 0.0
    %250 = vmatpush1.msra.mxu0 0.0
    %251 = vmatprep.subr.mxu0 0.0
    %252 = vmatpush1.msra.mxu0 0.0
    %253 = vmatprep.subr.mxu0 0.0
    %254 = vmatpush1.msra.mxu0 0.0
    %255 = vmatprep.subr.mxu0 0.0
    %256 = vmatpush1.msra.mxu0 0.0
    %257 = vmatprep.subr.mxu0 0.0
    %258 = vmatpush1.msra.mxu0 0.0
    %259 = vmatprep.subr.mxu0 0.0
    %260 = vmatpush1.msra.mxu0 0.0
    %261 = vmatprep.subr.mxu0 0.0
    %262 = vmatpush1.msra.mxu0 0.0
    %263 = vmatprep.subr.mxu0 0.0
    %264 = vmatpush1.msra.mxu0 0.0
    %265 = vmatprep.subr.mxu0 0.0
    %266 = vmatpush1.msra.mxu0 0.0
    %267 = vmatprep.subr.mxu0 0.0
    %268 = vmatpush1.msra.mxu0 0.0
    %269 = vmatprep.subr.mxu0 0.0
    %270 = vmatpush1.msra.mxu0 0.0
    %271 = vmatprep.subr.mxu0 0.0
    %272 = vmatpush1.msra.mxu0 0.0
    %273 = vmatprep.subr.mxu0 0.0
    %274 = vmatpush1.msra.mxu0 0.0
    %275 = vmatprep.subr.mxu0 0.0
    %276 = vmatpush1.msra.mxu0 0.0
    %277 = vmatprep.subr.mxu0 0.0
    %278 = vmatpush1.msra.mxu0 0.0
    %279 = vmatprep.subr.mxu0 0.0
    %280 = vmatpush1.msra.mxu0 0.0
    %281 = vmatprep.subr.mxu0 0.0
    %282 = vmatpush1.msra.mxu0 0.0
    %283 = vmatprep.subr.mxu0 0.0
    %284 = vmatpush1.msra.mxu0 0.0
    %285 = vmatprep.subr.mxu0 0.0
    %286 = vmatpush1.msra.mxu0 0.0
    %287 = vmatprep.subr.mxu0 0.0
    %288 = vmatpush1.msra.mxu0 0.0
    %289 = vmatprep.subr.mxu0 0.0
    %290 = vmatpush1.msra.mxu0 0.0
    %291 = vmatprep.subr.mxu0 0.0
    %292 = vmatpush1.msra.mxu0 0.0
    %293 = vmatprep.subr.mxu0 0.0
    %294 = vmatpush1.msra.mxu0 0.0
    %295 = vmatprep.subr.mxu0 0.0
    %296 = vmatpush1.msra.mxu0 0.0
    %297 = vmatprep.subr.mxu0 0.0
    %298 = vmatpush1.msra.mxu0 0.0
    %299 = vmatprep.subr.mxu0 0.0
    %300 = vmatpush1.msra.mxu0 0.0
    %301 = vmatprep.subr.mxu0 0.0
    %302 = vmatpush1.msra.mxu0 0.0
    %303 = vmatprep.subr.mxu0 0.0
    %304 = vmatpush1.msra.mxu0 0.0
    %305 = vmatprep.subr.mxu0 0.0
    %306 = vmatpush1.msra.mxu0 0.0
    %307 = vmatprep.subr.mxu0 0.0
    %308 = vmatpush1.msra.mxu0 0.0
    %309 = vmatprep.subr.mxu0 0.0
    %310 = vmatpush1.msra.mxu0 0.0
    %311 = vmatprep.mubr.f32.mxu0 0.0
    %312 = vmatmul.mubr.f32.gmra.mrb[0].mxu0 %v136
    %v313 = vpop.f32.mrb[0].mxu0
    %v314 = vadd.f32 0.0, %v313
    %v315 = vpop.f32.mrb[0].mxu0
    %316 = vmatprep.mubr.f32.mxu0 0.0
    %317 = vmatmul.mubr.f32.gmra.mrb[0].mxu0 %v139
    %v318 = vpop.f32.mrb[0].mxu0
    %v319 = vadd.f32 0.0, %v318
    %v320 = vpop.f32.mrb[0].mxu0
    %321 = vmatprep.mubr.f32.mxu0 0.0
    %322 = vmatmul.mubr.f32.gmra.mrb[0].mxu0 %v142
    %v323 = vpop.f32.mrb[0].mxu0
    %v324 = vadd.f32 0.0, %v323
    %v325 = vpop.f32.mrb[0].mxu0
    %326 = vmatprep.mubr.f32.mxu0 0.0
    %327 = vmatmul.mubr.f32.gmra.mrb[0].mxu0 %v145
    %v328 = vpop.f32.mrb[0].mxu0
    %v329 = vadd.f32 0.0, %v328
    %v330 = vpop.f32.mrb[0].mxu0
    %331 = vmatprep.mubr.f32.mxu0 0.0
    %332 = vmatmul.mubr.f32.gmra.mrb[0].mxu0 %v148
    %v333 = vpop.f32.mrb[0].mxu0
    %v334 = vadd.f32 0.0, %v333
    %v335 = vpop.f32.mrb[0].mxu0
    %336 = vmatprep.mubr.f32.mxu0 0.0
    %337 = vmatmul.mubr.f32.gmra.mrb[0].mxu0 %v151
    %v338 = vpop.f32.mrb[0].mxu0
    %v339 = vadd.f32 0.0, %v338
    %v340 = vpop.f32.mrb[0].mxu0
    %341 = vmatprep.mubr.f32.mxu0 0.0
    %342 = vmatmul.mubr.f32.gmra.mrb[0].mxu0 %v154
    %v343 = vpop.f32.mrb[0].mxu0
    %v344 = vadd.f32 0.0, %v343
    %v345 = vpop.f32.mrb[0].mxu0
    %346 = vmatprep.mubr.f32.mxu0 0.0
    %347 = vmatmul.mubr.f32.gmra.mrb[0].mxu0 %v157
    %v348 = vpop.f32.mrb[0].mxu0
    %v349 = vadd.f32 0.0, %v348
    %v350 = vpop.f32.mrb[0].mxu0
    %351 = vmatprep.mubr.f32.mxu0 0.0
    %352 = vmatmul.mubr.f32.gmra.mrb[0].mxu0 %v160
    %v353 = vpop.f32.mrb[0].mxu0
    %v354 = vadd.f32 0.0, %v353
    %v355 = vpop.f32.mrb[0].mxu0
    %356 = vmatprep.mubr.f32.mxu0 0.0
    %357 = vmatmul.mubr.f32.gmra.mrb[0].mxu0 %v163
    %v358 = vpop.f32.mrb[0].mxu0
    %v359 = vadd.f32 0.0, %v358
    %v360 = vpop.f32.mrb[0].mxu0
    %361 = vmatprep.mubr.f32.mxu0 0.0
    %362 = vmatmul.mubr.f32.gmra.mrb[0].mxu0 %v166
    %v363 = vpop.f32.mrb[0].mxu0
    %v364 = vadd.f32 0.0, %v363
    %v365 = vpop.f32.mrb[0].mxu0
    %366 = vmatprep.mubr.f32.mxu0 0.0
    %367 = vmatmul.mubr.f32.gmra.mrb[0].mxu0 %v169
    %v368 = vpop.f32.mrb[0].mxu0
    %v369 = vadd.f32 0.0, %v368
    %v370 = vpop.f32.mrb[0].mxu0
    %371 = vmatprep.mubr.f32.mxu0 0.0
    %372 = vmatmul.mubr.f32.gmra.mrb[0].mxu0 %v172
    %v373 = vpop.f32.mrb[0].mxu0
    %v374 = vadd.f32 0.0, %v373
    %v375 = vpop.f32.mrb[0].mxu0
    %376 = vmatprep.mubr.f32.mxu0 0.0
    %377 = vmatmul.mubr.f32.gmra.mrb[0].mxu0 %v175
    %v378 = vpop.f32.mrb[0].mxu0
    %v379 = vadd.f32 0.0, %v378
    %v380 = vpop.f32.mrb[0].mxu0
    %381 = vmatprep.mubr.f32.mxu0 0.0
    %382 = vmatmul.mubr.f32.gmra.mrb[0].mxu0 %v178
    %v383 = vpop.f32.mrb[0].mxu0
    %v384 = vadd.f32 0.0, %v383
    %v385 = vpop.f32.mrb[0].mxu0
    %386 = vmatprep.mubr.f32.mxu0 0.0
    %387 = vmatmul.mubr.f32.gmra.mrb[0].mxu0 %v181
    %v388 = vpop.f32.mrb[0].mxu0
    %v389 = vadd.f32 0.0, %v388
    %v390 = vpop.f32.mrb[0].mxu0
    %391 = vmatprep.mubr.f32.mxu0 0.0
    %392 = vmatmul.mubr.f32.gmra.mrb[0].mxu0 %v184
    %v393 = vpop.f32.mrb[0].mxu0
    %v394 = vadd.f32 0.0, %v393
    %v395 = vpop.f32.mrb[0].mxu0
    %396 = vmatprep.mubr.f32.mxu0 0.0
    %397 = vmatmul.mubr.f32.gmra.mrb[0].mxu0 %v187
    %v398 = vpop.f32.mrb[0].mxu0
    %v399 = vadd.f32 0.0, %v398
    %v400 = vpop.f32.mrb[0].mxu0
    %401 = vmatprep.mubr.f32.mxu0 0.0
    %402 = vmatmul.mubr.f32.gmra.mrb[0].mxu0 %v190
    %v403 = vpop.f32.mrb[0].mxu0
    %v404 = vadd.f32 0.0, %v403
    %v405 = vpop.f32.mrb[0].mxu0
    %406 = vmatprep.mubr.f32.mxu0 0.0
    %407 = vmatmul.mubr.f32.gmra.mrb[0].mxu0 %v193
    %v408 = vpop.f32.mrb[0].mxu0
    %v409 = vadd.f32 0.0, %v408
    %v410 = vpop.f32.mrb[0].mxu0
    %411 = vmatprep.mubr.f32.mxu0 0.0
    %412 = vmatmul.mubr.f32.gmra.mrb[0].mxu0 %v196
    %v413 = vpop.f32.mrb[0].mxu0
    %v414 = vadd.f32 0.0, %v413
    %v415 = vpop.f32.mrb[0].mxu0
    %416 = vmatprep.mubr.f32.mxu0 0.0
    %417 = vmatmul.mubr.f32.gmra.mrb[0].mxu0 %v199
    %v418 = vpop.f32.mrb[0].mxu0
    %v419 = vadd.f32 0.0, %v418
    %v420 = vpop.f32.mrb[0].mxu0
    %421 = vmatprep.mubr.f32.mxu0 0.0
    %422 = vmatmul.mubr.f32.gmra.mrb[0].mxu0 %v202
    %v423 = vpop.f32.mrb[0].mxu0
    %v424 = vadd.f32 0.0, %v423
    %v425 = vpop.f32.mrb[0].mxu0
    %426 = vmatprep.mubr.f32.mxu0 0.0
    %427 = vmatmul.mubr.f32.gmra.mrb[0].mxu0 %v205
    %v428 = vpop.f32.mrb[0].mxu0
    %v429 = vadd.f32 0.0, %v428
    %v430 = vpop.f32.mrb[0].mxu0
    %431 = vmatprep.mubr.f32.mxu0 0.0
    %432 = vmatmul.mubr.f32.gmra.mrb[0].mxu0 %v208
    %v433 = vpop.f32.mrb[0].mxu0
    %v434 = vadd.f32 0.0, %v433
    %v435 = vpop.f32.mrb[0].mxu0
    %436 = vmatprep.mubr.f32.mxu0 0.0
    %437 = vmatmul.mubr.f32.gmra.mrb[0].mxu0 %v211
    %v438 = vpop.f32.mrb[0].mxu0
    %v439 = vadd.f32 0.0, %v438
    %v440 = vpop.f32.mrb[0].mxu0
    %441 = vmatprep.mubr.f32.mxu0 0.0
    %442 = vmatmul.mubr.f32.gmra.mrb[0].mxu0 %v214
    %v443 = vpop.f32.mrb[0].mxu0
    %v444 = vadd.f32 0.0, %v443
    %v445 = vpop.f32.mrb[0].mxu0
    %446 = vmatprep.mubr.f32.mxu0 0.0
    %447 = vmatmul.mubr.f32.gmra.mrb[0].mxu0 %v217
    %v448 = vpop.f32.mrb[0].mxu0
    %v449 = vadd.f32 0.0, %v448
    %v450 = vpop.f32.mrb[0].mxu0
    %451 = vmatprep.mubr.f32.mxu0 0.0
    %452 = vmatmul.mubr.f32.gmra.mrb[0].mxu0 %v220
    %v453 = vpop.f32.mrb[0].mxu0
    %v454 = vadd.f32 0.0, %v453
    %v455 = vpop.f32.mrb[0].mxu0
    %456 = vmatprep.mubr.f32.mxu0 0.0
    %457 = vmatmul.mubr.f32.gmra.mrb[0].mxu0 %v223
    %v458 = vpop.f32.mrb[0].mxu0
    %v459 = vadd.f32 0.0, %v458
    %v460 = vpop.f32.mrb[0].mxu0
    %461 = vmatprep.mubr.f32.mxu0 0.0
    %462 = vmatmul.mubr.f32.gmra.mrb[0].mxu0 %v226
    %v463 = vpop.f32.mrb[0].mxu0
    %v464 = vadd.f32 0.0, %v463
    %v465 = vpop.f32.mrb[0].mxu0
    %466 = vmatprep.mubr.f32.mxu0 0.0
    %467 = vmatmul.mubr.f32.gmra.mrb[0].mxu0 %v229
    %v468 = vpop.f32.mrb[0].mxu0
    %v469 = vadd.f32 0.0, %v468
    %v470 = vpop.f32.mrb[0].mxu0
    %471 = vmatprep.mubr.f32.mxu0 0.0
    %472 = vmatmul.mubr.f32.gmra.mrb[0].mxu0 %v232
    %v473 = vpop.f32.mrb[0].mxu0
    %v474 = vadd.f32 0.0, %v473
    %v475 = vpop.f32.mrb[0].mxu0
    %476 = vmatprep.mubr.f32.mxu0 0.0
    %477 = vmatmul.mubr.f32.gmra.mrb[0].mxu0 %v235
    %v478 = vpop.f32.mrb[0].mxu0
    %v479 = vadd.f32 0.0, %v478
    %v480 = vpop.f32.mrb[0].mxu0
    %481 = vmatprep.mubr.f32.mxu0 0.0
    %482 = vmatmul.mubr.f32.gmra.mrb[0].mxu0 %v238
    %v483 = vpop.f32.mrb[0].mxu0
    %v484 = vadd.f32 0.0, %v483
    %v485 = vpop.f32.mrb[0].mxu0
    %486 = vmatprep.mubr.f32.mxu0 0.0
    %487 = vmatmul.mubr.f32.gmra.mrb[0].mxu0 %v241
    %v488 = vpop.f32.mrb[0].mxu0
    %v489 = vadd.f32 0.0, %v488
    %v490 = vpop.f32.mrb[0].mxu0
    %491 = vdwg.mxu0
    %v492 = vadd.f32 %v97, %v314
    %v493 = vadd.f32 %v98, %v319
    %v494 = vadd.f32 %v99, %v324
    %v495 = vadd.f32 %v100, %v329
    %v496 = vadd.f32 %v101, %v334
    %v497 = vadd.f32 %v102, %v339
    %v498 = vadd.f32 %v103, %v344
    %v499 = vadd.f32 %v104, %v349
    %v500 = vadd.f32 %v105, %v354
    %v501 = vadd.f32 %v106, %v359
    %v502 = vadd.f32 %v107, %v364
    %v503 = vadd.f32 %v108, %v369
    %v504 = vadd.f32 %v109, %v374
    %v505 = vadd.f32 %v110, %v379
    %v506 = vadd.f32 %v111, %v384
    %v507 = vadd.f32 %v112, %v389
    %v508 = vadd.f32 %v113, %v394
    %v509 = vadd.f32 %v114, %v399
    %v510 = vadd.f32 %v115, %v404
    %v511 = vadd.f32 %v116, %v409
    %v512 = vadd.f32 %v117, %v414
    %v513 = vadd.f32 %v118, %v419
    %v514 = vadd.f32 %v119, %v424
    %v515 = vadd.f32 %v120, %v429
    %v516 = vadd.f32 %v121, %v434
    %v517 = vadd.f32 %v122, %v439
    %v518 = vadd.f32 %v123, %v444
    %v519 = vadd.f32 %v124, %v449
    %v520 = vadd.f32 %v125, %v454
    %v521 = vadd.f32 %v126, %v459
    %v522 = vadd.f32 %v127, %v464
    %v523 = vadd.f32 %v128, %v469
    %v524 = vadd.f32 %v129, %v474
    %v525 = vadd.f32 %v130, %v479
    %v526 = vadd.f32 %v131, %v484
    %v527 = vadd.f32 %v132, %v489
    %528 = vst.msk [vmem:[#allocation2] sm:$0xff] %vm24, %v492
    %529 = vst.msk [vmem:[#allocation2 + $0x8] sm:$0xff] %vm24, %v493
    %530 = vst.msk [vmem:[#allocation2 + $0x10] sm:$0xff] %vm24, %v494
    %531 = vst.msk [vmem:[#allocation2 + $0x18] sm:$0xff] %vm24, %v495
    %532 = vst.msk [vmem:[#allocation2 + $0x20] sm:$0xff] %vm24, %v496
    %533 = vst.msk [vmem:[#allocation2 + $0x28] sm:$0xff] %vm24, %v497
    %534 = vst.msk [vmem:[#allocation2 + $0x30] sm:$0xff] %vm24, %v498
    %535 = vst.msk [vmem:[#allocation2 + $0x38] sm:$0xff] %vm24, %v499
    %536 = vst.msk [vmem:[#allocation2 + $0x40] sm:$0xff] %vm24, %v500
    %537 = vst.msk [vmem:[#allocation2 + $0x48] sm:$0xff] %vm24, %v501
    %538 = vst.msk [vmem:[#allocation2 + $0x50] sm:$0xff] %vm24, %v502
    %539 = vst.msk [vmem:[#allocation2 + $0x58] sm:$0xff] %vm24, %v503
    %540 = vst.msk [vmem:[#allocation2 + $0x60] sm:$0xff] %vm24, %v504
    %541 = vst.msk [vmem:[#allocation2 + $0x68] sm:$0xff] %vm24, %v505
    %542 = vst.msk [vmem:[#allocation2 + $0x70] sm:$0xff] %vm24, %v506
    %543 = vst.msk [vmem:[#allocation2 + $0x78] sm:$0xff] %vm24, %v507
    %544 = vst.msk [vmem:[#allocation2 + $0x80] sm:$0xff] %vm24, %v508
    %545 = vst.msk [vmem:[#allocation2 + $0x88] sm:$0xff] %vm24, %v509
    %546 = vst.msk [vmem:[#allocation2 + $0x90] sm:$0xff] %vm24, %v510
    %547 = vst.msk [vmem:[#allocation2 + $0x98] sm:$0xff] %vm24, %v511
    %548 = vst.msk [vmem:[#allocation2 + $0xa0] sm:$0xff] %vm24, %v512
    %549 = vst.msk [vmem:[#allocation2 + $0xa8] sm:$0xff] %vm24, %v513
    %550 = vst.msk [vmem:[#allocation2 + $0xb0] sm:$0xff] %vm24, %v514
    %551 = vst.msk [vmem:[#allocation2 + $0xb8] sm:$0xff] %vm24, %v515
    %552 = vst.msk [vmem:[#allocation2 + $0xc0] sm:$0xff] %vm24, %v516
    %553 = vst.msk [vmem:[#allocation2 + $0xc8] sm:$0xff] %vm24, %v517
    %554 = vst.msk [vmem:[#allocation2 + $0xd0] sm:$0xff] %vm24, %v518
    %555 = vst.msk [vmem:[#allocation2 + $0xd8] sm:$0xff] %vm24, %v519
    %556 = vst.msk [vmem:[#allocation2 + $0xe0] sm:$0xff] %vm24, %v520
    %557 = vst.msk [vmem:[#allocation2 + $0xe8] sm:$0xff] %vm24, %v521
    %558 = vst.msk [vmem:[#allocation2 + $0xf0] sm:$0xff] %vm24, %v522
    %559 = vst.msk [vmem:[#allocation2 + $0xf8] sm:$0xff] %vm24, %v523
    %560 = vst.msk [vmem:[#allocation2 + $0x100] sm:$0xff] %vm24, %v524
    %561 = vst.msk [vmem:[#allocation2 + $0x108] sm:$0xff] %vm24, %v525
    %562 = vst.msk [vmem:[#allocation2 + $0x110] sm:$0xff] %vm24, %v526
    %563 = vst.msk [vmem:[#allocation2 + $0x118] sm:$0xff] %vm24, %v527
    %v564 = vld [vmem:[%s0 + $0x1] sm:$0xff]
    %v565 = vld [vmem:[%s0 + $0x9] sm:$0xff]
    %v566 = vld [vmem:[%s0 + $0x11] sm:$0xff]
    %v567 = vld [vmem:[%s0 + $0x19] sm:$0xff]
    %v568 = vld [vmem:[%s0 + $0x21] sm:$0xff]
    %v569 = vld [vmem:[%s0 + $0x29] sm:$0xff]
    %v570 = vld [vmem:[%s0 + $0x31] sm:$0xff]
    %v571 = vld [vmem:[%s0 + $0x39] sm:$0xff]
    %v572 = vld [vmem:[%s0 + $0x41] sm:$0xff]
    %v573 = vld [vmem:[%s0 + $0x49] sm:$0xff]
    %v574 = vld [vmem:[%s0 + $0x51] sm:$0xff]
    %v575 = vld [vmem:[%s0 + $0x59] sm:$0xff]
    %v576 = vld [vmem:[%s0 + $0x61] sm:$0xff]
    %v577 = vld [vmem:[%s0 + $0x69] sm:$0xff]
    %v578 = vld [vmem:[%s0 + $0x71] sm:$0xff]
    %v579 = vld [vmem:[%s0 + $0x79] sm:$0xff]
    %v580 = vld [vmem:[%s0 + $0x81] sm:$0xff]
    %v581 = vld [vmem:[%s0 + $0x89] sm:$0xff]
    %v582 = vld [vmem:[%s0 + $0x91] sm:$0xff]
    %v583 = vld [vmem:[%s0 + $0x99] sm:$0xff]
    %v584 = vld [vmem:[%s0 + $0xa1] sm:$0xff]
    %v585 = vld [vmem:[%s0 + $0xa9] sm:$0xff]
    %v586 = vld [vmem:[%s0 + $0xb1] sm:$0xff]
    %v587 = vld [vmem:[%s0 + $0xb9] sm:$0xff]
    %v588 = vld [vmem:[%s0 + $0xc1] sm:$0xff]
    %v589 = vld [vmem:[%s0 + $0xc9] sm:$0xff]
    %v590 = vld [vmem:[%s0 + $0xd1] sm:$0xff]
    %v591 = vld [vmem:[%s0 + $0xd9] sm:$0xff]
    %v592 = vld [vmem:[%s0 + $0xe1] sm:$0xff]
    %v593 = vld [vmem:[%s0 + $0xe9] sm:$0xff]
    %v594 = vld [vmem:[%s0 + $0xf1] sm:$0xff]
    %v595 = vld [vmem:[%s0 + $0xf9] sm:$0xff]
    %v596 = vld [vmem:[%s0 + $0x101] sm:$0xff]
    %v597 = vld [vmem:[%s0 + $0x109] sm:$0xff]
    %v598 = vld [vmem:[%s0 + $0x111] sm:$0xff]
    %v599 = vld [vmem:[%s0 + $0x119] sm:$0xff]
    %v600 = vld [vmem:[#allocation2] sm:$0xff]
    %v601 = vld [vmem:[#allocation2 + $0x8] sm:$0xff]
    %v602 = vld [vmem:[#allocation2 + $0x10] sm:$0xff]
    %v603 = vld [vmem:[#allocation2 + $0x18] sm:$0xff]
    %v604 = vld [vmem:[#allocation2 + $0x20] sm:$0xff]
    %v605 = vld [vmem:[#allocation2 + $0x28] sm:$0xff]
    %v606 = vld [vmem:[#allocation2 + $0x30] sm:$0xff]
    %v607 = vld [vmem:[#allocation2 + $0x38] sm:$0xff]
    %v608 = vld [vmem:[#allocation2 + $0x40] sm:$0xff]
    %v609 = vld [vmem:[#allocation2 + $0x48] sm:$0xff]
    %v610 = vld [vmem:[#allocation2 + $0x50] sm:$0xff]
    %v611 = vld [vmem:[#allocation2 + $0x58] sm:$0xff]
    %v612 = vld [vmem:[#allocation2 + $0x60] sm:$0xff]
    %v613 = vld [vmem:[#allocation2 + $0x68] sm:$0xff]
    %v614 = vld [vmem:[#allocation2 + $0x70] sm:$0xff]
    %v615 = vld [vmem:[#allocation2 + $0x78] sm:$0xff]
    %v616 = vld [vmem:[#allocation2 + $0x80] sm:$0xff]
    %v617 = vld [vmem:[#allocation2 + $0x88] sm:$0xff]
    %v618 = vld [vmem:[#allocation2 + $0x90] sm:$0xff]
    %v619 = vld [vmem:[#allocation2 + $0x98] sm:$0xff]
    %v620 = vld [vmem:[#allocation2 + $0xa0] sm:$0xff]
    %v621 = vld [vmem:[#allocation2 + $0xa8] sm:$0xff]
    %v622 = vld [vmem:[#allocation2 + $0xb0] sm:$0xff]
    %v623 = vld [vmem:[#allocation2 + $0xb8] sm:$0xff]
    %v624 = vld [vmem:[#allocation2 + $0xc0] sm:$0xff]
    %v625 = vld [vmem:[#allocation2 + $0xc8] sm:$0xff]
    %v626 = vld [vmem:[#allocation2 + $0xd0] sm:$0xff]
    %v627 = vld [vmem:[#allocation2 + $0xd8] sm:$0xff]
    %v628 = vld [vmem:[#allocation2 + $0xe0] sm:$0xff]
    %v629 = vld [vmem:[#allocation2 + $0xe8] sm:$0xff]
    %v630 = vld [vmem:[#allocation2 + $0xf0] sm:$0xff]
    %v631 = vld [vmem:[#allocation2 + $0xf8] sm:$0xff]
    %v632 = vld [vmem:[#allocation2 + $0x100] sm:$0xff]
    %v633 = vld [vmem:[#allocation2 + $0x108] sm:$0xff]
    %v634 = vld [vmem:[#allocation2 + $0x110] sm:$0xff]
    %v635 = vld [vmem:[#allocation2 + $0x118] sm:$0xff]
    %s636 = scalar_lea.vmem %s1, 4
    %v637 = vld [vmem:[%s636] sm:$0xf]
    %v639 = vsel %vm134, %v564, 0
    %v642 = vsel %vm134, %v565, 0
    %v645 = vsel %vm134, %v566, 0
    %v648 = vsel %vm134, %v567, 0
    %v651 = vsel %vm134, %v568, 0
    %v654 = vsel %vm134, %v569, 0
    %v657 = vsel %vm134, %v570, 0
    %v660 = vsel %vm134, %v571, 0
    %v663 = vsel %vm134, %v572, 0
    %v666 = vsel %vm134, %v573, 0
    %v669 = vsel %vm134, %v574, 0
    %v672 = vsel %vm134, %v575, 0
    %v675 = vsel %vm134, %v576, 0
    %v678 = vsel %vm134, %v577, 0
    %v681 = vsel %vm134, %v578, 0
    %v684 = vsel %vm134, %v579, 0
    %v687 = vsel %vm134, %v580, 0
    %v690 = vsel %vm134, %v581, 0
    %v693 = vsel %vm134, %v582, 0
    %v696 = vsel %vm134, %v583, 0
    %v699 = vsel %vm134, %v584, 0
    %v702 = vsel %vm134, %v585, 0
    %v705 = vsel %vm134, %v586, 0
    %v708 = vsel %vm134, %v587, 0
    %v711 = vsel %vm134, %v588, 0
    %v714 = vsel %vm134, %v589, 0
    %v717 = vsel %vm134, %v590, 0
    %v720 = vsel %vm134, %v591, 0
    %v723 = vsel %vm134, %v592, 0
    %v726 = vsel %vm134, %v593, 0
    %v729 = vsel %vm134, %v594, 0
    %v732 = vsel %vm134, %v595, 0
    %v735 = vsel %vm134, %v596, 0
    %v738 = vsel %vm134, %v597, 0
    %v741 = vsel %vm134, %v598, 0
    %v744 = vsel %vm134, %v599, 0
    %v747 = vsel %vm243, %v637, 0
    %749 = vmatprep.subr.mxu0 0.0
    %750 = vmatpush1.msra.mxu0 %v747
    %751 = vmatprep.subr.mxu0 0.0
    %752 = vmatpush1.msra.mxu0 0.0
    %753 = vmatprep.subr.mxu0 0.0
    %754 = vmatpush1.msra.mxu0 0.0
    %755 = vmatprep.subr.mxu0 0.0
    %756 = vmatpush1.msra.mxu0 0.0
    %757 = vmatprep.subr.mxu0 0.0
    %758 = vmatpush1.msra.mxu0 0.0
    %759 = vmatprep.subr.mxu0 0.0
    %760 = vmatpush1.msra.mxu0 0.0
    %761 = vmatprep.subr.mxu0 0.0
    %762 = vmatpush1.msra.mxu0 0.0
    %763 = vmatprep.subr.mxu0 0.0
    %764 = vmatpush1.msra.mxu0 0.0
    %765 = vmatprep.subr.mxu0 0.0
    %766 = vmatpush1.msra.mxu0 0.0
    %767 = vmatprep.subr.mxu0 0.0
    %768 = vmatpush1.msra.mxu0 0.0
    %769 = vmatprep.subr.mxu0 0.0
    %770 = vmatpush1.msra.mxu0 0.0
    %771 = vmatprep.subr.mxu0 0.0
    %772 = vmatpush1.msra.mxu0 0.0
    %773 = vmatprep.subr.mxu0 0.0
    %774 = vmatpush1.msra.mxu0 0.0
    %775 = vmatprep.subr.mxu0 0.0
    %776 = vmatpush1.msra.mxu0 0.0
    %777 = vmatprep.subr.mxu0 0.0
    %778 = vmatpush1.msra.mxu0 0.0
    %779 = vmatprep.subr.mxu0 0.0
    %780 = vmatpush1.msra.mxu0 0.0
    %781 = vmatprep.subr.mxu0 0.0
    %782 = vmatpush1.msra.mxu0 0.0
    %783 = vmatprep.subr.mxu0 0.0
    %784 = vmatpush1.msra.mxu0 0.0
    %785 = vmatprep.subr.mxu0 0.0
    %786 = vmatpush1.msra.mxu0 0.0
    %787 = vmatprep.subr.mxu0 0.0
    %788 = vmatpush1.msra.mxu0 0.0
    %789 = vmatprep.subr.mxu0 0.0
    %790 = vmatpush1.msra.mxu0 0.0
    %791 = vmatprep.subr.mxu0 0.0
    %792 = vmatpush1.msra.mxu0 0.0
    %793 = vmatprep.subr.mxu0 0.0
    %794 = vmatpush1.msra.mxu0 0.0
    %795 = vmatprep.subr.mxu0 0.0
    %796 = vmatpush1.msra.mxu0 0.0
    %797 = vmatprep.subr.mxu0 0.0
    %798 = vmatpush1.msra.mxu0 0.0
    %799 = vmatprep.subr.mxu0 0.0
    %800 = vmatpush1.msra.mxu0 0.0
    %801 = vmatprep.subr.mxu0 0.0
    %802 = vmatpush1.msra.mxu0 0.0
    %803 = vmatprep.subr.mxu0 0.0
    %804 = vmatpush1.msra.mxu0 0.0
    %805 = vmatprep.subr.mxu0 0.0
    %806 = vmatpush1.msra.mxu0 0.0
    %807 = vmatprep.subr.mxu0 0.0
    %808 = vmatpush1.msra.mxu0 0.0
    %809 = vmatprep.subr.mxu0 0.0
    %810 = vmatpush1.msra.mxu0 0.0
    %811 = vmatprep.subr.mxu0 0.0
    %812 = vmatpush1.msra.mxu0 0.0
    %813 = vmatprep.mubr.f32.mxu0 0.0
    %814 = vmatmul.mubr.f32.gmra.mrb[0].mxu0 %v639
    %v815 = vpop.f32.mrb[0].mxu0
    %v816 = vadd.f32 0.0, %v815
    %v817 = vpop.f32.mrb[0].mxu0
    %818 = vmatprep.mubr.f32.mxu0 0.0
    %819 = vmatmul.mubr.f32.gmra.mrb[0].mxu0 %v642
    %v820 = vpop.f32.mrb[0].mxu0
    %v821 = vadd.f32 0.0, %v820
    %v822 = vpop.f32.mrb[0].mxu0
    %823 = vmatprep.mubr.f32.mxu0 0.0
    %824 = vmatmul.mubr.f32.gmra.mrb[0].mxu0 %v645
    %v825 = vpop.f32.mrb[0].mxu0
    %v826 = vadd.f32 0.0, %v825
    %v827 = vpop.f32.mrb[0].mxu0
    %828 = vmatprep.mubr.f32.mxu0 0.0
    %829 = vmatmul.mubr.f32.gmra.mrb[0].mxu0 %v648
    %v830 = vpop.f32.mrb[0].mxu0
    %v831 = vadd.f32 0.0, %v830
    %v832 = vpop.f32.mrb[0].mxu0
    %833 = vmatprep.mubr.f32.mxu0 0.0
    %834 = vmatmul.mubr.f32.gmra.mrb[0].mxu0 %v651
    %v835 = vpop.f32.mrb[0].mxu0
    %v836 = vadd.f32 0.0, %v835
    %v837 = vpop.f32.mrb[0].mxu0
    %838 = vmatprep.mubr.f32.mxu0 0.0
    %839 = vmatmul.mubr.f32.gmra.mrb[0].mxu0 %v654
    %v840 = vpop.f32.mrb[0].mxu0
    %v841 = vadd.f32 0.0, %v840
    %v842 = vpop.f32.mrb[0].mxu0
    %843 = vmatprep.mubr.f32.mxu0 0.0
    %844 = vmatmul.mubr.f32.gmra.mrb[0].mxu0 %v657
    %v845 = vpop.f32.mrb[0].mxu0
    %v846 = vadd.f32 0.0, %v845
    %v847 = vpop.f32.mrb[0].mxu0
    %848 = vmatprep.mubr.f32.mxu0 0.0
    %849 = vmatmul.mubr.f32.gmra.mrb[0].mxu0 %v660
    %v850 = vpop.f32.mrb[0].mxu0
    %v851 = vadd.f32 0.0, %v850
    %v852 = vpop.f32.mrb[0].mxu0
    %853 = vmatprep.mubr.f32.mxu0 0.0
    %854 = vmatmul.mubr.f32.gmra.mrb[0].mxu0 %v663
    %v855 = vpop.f32.mrb[0].mxu0
    %v856 = vadd.f32 0.0, %v855
    %v857 = vpop.f32.mrb[0].mxu0
    %858 = vmatprep.mubr.f32.mxu0 0.0
    %859 = vmatmul.mubr.f32.gmra.mrb[0].mxu0 %v666
    %v860 = vpop.f32.mrb[0].mxu0
    %v861 = vadd.f32 0.0, %v860
    %v862 = vpop.f32.mrb[0].mxu0
    %863 = vmatprep.mubr.f32.mxu0 0.0
    %864 = vmatmul.mubr.f32.gmra.mrb[0].mxu0 %v669
    %v865 = vpop.f32.mrb[0].mxu0
    %v866 = vadd.f32 0.0, %v865
    %v867 = vpop.f32.mrb[0].mxu0
    %868 = vmatprep.mubr.f32.mxu0 0.0
    %869 = vmatmul.mubr.f32.gmra.mrb[0].mxu0 %v672
    %v870 = vpop.f32.mrb[0].mxu0
    %v871 = vadd.f32 0.0, %v870
    %v872 = vpop.f32.mrb[0].mxu0
    %873 = vmatprep.mubr.f32.mxu0 0.0
    %874 = vmatmul.mubr.f32.gmra.mrb[0].mxu0 %v675
    %v875 = vpop.f32.mrb[0].mxu0
    %v876 = vadd.f32 0.0, %v875
    %v877 = vpop.f32.mrb[0].mxu0
    %878 = vmatprep.mubr.f32.mxu0 0.0
    %879 = vmatmul.mubr.f32.gmra.mrb[0].mxu0 %v678
    %v880 = vpop.f32.mrb[0].mxu0
    %v881 = vadd.f32 0.0, %v880
    %v882 = vpop.f32.mrb[0].mxu0
    %883 = vmatprep.mubr.f32.mxu0 0.0
    %884 = vmatmul.mubr.f32.gmra.mrb[0].mxu0 %v681
    %v885 = vpop.f32.mrb[0].mxu0
    %v886 = vadd.f32 0.0, %v885
    %v887 = vpop.f32.mrb[0].mxu0
    %888 = vmatprep.mubr.f32.mxu0 0.0
    %889 = vmatmul.mubr.f32.gmra.mrb[0].mxu0 %v684
    %v890 = vpop.f32.mrb[0].mxu0
    %v891 = vadd.f32 0.0, %v890
    %v892 = vpop.f32.mrb[0].mxu0
    %893 = vmatprep.mubr.f32.mxu0 0.0
    %894 = vmatmul.mubr.f32.gmra.mrb[0].mxu0 %v687
    %v895 = vpop.f32.mrb[0].mxu0
    %v896 = vadd.f32 0.0, %v895
    %v897 = vpop.f32.mrb[0].mxu0
    %898 = vmatprep.mubr.f32.mxu0 0.0
    %899 = vmatmul.mubr.f32.gmra.mrb[0].mxu0 %v690
    %v900 = vpop.f32.mrb[0].mxu0
    %v901 = vadd.f32 0.0, %v900
    %v902 = vpop.f32.mrb[0].mxu0
    %903 = vmatprep.mubr.f32.mxu0 0.0
    %904 = vmatmul.mubr.f32.gmra.mrb[0].mxu0 %v693
    %v905 = vpop.f32.mrb[0].mxu0
    %v906 = vadd.f32 0.0, %v905
    %v907 = vpop.f32.mrb[0].mxu0
    %908 = vmatprep.mubr.f32.mxu0 0.0
    %909 = vmatmul.mubr.f32.gmra.mrb[0].mxu0 %v696
    %v910 = vpop.f32.mrb[0].mxu0
    %v911 = vadd.f32 0.0, %v910
    %v912 = vpop.f32.mrb[0].mxu0
    %913 = vmatprep.mubr.f32.mxu0 0.0
    %914 = vmatmul.mubr.f32.gmra.mrb[0].mxu0 %v699
    %v915 = vpop.f32.mrb[0].mxu0
    %v916 = vadd.f32 0.0, %v915
    %v917 = vpop.f32.mrb[0].mxu0
    %918 = vmatprep.mubr.f32.mxu0 0.0
    %919 = vmatmul.mubr.f32.gmra.mrb[0].mxu0 %v702
    %v920 = vpop.f32.mrb[0].mxu0
    %v921 = vadd.f32 0.0, %v920
    %v922 = vpop.f32.mrb[0].mxu0
    %923 = vmatprep.mubr.f32.mxu0 0.0
    %924 = vmatmul.mubr.f32.gmra.mrb[0].mxu0 %v705
    %v925 = vpop.f32.mrb[0].mxu0
    %v926 = vadd.f32 0.0, %v925
    %v927 = vpop.f32.mrb[0].mxu0
    %928 = vmatprep.mubr.f32.mxu0 0.0
    %929 = vmatmul.mubr.f32.gmra.mrb[0].mxu0 %v708
    %v930 = vpop.f32.mrb[0].mxu0
    %v931 = vadd.f32 0.0, %v930
    %v932 = vpop.f32.mrb[0].mxu0
    %933 = vmatprep.mubr.f32.mxu0 0.0
    %934 = vmatmul.mubr.f32.gmra.mrb[0].mxu0 %v711
    %v935 = vpop.f32.mrb[0].mxu0
    %v936 = vadd.f32 0.0, %v935
    %v937 = vpop.f32.mrb[0].mxu0
    %938 = vmatprep.mubr.f32.mxu0 0.0
    %939 = vmatmul.mubr.f32.gmra.mrb[0].mxu0 %v714
    %v940 = vpop.f32.mrb[0].mxu0
    %v941 = vadd.f32 0.0, %v940
    %v942 = vpop.f32.mrb[0].mxu0
    %943 = vmatprep.mubr.f32.mxu0 0.0
    %944 = vmatmul.mubr.f32.gmra.mrb[0].mxu0 %v717
    %v945 = vpop.f32.mrb[0].mxu0
    %v946 = vadd.f32 0.0, %v945
    %v947 = vpop.f32.mrb[0].mxu0
    %948 = vmatprep.mubr.f32.mxu0 0.0
    %949 = vmatmul.mubr.f32.gmra.mrb[0].mxu0 %v720
    %v950 = vpop.f32.mrb[0].mxu0
    %v951 = vadd.f32 0.0, %v950
    %v952 = vpop.f32.mrb[0].mxu0
    %953 = vmatprep.mubr.f32.mxu0 0.0
    %954 = vmatmul.mubr.f32.gmra.mrb[0].mxu0 %v723
    %v955 = vpop.f32.mrb[0].mxu0
    %v956 = vadd.f32 0.0, %v955
    %v957 = vpop.f32.mrb[0].mxu0
    %958 = vmatprep.mubr.f32.mxu0 0.0
    %959 = vmatmul.mubr.f32.gmra.mrb[0].mxu0 %v726
    %v960 = vpop.f32.mrb[0].mxu0
    %v961 = vadd.f32 0.0, %v960
    %v962 = vpop.f32.mrb[0].mxu0
    %963 = vmatprep.mubr.f32.mxu0 0.0
    %964 = vmatmul.mubr.f32.gmra.mrb[0].mxu0 %v729
    %v965 = vpop.f32.mrb[0].mxu0
    %v966 = vadd.f32 0.0, %v965
    %v967 = vpop.f32.mrb[0].mxu0
    %968 = vmatprep.mubr.f32.mxu0 0.0
    %969 = vmatmul.mubr.f32.gmra.mrb[0].mxu0 %v732
    %v970 = vpop.f32.mrb[0].mxu0
    %v971 = vadd.f32 0.0, %v970
    %v972 = vpop.f32.mrb[0].mxu0
    %973 = vmatprep.mubr.f32.mxu0 0.0
    %974 = vmatmul.mubr.f32.gmra.mrb[0].mxu0 %v735
    %v975 = vpop.f32.mrb[0].mxu0
    %v976 = vadd.f32 0.0, %v975
    %v977 = vpop.f32.mrb[0].mxu0
    %978 = vmatprep.mubr.f32.mxu0 0.0
    %979 = vmatmul.mubr.f32.gmra.mrb[0].mxu0 %v738
    %v980 = vpop.f32.mrb[0].mxu0
    %v981 = vadd.f32 0.0, %v980
    %v982 = vpop.f32.mrb[0].mxu0
    %983 = vmatprep.mubr.f32.mxu0 0.0
    %984 = vmatmul.mubr.f32.gmra.mrb[0].mxu0 %v741
    %v985 = vpop.f32.mrb[0].mxu0
    %v986 = vadd.f32 0.0, %v985
    %v987 = vpop.f32.mrb[0].mxu0
    %988 = vmatprep.mubr.f32.mxu0 0.0
    %989 = vmatmul.mubr.f32.gmra.mrb[0].mxu0 %v744
    %v990 = vpop.f32.mrb[0].mxu0
    %v991 = vadd.f32 0.0, %v990
    %v992 = vpop.f32.mrb[0].mxu0
    %993 = vdwg.mxu0
    %v994 = vadd.f32 %v600, %v816
    %v995 = vadd.f32 %v601, %v821
    %v996 = vadd.f32 %v602, %v826
    %v997 = vadd.f32 %v603, %v831
    %v998 = vadd.f32 %v604, %v836
    %v999 = vadd.f32 %v605, %v841
    %v1000 = vadd.f32 %v606, %v846
    %v1001 = vadd.f32 %v607, %v851
    %v1002 = vadd.f32 %v608, %v856
    %v1003 = vadd.f32 %v609, %v861
    %v1004 = vadd.f32 %v610, %v866
    %v1005 = vadd.f32 %v611, %v871
    %v1006 = vadd.f32 %v612, %v876
    %v1007 = vadd.f32 %v613, %v881
    %v1008 = vadd.f32 %v614, %v886
    %v1009 = vadd.f32 %v615, %v891
    %v1010 = vadd.f32 %v616, %v896
    %v1011 = vadd.f32 %v617, %v901
    %v1012 = vadd.f32 %v618, %v906
    %v1013 = vadd.f32 %v619, %v911
    %v1014 = vadd.f32 %v620, %v916
    %v1015 = vadd.f32 %v621, %v921
    %v1016 = vadd.f32 %v622, %v926
    %v1017 = vadd.f32 %v623, %v931
    %v1018 = vadd.f32 %v624, %v936
    %v1019 = vadd.f32 %v625, %v941
    %v1020 = vadd.f32 %v626, %v946
    %v1021 = vadd.f32 %v627, %v951
    %v1022 = vadd.f32 %v628, %v956
    %v1023 = vadd.f32 %v629, %v961
    %v1024 = vadd.f32 %v630, %v966
    %v1025 = vadd.f32 %v631, %v971
    %v1026 = vadd.f32 %v632, %v976
    %v1027 = vadd.f32 %v633, %v981
    %v1028 = vadd.f32 %v634, %v986
    %v1029 = vadd.f32 %v635, %v991
    %1030 = vst.msk [vmem:[#allocation2] sm:$0xff] %vm24, %v994
    %1031 = vst.msk [vmem:[#allocation2 + $0x8] sm:$0xff] %vm24, %v995
    %1032 = vst.msk [vmem:[#allocation2 + $0x10] sm:$0xff] %vm24, %v996
    %1033 = vst.msk [vmem:[#allocation2 + $0x18] sm:$0xff] %vm24, %v997
    %1034 = vst.msk [vmem:[#allocation2 + $0x20] sm:$0xff] %vm24, %v998
    %1035 = vst.msk [vmem:[#allocation2 + $0x28] sm:$0xff] %vm24, %v999
    %1036 = vst.msk [vmem:[#allocation2 + $0x30] sm:$0xff] %vm24, %v1000
    %1037 = vst.msk [vmem:[#allocation2 + $0x38] sm:$0xff] %vm24, %v1001
    %1038 = vst.msk [vmem:[#allocation2 + $0x40] sm:$0xff] %vm24, %v1002
    %1039 = vst.msk [vmem:[#allocation2 + $0x48] sm:$0xff] %vm24, %v1003
    %1040 = vst.msk [vmem:[#allocation2 + $0x50] sm:$0xff] %vm24, %v1004
    %1041 = vst.msk [vmem:[#allocation2 + $0x58] sm:$0xff] %vm24, %v1005
    %1042 = vst.msk [vmem:[#allocation2 + $0x60] sm:$0xff] %vm24, %v1006
    %1043 = vst.msk [vmem:[#allocation2 + $0x68] sm:$0xff] %vm24, %v1007
    %1044 = vst.msk [vmem:[#allocation2 + $0x70] sm:$0xff] %vm24, %v1008
    %1045 = vst.msk [vmem:[#allocation2 + $0x78] sm:$0xff] %vm24, %v1009
    %1046 = vst.msk [vmem:[#allocation2 + $0x80] sm:$0xff] %vm24, %v1010
    %1047 = vst.msk [vmem:[#allocation2 + $0x88] sm:$0xff] %vm24, %v1011
    %1048 = vst.msk [vmem:[#allocation2 + $0x90] sm:$0xff] %vm24, %v1012
    %1049 = vst.msk [vmem:[#allocation2 + $0x98] sm:$0xff] %vm24, %v1013
    %1050 = vst.msk [vmem:[#allocation2 + $0xa0] sm:$0xff] %vm24, %v1014
    %1051 = vst.msk [vmem:[#allocation2 + $0xa8] sm:$0xff] %vm24, %v1015
    %1052 = vst.msk [vmem:[#allocation2 + $0xb0] sm:$0xff] %vm24, %v1016
    %1053 = vst.msk [vmem:[#allocation2 + $0xb8] sm:$0xff] %vm24, %v1017
    %1054 = vst.msk [vmem:[#allocation2 + $0xc0] sm:$0xff] %vm24, %v1018
    %1055 = vst.msk [vmem:[#allocation2 + $0xc8] sm:$0xff] %vm24, %v1019
    %1056 = vst.msk [vmem:[#allocation2 + $0xd0] sm:$0xff] %vm24, %v1020
    %1057 = vst.msk [vmem:[#allocation2 + $0xd8] sm:$0xff] %vm24, %v1021
    %1058 = vst.msk [vmem:[#allocation2 + $0xe0] sm:$0xff] %vm24, %v1022
    %1059 = vst.msk [vmem:[#allocation2 + $0xe8] sm:$0xff] %vm24, %v1023
    %1060 = vst.msk [vmem:[#allocation2 + $0xf0] sm:$0xff] %vm24, %v1024
    %1061 = vst.msk [vmem:[#allocation2 + $0xf8] sm:$0xff] %vm24, %v1025
    %1062 = vst.msk [vmem:[#allocation2 + $0x100] sm:$0xff] %vm24, %v1026
    %1063 = vst.msk [vmem:[#allocation2 + $0x108] sm:$0xff] %vm24, %v1027
    %1064 = vst.msk [vmem:[#allocation2 + $0x110] sm:$0xff] %vm24, %v1028
    %1065 = vst.msk [vmem:[#allocation2 + $0x118] sm:$0xff] %vm24, %v1029
    %v1066 = vld [vmem:[%s0 + $0x2] sm:$0xff]
    %v1067 = vld [vmem:[%s0 + $0xa] sm:$0xff]
    %v1068 = vld [vmem:[%s0 + $0x12] sm:$0xff]
    %v1069 = vld [vmem:[%s0 + $0x1a] sm:$0xff]
    %v1070 = vld [vmem:[%s0 + $0x22] sm:$0xff]
    %v1071 = vld [vmem:[%s0 + $0x2a] sm:$0xff]
    %v1072 = vld [vmem:[%s0 + $0x32] sm:$0xff]
    %v1073 = vld [vmem:[%s0 + $0x3a] sm:$0xff]
    %v1074 = vld [vmem:[%s0 + $0x42] sm:$0xff]
    %v1075 = vld [vmem:[%s0 + $0x4a] sm:$0xff]
    %v1076 = vld [vmem:[%s0 + $0x52] sm:$0xff]
    %v1077 = vld [vmem:[%s0 + $0x5a] sm:$0xff]
    %v1078 = vld [vmem:[%s0 + $0x62] sm:$0xff]
    %v1079 = vld [vmem:[%s0 + $0x6a] sm:$0xff]
    %v1080 = vld [vmem:[%s0 + $0x72] sm:$0xff]
    %v1081 = vld [vmem:[%s0 + $0x7a] sm:$0xff]
    %v1082 = vld [vmem:[%s0 + $0x82] sm:$0xff]
    %v1083 = vld [vmem:[%s0 + $0x8a] sm:$0xff]
    %v1084 = vld [vmem:[%s0 + $0x92] sm:$0xff]
    %v1085 = vld [vmem:[%s0 + $0x9a] sm:$0xff]
    %v1086 = vld [vmem:[%s0 + $0xa2] sm:$0xff]
    %v1087 = vld [vmem:[%s0 + $0xaa] sm:$0xff]
    %v1088 = vld [vmem:[%s0 + $0xb2] sm:$0xff]
    %v1089 = vld [vmem:[%s0 + $0xba] sm:$0xff]
    %v1090 = vld [vmem:[%s0 + $0xc2] sm:$0xff]
    %v1091 = vld [vmem:[%s0 + $0xca] sm:$0xff]
    %v1092 = vld [vmem:[%s0 + $0xd2] sm:$0xff]
    %v1093 = vld [vmem:[%s0 + $0xda] sm:$0xff]
    %v1094 = vld [vmem:[%s0 + $0xe2] sm:$0xff]
    %v1095 = vld [vmem:[%s0 + $0xea] sm:$0xff]
    %v1096 = vld [vmem:[%s0 + $0xf2] sm:$0xff]
    %v1097 = vld [vmem:[%s0 + $0xfa] sm:$0xff]
    %v1098 = vld [vmem:[%s0 + $0x102] sm:$0xff]
    %v1099 = vld [vmem:[%s0 + $0x10a] sm:$0xff]
    %v1100 = vld [vmem:[%s0 + $0x112] sm:$0xff]
    %v1101 = vld [vmem:[%s0 + $0x11a] sm:$0xff]
    %v1102 = vld [vmem:[#allocation2] sm:$0xff]
    %v1103 = vld [vmem:[#allocation2 + $0x8] sm:$0xff]
    %v1104 = vld [vmem:[#allocation2 + $0x10] sm:$0xff]
    %v1105 = vld [vmem:[#allocation2 + $0x18] sm:$0xff]
    %v1106 = vld [vmem:[#allocation2 + $0x20] sm:$0xff]
    %v1107 = vld [vmem:[#allocation2 + $0x28] sm:$0xff]
    %v1108 = vld [vmem:[#allocation2 + $0x30] sm:$0xff]
    %v1109 = vld [vmem:[#allocation2 + $0x38] sm:$0xff]
    %v1110 = vld [vmem:[#allocation2 + $0x40] sm:$0xff]
    %v1111 = vld [vmem:[#allocation2 + $0x48] sm:$0xff]
    %v1112 = vld [vmem:[#allocation2 + $0x50] sm:$0xff]
    %v1113 = vld [vmem:[#allocation2 + $0x58] sm:$0xff]
    %v1114 = vld [vmem:[#allocation2 + $0x60] sm:$0xff]
    %v1115 = vld [vmem:[#allocation2 + $0x68] sm:$0xff]
    %v1116 = vld [vmem:[#allocation2 + $0x70] sm:$0xff]
    %v1117 = vld [vmem:[#allocation2 + $0x78] sm:$0xff]
    %v1118 = vld [vmem:[#allocation2 + $0x80] sm:$0xff]
    %v1119 = vld [vmem:[#allocation2 + $0x88] sm:$0xff]
    %v1120 = vld [vmem:[#allocation2 + $0x90] sm:$0xff]
    %v1121 = vld [vmem:[#allocation2 + $0x98] sm:$0xff]
    %v1122 = vld [vmem:[#allocation2 + $0xa0] sm:$0xff]
    %v1123 = vld [vmem:[#allocation2 + $0xa8] sm:$0xff]
    %v1124 = vld [vmem:[#allocation2 + $0xb0] sm:$0xff]
    %v1125 = vld [vmem:[#allocation2 + $0xb8] sm:$0xff]
    %v1126 = vld [vmem:[#allocation2 + $0xc0] sm:$0xff]
    %v1127 = vld [vmem:[#allocation2 + $0xc8] sm:$0xff]
    %v1128 = vld [vmem:[#allocation2 + $0xd0] sm:$0xff]
    %v1129 = vld [vmem:[#allocation2 + $0xd8] sm:$0xff]
    %v1130 = vld [vmem:[#allocation2 + $0xe0] sm:$0xff]
    %v1131 = vld [vmem:[#allocation2 + $0xe8] sm:$0xff]
    %v1132 = vld [vmem:[#allocation2 + $0xf0] sm:$0xff]
    %v1133 = vld [vmem:[#allocation2 + $0xf8] sm:$0xff]
    %v1134 = vld [vmem:[#allocation2 + $0x100] sm:$0xff]
    %v1135 = vld [vmem:[#allocation2 + $0x108] sm:$0xff]
    %v1136 = vld [vmem:[#allocation2 + $0x110] sm:$0xff]
    %v1137 = vld [vmem:[#allocation2 + $0x118] sm:$0xff]
    %s1138 = scalar_lea.vmem %s1, 8
    %v1139 = vld [vmem:[%s1138] sm:$0xf]
    %v1141 = vsel %vm134, %v1066, 0
    %v1144 = vsel %vm134, %v1067, 0
    %v1147 = vsel %vm134, %v1068, 0
    %v1150 = vsel %vm134, %v1069, 0
    %v1153 = vsel %vm134, %v1070, 0
    %v1156 = vsel %vm134, %v1071, 0
    %v1159 = vsel %vm134, %v1072, 0
    %v1162 = vsel %vm134, %v1073, 0
    %v1165 = vsel %vm134, %v1074, 0
    %v1168 = vsel %vm134, %v1075, 0
    %v1171 = vsel %vm134, %v1076, 0
    %v1174 = vsel %vm134, %v1077, 0
    %v1177 = vsel %vm134, %v1078, 0
    %v1180 = vsel %vm134, %v1079, 0
    %v1183 = vsel %vm134, %v1080, 0
    %v1186 = vsel %vm134, %v1081, 0
    %v1189 = vsel %vm134, %v1082, 0
    %v1192 = vsel %vm134, %v1083, 0
    %v1195 = vsel %vm134, %v1084, 0
    %v1198 = vsel %vm134, %v1085, 0
    %v1201 = vsel %vm134, %v1086, 0
    %v1204 = vsel %vm134, %v1087, 0
    %v1207 = vsel %vm134, %v1088, 0
    %v1210 = vsel %vm134, %v1089, 0
    %v1213 = vsel %vm134, %v1090, 0
    %v1216 = vsel %vm134, %v1091, 0
    %v1219 = vsel %vm134, %v1092, 0
    %v1222 = vsel %vm134, %v1093, 0
    %v1225 = vsel %vm134, %v1094, 0
    %v1228 = vsel %vm134, %v1095, 0
    %v1231 = vsel %vm134, %v1096, 0
    %v1234 = vsel %vm134, %v1097, 0
    %v1237 = vsel %vm134, %v1098, 0
    %v1240 = vsel %vm134, %v1099, 0
    %v1243 = vsel %vm134, %v1100, 0
    %v1246 = vsel %vm134, %v1101, 0
    %v1249 = vsel %vm243, %v1139, 0
    %1251 = vmatprep.subr.mxu0 0.0
    %1252 = vmatpush1.msra.mxu0 %v1249
    %1253 = vmatprep.subr.mxu0 0.0
    %1254 = vmatpush1.msra.mxu0 0.0
    %1255 = vmatprep.subr.mxu0 0.0
    %1256 = vmatpush1.msra.mxu0 0.0
    %1257 = vmatprep.subr.mxu0 0.0
    %1258 = vmatpush1.msra.mxu0 0.0
    %1259 = vmatprep.subr.mxu0 0.0
    %1260 = vmatpush1.msra.mxu0 0.0
    %1261 = vmatprep.subr.mxu0 0.0
    %1262 = vmatpush1.msra.mxu0 0.0
    %1263 = vmatprep.subr.mxu0 0.0
    %1264 = vmatpush1.msra.mxu0 0.0
    %1265 = vmatprep.subr.mxu0 0.0
    %1266 = vmatpush1.msra.mxu0 0.0
    %1267 = vmatprep.subr.mxu0 0.0
    %1268 = vmatpush1.msra.mxu0 0.0
    %1269 = vmatprep.subr.mxu0 0.0
    %1270 = vmatpush1.msra.mxu0 0.0
    %1271 = vmatprep.subr.mxu0 0.0
    %1272 = vmatpush1.msra.mxu0 0.0
    %1273 = vmatprep.subr.mxu0 0.0
    %1274 = vmatpush1.msra.mxu0 0.0
    %1275 = vmatprep.subr.mxu0 0.0
    %1276 = vmatpush1.msra.mxu0 0.0
    %1277 = vmatprep.subr.mxu0 0.0
    %1278 = vmatpush1.msra.mxu0 0.0
    %1279 = vmatprep.subr.mxu0 0.0
    %1280 = vmatpush1.msra.mxu0 0.0
    %1281 = vmatprep.subr.mxu0 0.0
    %1282 = vmatpush1.msra.mxu0 0.0
    %1283 = vmatprep.subr.mxu0 0.0
    %1284 = vmatpush1.msra.mxu0 0.0
    %1285 = vmatprep.subr.mxu0 0.0
    %1286 = vmatpush1.msra.mxu0 0.0
    %1287 = vmatprep.subr.mxu0 0.0
    %1288 = vmatpush1.msra.mxu0 0.0
    %1289 = vmatprep.subr.mxu0 0.0
    %1290 = vmatpush1.msra.mxu0 0.0
    %1291 = vmatprep.subr.mxu0 0.0
    %1292 = vmatpush1.msra.mxu0 0.0
    %1293 = vmatprep.subr.mxu0 0.0
    %1294 = vmatpush1.msra.mxu0 0.0
    %1295 = vmatprep.subr.mxu0 0.0
    %1296 = vmatpush1.msra.mxu0 0.0
    %1297 = vmatprep.subr.mxu0 0.0
    %1298 = vmatpush1.msra.mxu0 0.0
    %1299 = vmatprep.subr.mxu0 0.0
    %1300 = vmatpush1.msra.mxu0 0.0
    %1301 = vmatprep.subr.mxu0 0.0
    %1302 = vmatpush1.msra.mxu0 0.0
    %1303 = vmatprep.subr.mxu0 0.0
    %1304 = vmatpush1.msra.mxu0 0.0
    %1305 = vmatprep.subr.mxu0 0.0
    %1306 = vmatpush1.msra.mxu0 0.0
    %1307 = vmatprep.subr.mxu0 0.0
    %1308 = vmatpush1.msra.mxu0 0.0
    %1309 = vmatprep.subr.mxu0 0.0
    %1310 = vmatpush1.msra.mxu0 0.0
    %1311 = vmatprep.subr.mxu0 0.0
    %1312 = vmatpush1.msra.mxu0 0.0
    %1313 = vmatprep.subr.mxu0 0.0
    %1314 = vmatpush1.msra.mxu0 0.0
    %1315 = vmatprep.mubr.f32.mxu0 0.0
    %1316 = vmatmul.mubr.f32.gmra.mrb[0].mxu0 %v1141
    %v1317 = vpop.f32.mrb[0].mxu0
    %v1318 = vadd.f32 0.0, %v1317
    %v1319 = vpop.f32.mrb[0].mxu0
    %1320 = vmatprep.mubr.f32.mxu0 0.0
    %1321 = vmatmul.mubr.f32.gmra.mrb[0].mxu0 %v1144
    %v1322 = vpop.f32.mrb[0].mxu0
    %v1323 = vadd.f32 0.0, %v1322
    %v1324 = vpop.f32.mrb[0].mxu0
    %1325 = vmatprep.mubr.f32.mxu0 0.0
    %1326 = vmatmul.mubr.f32.gmra.mrb[0].mxu0 %v1147
    %v1327 = vpop.f32.mrb[0].mxu0
    %v1328 = vadd.f32 0.0, %v1327
    %v1329 = vpop.f32.mrb[0].mxu0
    %1330 = vmatprep.mubr.f32.mxu0 0.0
    %1331 = vmatmul.mubr.f32.gmra.mrb[0].mxu0 %v1150
    %v1332 = vpop.f32.mrb[0].mxu0
    %v1333 = vadd.f32 0.0, %v1332
    %v1334 = vpop.f32.mrb[0].mxu0
    %1335 = vmatprep.mubr.f32.mxu0 0.0
    %1336 = vmatmul.mubr.f32.gmra.mrb[0].mxu0 %v1153
    %v1337 = vpop.f32.mrb[0].mxu0
    %v1338 = vadd.f32 0.0, %v1337
    %v1339 = vpop.f32.mrb[0].mxu0
    %1340 = vmatprep.mubr.f32.mxu0 0.0
    %1341 = vmatmul.mubr.f32.gmra.mrb[0].mxu0 %v1156
    %v1342 = vpop.f32.mrb[0].mxu0
    %v1343 = vadd.f32 0.0, %v1342
    %v1344 = vpop.f32.mrb[0].mxu0
    %1345 = vmatprep.mubr.f32.mxu0 0.0
    %1346 = vmatmul.mubr.f32.gmra.mrb[0].mxu0 %v1159
    %v1347 = vpop.f32.mrb[0].mxu0
    %v1348 = vadd.f32 0.0, %v1347
    %v1349 = vpop.f32.mrb[0].mxu0
    %1350 = vmatprep.mubr.f32.mxu0 0.0
    %1351 = vmatmul.mubr.f32.gmra.mrb[0].mxu0 %v1162
    %v1352 = vpop.f32.mrb[0].mxu0
    %v1353 = vadd.f32 0.0, %v1352
    %v1354 = vpop.f32.mrb[0].mxu0
    %1355 = vmatprep.mubr.f32.mxu0 0.0
    %1356 = vmatmul.mubr.f32.gmra.mrb[0].mxu0 %v1165
    %v1357 = vpop.f32.mrb[0].mxu0
    %v1358 = vadd.f32 0.0, %v1357
    %v1359 = vpop.f32.mrb[0].mxu0
    %1360 = vmatprep.mubr.f32.mxu0 0.0
    %1361 = vmatmul.mubr.f32.gmra.mrb[0].mxu0 %v1168
    %v1362 = vpop.f32.mrb[0].mxu0
    %v1363 = vadd.f32 0.0, %v1362
    %v1364 = vpop.f32.mrb[0].mxu0
    %1365 = vmatprep.mubr.f32.mxu0 0.0
    %1366 = vmatmul.mubr.f32.gmra.mrb[0].mxu0 %v1171
    %v1367 = vpop.f32.mrb[0].mxu0
    %v1368 = vadd.f32 0.0, %v1367
    %v1369 = vpop.f32.mrb[0].mxu0
    %1370 = vmatprep.mubr.f32.mxu0 0.0
    %1371 = vmatmul.mubr.f32.gmra.mrb[0].mxu0 %v1174
    %v1372 = vpop.f32.mrb[0].mxu0
    %v1373 = vadd.f32 0.0, %v1372
    %v1374 = vpop.f32.mrb[0].mxu0
    %1375 = vmatprep.mubr.f32.mxu0 0.0
    %1376 = vmatmul.mubr.f32.gmra.mrb[0].mxu0 %v1177
    %v1377 = vpop.f32.mrb[0].mxu0
    %v1378 = vadd.f32 0.0, %v1377
    %v1379 = vpop.f32.mrb[0].mxu0
    %1380 = vmatprep.mubr.f32.mxu0 0.0
    %1381 = vmatmul.mubr.f32.gmra.mrb[0].mxu0 %v1180
    %v1382 = vpop.f32.mrb[0].mxu0
    %v1383 = vadd.f32 0.0, %v1382
    %v1384 = vpop.f32.mrb[0].mxu0
    %1385 = vmatprep.mubr.f32.mxu0 0.0
    %1386 = vmatmul.mubr.f32.gmra.mrb[0].mxu0 %v1183
    %v1387 = vpop.f32.mrb[0].mxu0
    %v1388 = vadd.f32 0.0, %v1387
    %v1389 = vpop.f32.mrb[0].mxu0
    %1390 = vmatprep.mubr.f32.mxu0 0.0
    %1391 = vmatmul.mubr.f32.gmra.mrb[0].mxu0 %v1186
    %v1392 = vpop.f32.mrb[0].mxu0
    %v1393 = vadd.f32 0.0, %v1392
    %v1394 = vpop.f32.mrb[0].mxu0
    %1395 = vmatprep.mubr.f32.mxu0 0.0
    %1396 = vmatmul.mubr.f32.gmra.mrb[0].mxu0 %v1189
    %v1397 = vpop.f32.mrb[0].mxu0
    %v1398 = vadd.f32 0.0, %v1397
    %v1399 = vpop.f32.mrb[0].mxu0
    %1400 = vmatprep.mubr.f32.mxu0 0.0
    %1401 = vmatmul.mubr.f32.gmra.mrb[0].mxu0 %v1192
    %v1402 = vpop.f32.mrb[0].mxu0
    %v1403 = vadd.f32 0.0, %v1402
    %v1404 = vpop.f32.mrb[0].mxu0
    %1405 = vmatprep.mubr.f32.mxu0 0.0
    %1406 = vmatmul.mubr.f32.gmra.mrb[0].mxu0 %v1195
    %v1407 = vpop.f32.mrb[0].mxu0
    %v1408 = vadd.f32 0.0, %v1407
    %v1409 = vpop.f32.mrb[0].mxu0
    %1410 = vmatprep.mubr.f32.mxu0 0.0
    %1411 = vmatmul.mubr.f32.gmra.mrb[0].mxu0 %v1198
    %v1412 = vpop.f32.mrb[0].mxu0
    %v1413 = vadd.f32 0.0, %v1412
    %v1414 = vpop.f32.mrb[0].mxu0
    %1415 = vmatprep.mubr.f32.mxu0 0.0
    %1416 = vmatmul.mubr.f32.gmra.mrb[0].mxu0 %v1201
    %v1417 = vpop.f32.mrb[0].mxu0
    %v1418 = vadd.f32 0.0, %v1417
    %v1419 = vpop.f32.mrb[0].mxu0
    %1420 = vmatprep.mubr.f32.mxu0 0.0
    %1421 = vmatmul.mubr.f32.gmra.mrb[0].mxu0 %v1204
    %v1422 = vpop.f32.mrb[0].mxu0
    %v1423 = vadd.f32 0.0, %v1422
    %v1424 = vpop.f32.mrb[0].mxu0
    %1425 = vmatprep.mubr.f32.mxu0 0.0
    %1426 = vmatmul.mubr.f32.gmra.mrb[0].mxu0 %v1207
    %v1427 = vpop.f32.mrb[0].mxu0
    %v1428 = vadd.f32 0.0, %v1427
    %v1429 = vpop.f32.mrb[0].mxu0
    %1430 = vmatprep.mubr.f32.mxu0 0.0
    %1431 = vmatmul.mubr.f32.gmra.mrb[0].mxu0 %v1210
    %v1432 = vpop.f32.mrb[0].mxu0
    %v1433 = vadd.f32 0.0, %v1432
    %v1434 = vpop.f32.mrb[0].mxu0
    %1435 = vmatprep.mubr.f32.mxu0 0.0
    %1436 = vmatmul.mubr.f32.gmra.mrb[0].mxu0 %v1213
    %v1437 = vpop.f32.mrb[0].mxu0
    %v1438 = vadd.f32 0.0, %v1437
    %v1439 = vpop.f32.mrb[0].mxu0
    %1440 = vmatprep.mubr.f32.mxu0 0.0
    %1441 = vmatmul.mubr.f32.gmra.mrb[0].mxu0 %v1216
    %v1442 = vpop.f32.mrb[0].mxu0
    %v1443 = vadd.f32 0.0, %v1442
    %v1444 = vpop.f32.mrb[0].mxu0
    %1445 = vmatprep.mubr.f32.mxu0 0.0
    %1446 = vmatmul.mubr.f32.gmra.mrb[0].mxu0 %v1219
    %v1447 = vpop.f32.mrb[0].mxu0
    %v1448 = vadd.f32 0.0, %v1447
    %v1449 = vpop.f32.mrb[0].mxu0
    %1450 = vmatprep.mubr.f32.mxu0 0.0
    %1451 = vmatmul.mubr.f32.gmra.mrb[0].mxu0 %v1222
    %v1452 = vpop.f32.mrb[0].mxu0
    %v1453 = vadd.f32 0.0, %v1452
    %v1454 = vpop.f32.mrb[0].mxu0
    %1455 = vmatprep.mubr.f32.mxu0 0.0
    %1456 = vmatmul.mubr.f32.gmra.mrb[0].mxu0 %v1225
    %v1457 = vpop.f32.mrb[0].mxu0
    %v1458 = vadd.f32 0.0, %v1457
    %v1459 = vpop.f32.mrb[0].mxu0
    %1460 = vmatprep.mubr.f32.mxu0 0.0
    %1461 = vmatmul.mubr.f32.gmra.mrb[0].mxu0 %v1228
    %v1462 = vpop.f32.mrb[0].mxu0
    %v1463 = vadd.f32 0.0, %v1462
    %v1464 = vpop.f32.mrb[0].mxu0
    %1465 = vmatprep.mubr.f32.mxu0 0.0
    %1466 = vmatmul.mubr.f32.gmra.mrb[0].mxu0 %v1231
    %v1467 = vpop.f32.mrb[0].mxu0
    %v1468 = vadd.f32 0.0, %v1467
    %v1469 = vpop.f32.mrb[0].mxu0
    %1470 = vmatprep.mubr.f32.mxu0 0.0
    %1471 = vmatmul.mubr.f32.gmra.mrb[0].mxu0 %v1234
    %v1472 = vpop.f32.mrb[0].mxu0
    %v1473 = vadd.f32 0.0, %v1472
    %v1474 = vpop.f32.mrb[0].mxu0
    %1475 = vmatprep.mubr.f32.mxu0 0.0
    %1476 = vmatmul.mubr.f32.gmra.mrb[0].mxu0 %v1237
    %v1477 = vpop.f32.mrb[0].mxu0
    %v1478 = vadd.f32 0.0, %v1477
    %v1479 = vpop.f32.mrb[0].mxu0
    %1480 = vmatprep.mubr.f32.mxu0 0.0
    %1481 = vmatmul.mubr.f32.gmra.mrb[0].mxu0 %v1240
    %v1482 = vpop.f32.mrb[0].mxu0
    %v1483 = vadd.f32 0.0, %v1482
    %v1484 = vpop.f32.mrb[0].mxu0
    %1485 = vmatprep.mubr.f32.mxu0 0.0
    %1486 = vmatmul.mubr.f32.gmra.mrb[0].mxu0 %v1243
    %v1487 = vpop.f32.mrb[0].mxu0
    %v1488 = vadd.f32 0.0, %v1487
    %v1489 = vpop.f32.mrb[0].mxu0
    %1490 = vmatprep.mubr.f32.mxu0 0.0
    %1491 = vmatmul.mubr.f32.gmra.mrb[0].mxu0 %v1246
    %v1492 = vpop.f32.mrb[0].mxu0
    %v1493 = vadd.f32 0.0, %v1492
    %v1494 = vpop.f32.mrb[0].mxu0
    %1495 = vdwg.mxu0
    %v1496 = vadd.f32 %v1102, %v1318
    %v1497 = vadd.f32 %v1103, %v1323
    %v1498 = vadd.f32 %v1104, %v1328
    %v1499 = vadd.f32 %v1105, %v1333
    %v1500 = vadd.f32 %v1106, %v1338
    %v1501 = vadd.f32 %v1107, %v1343
    %v1502 = vadd.f32 %v1108, %v1348
    %v1503 = vadd.f32 %v1109, %v1353
    %v1504 = vadd.f32 %v1110, %v1358
    %v1505 = vadd.f32 %v1111, %v1363
    %v1506 = vadd.f32 %v1112, %v1368
    %v1507 = vadd.f32 %v1113, %v1373
    %v1508 = vadd.f32 %v1114, %v1378
    %v1509 = vadd.f32 %v1115, %v1383
    %v1510 = vadd.f32 %v1116, %v1388
    %v1511 = vadd.f32 %v1117, %v1393
    %v1512 = vadd.f32 %v1118, %v1398
    %v1513 = vadd.f32 %v1119, %v1403
    %v1514 = vadd.f32 %v1120, %v1408
    %v1515 = vadd.f32 %v1121, %v1413
    %v1516 = vadd.f32 %v1122, %v1418
    %v1517 = vadd.f32 %v1123, %v1423
    %v1518 = vadd.f32 %v1124, %v1428
    %v1519 = vadd.f32 %v1125, %v1433
    %v1520 = vadd.f32 %v1126, %v1438
    %v1521 = vadd.f32 %v1127, %v1443
    %v1522 = vadd.f32 %v1128, %v1448
    %v1523 = vadd.f32 %v1129, %v1453
    %v1524 = vadd.f32 %v1130, %v1458
    %v1525 = vadd.f32 %v1131, %v1463
    %v1526 = vadd.f32 %v1132, %v1468
    %v1527 = vadd.f32 %v1133, %v1473
    %v1528 = vadd.f32 %v1134, %v1478
    %v1529 = vadd.f32 %v1135, %v1483
    %v1530 = vadd.f32 %v1136, %v1488
    %v1531 = vadd.f32 %v1137, %v1493
    %1532 = vst.msk [vmem:[#allocation2] sm:$0xff] %vm24, %v1496
    %1533 = vst.msk [vmem:[#allocation2 + $0x8] sm:$0xff] %vm24, %v1497
    %1534 = vst.msk [vmem:[#allocation2 + $0x10] sm:$0xff] %vm24, %v1498
    %1535 = vst.msk [vmem:[#allocation2 + $0x18] sm:$0xff] %vm24, %v1499
    %1536 = vst.msk [vmem:[#allocation2 + $0x20] sm:$0xff] %vm24, %v1500
    %1537 = vst.msk [vmem:[#allocation2 + $0x28] sm:$0xff] %vm24, %v1501
    %1538 = vst.msk [vmem:[#allocation2 + $0x30] sm:$0xff] %vm24, %v1502
    %1539 = vst.msk [vmem:[#allocation2 + $0x38] sm:$0xff] %vm24, %v1503
    %1540 = vst.msk [vmem:[#allocation2 + $0x40] sm:$0xff] %vm24, %v1504
    %1541 = vst.msk [vmem:[#allocation2 + $0x48] sm:$0xff] %vm24, %v1505
    %1542 = vst.msk [vmem:[#allocation2 + $0x50] sm:$0xff] %vm24, %v1506
    %1543 = vst.msk [vmem:[#allocation2 + $0x58] sm:$0xff] %vm24, %v1507
    %1544 = vst.msk [vmem:[#allocation2 + $0x60] sm:$0xff] %vm24, %v1508
    %1545 = vst.msk [vmem:[#allocation2 + $0x68] sm:$0xff] %vm24, %v1509
    %1546 = vst.msk [vmem:[#allocation2 + $0x70] sm:$0xff] %vm24, %v1510
    %1547 = vst.msk [vmem:[#allocation2 + $0x78] sm:$0xff] %vm24, %v1511
    %1548 = vst.msk [vmem:[#allocation2 + $0x80] sm:$0xff] %vm24, %v1512
    %1549 = vst.msk [vmem:[#allocation2 + $0x88] sm:$0xff] %vm24, %v1513
    %1550 = vst.msk [vmem:[#allocation2 + $0x90] sm:$0xff] %vm24, %v1514
    %1551 = vst.msk [vmem:[#allocation2 + $0x98] sm:$0xff] %vm24, %v1515
    %1552 = vst.msk [vmem:[#allocation2 + $0xa0] sm:$0xff] %vm24, %v1516
    %1553 = vst.msk [vmem:[#allocation2 + $0xa8] sm:$0xff] %vm24, %v1517
    %1554 = vst.msk [vmem:[#allocation2 + $0xb0] sm:$0xff] %vm24, %v1518
    %1555 = vst.msk [vmem:[#allocation2 + $0xb8] sm:$0xff] %vm24, %v1519
    %1556 = vst.msk [vmem:[#allocation2 + $0xc0] sm:$0xff] %vm24, %v1520
    %1557 = vst.msk [vmem:[#allocation2 + $0xc8] sm:$0xff] %vm24, %v1521
    %1558 = vst.msk [vmem:[#allocation2 + $0xd0] sm:$0xff] %vm24, %v1522
    %1559 = vst.msk [vmem:[#allocation2 + $0xd8] sm:$0xff] %vm24, %v1523
    %1560 = vst.msk [vmem:[#allocation2 + $0xe0] sm:$0xff] %vm24, %v1524
    %1561 = vst.msk [vmem:[#allocation2 + $0xe8] sm:$0xff] %vm24, %v1525
    %1562 = vst.msk [vmem:[#allocation2 + $0xf0] sm:$0xff] %vm24, %v1526
    %1563 = vst.msk [vmem:[#allocation2 + $0xf8] sm:$0xff] %vm24, %v1527
    %1564 = vst.msk [vmem:[#allocation2 + $0x100] sm:$0xff] %vm24, %v1528
    %1565 = vst.msk [vmem:[#allocation2 + $0x108] sm:$0xff] %vm24, %v1529
    %1566 = vst.msk [vmem:[#allocation2 + $0x110] sm:$0xff] %vm24, %v1530
    %1567 = vst.msk [vmem:[#allocation2 + $0x118] sm:$0xff] %vm24, %v1531
    %v1568 = vld [vmem:[%s0 + $0x12] sm:$0xff]
    %v1569 = vld [vmem:[%s0 + $0x1a] sm:$0xff]
    %v1570 = vld [vmem:[%s0 + $0x22] sm:$0xff]
    %v1571 = vld [vmem:[%s0 + $0x2a] sm:$0xff]
    %v1572 = vld [vmem:[%s0 + $0x32] sm:$0xff]
    %v1573 = vld [vmem:[%s0 + $0x3a] sm:$0xff]
    %v1574 = vld [vmem:[%s0 + $0x42] sm:$0xff]
    %v1575 = vld [vmem:[%s0 + $0x4a] sm:$0xff]
    %v1576 = vld [vmem:[%s0 + $0x52] sm:$0xff]
    %v1577 = vld [vmem:[%s0 + $0x5a] sm:$0xff]
    %v1578 = vld [vmem:[%s0 + $0x62] sm:$0xff]
    %v1579 = vld [vmem:[%s0 + $0x6a] sm:$0xff]
    %v1580 = vld [vmem:[%s0 + $0x72] sm:$0xff]
    %v1581 = vld [vmem:[%s0 + $0x7a] sm:$0xff]
    %v1582 = vld [vmem:[%s0 + $0x82] sm:$0xff]
    %v1583 = vld [vmem:[%s0 + $0x8a] sm:$0xff]
    %v1584 = vld [vmem:[%s0 + $0x92] sm:$0xff]
    %v1585 = vld [vmem:[%s0 + $0x9a] sm:$0xff]
    %v1586 = vld [vmem:[%s0 + $0xa2] sm:$0xff]
    %v1587 = vld [vmem:[%s0 + $0xaa] sm:$0xff]
    %v1588 = vld [vmem:[%s0 + $0xb2] sm:$0xff]
    %v1589 = vld [vmem:[%s0 + $0xba] sm:$0xff]
    %v1590 = vld [vmem:[%s0 + $0xc2] sm:$0xff]
    %v1591 = vld [vmem:[%s0 + $0xca] sm:$0xff]
    %v1592 = vld [vmem:[%s0 + $0xd2] sm:$0xff]
    %v1593 = vld [vmem:[%s0 + $0xda] sm:$0xff]
    %v1594 = vld [vmem:[%s0 + $0xe2] sm:$0xff]
    %v1595 = vld [vmem:[%s0 + $0xea] sm:$0xff]
    %v1596 = vld [vmem:[%s0 + $0xf2] sm:$0xff]
    %v1597 = vld [vmem:[%s0 + $0xfa] sm:$0xff]
    %v1598 = vld [vmem:[%s0 + $0x102] sm:$0xff]
    %v1599 = vld [vmem:[%s0 + $0x10a] sm:$0xff]
    %v1600 = vld [vmem:[%s0 + $0x112] sm:$0xff]
    %v1601 = vld [vmem:[%s0 + $0x11a] sm:$0xff]
    %v1602 = vld [vmem:[%s0 + $0x122] sm:$0xff]
    %v1603 = vld [vmem:[%s0 + $0x12a] sm:$0xff]
    %v1604 = vld [vmem:[#allocation2] sm:$0xff]
    %v1605 = vld [vmem:[#allocation2 + $0x8] sm:$0xff]
    %v1606 = vld [vmem:[#allocation2 + $0x10] sm:$0xff]
    %v1607 = vld [vmem:[#allocation2 + $0x18] sm:$0xff]
    %v1608 = vld [vmem:[#allocation2 + $0x20] sm:$0xff]
    %v1609 = vld [vmem:[#allocation2 + $0x28] sm:$0xff]
    %v1610 = vld [vmem:[#allocation2 + $0x30] sm:$0xff]
    %v1611 = vld [vmem:[#allocation2 + $0x38] sm:$0xff]
    %v1612 = vld [vmem:[#allocation2 + $0x40] sm:$0xff]
    %v1613 = vld [vmem:[#allocation2 + $0x48] sm:$0xff]
    %v1614 = vld [vmem:[#allocation2 + $0x50] sm:$0xff]
    %v1615 = vld [vmem:[#allocation2 + $0x58] sm:$0xff]
    %v1616 = vld [vmem:[#allocation2 + $0x60] sm:$0xff]
    %v1617 = vld [vmem:[#allocation2 + $0x68] sm:$0xff]
    %v1618 = vld [vmem:[#allocation2 + $0x70] sm:$0xff]
    %v1619 = vld [vmem:[#allocation2 + $0x78] sm:$0xff]
    %v1620 = vld [vmem:[#allocation2 + $0x80] sm:$0xff]
    %v1621 = vld [vmem:[#allocation2 + $0x88] sm:$0xff]
    %v1622 = vld [vmem:[#allocation2 + $0x90] sm:$0xff]
    %v1623 = vld [vmem:[#allocation2 + $0x98] sm:$0xff]
    %v1624 = vld [vmem:[#allocation2 + $0xa0] sm:$0xff]
    %v1625 = vld [vmem:[#allocation2 + $0xa8] sm:$0xff]
    %v1626 = vld [vmem:[#allocation2 + $0xb0] sm:$0xff]
    %v1627 = vld [vmem:[#allocation2 + $0xb8] sm:$0xff]
    %v1628 = vld [vmem:[#allocation2 + $0xc0] sm:$0xff]
    %v1629 = vld [vmem:[#allocation2 + $0xc8] sm:$0xff]
    %v1630 = vld [vmem:[#allocation2 + $0xd0] sm:$0xff]
    %v1631 = vld [vmem:[#allocation2 + $0xd8] sm:$0xff]
    %v1632 = vld [vmem:[#allocation2 + $0xe0] sm:$0xff]
    %v1633 = vld [vmem:[#allocation2 + $0xe8] sm:$0xff]
    %v1634 = vld [vmem:[#allocation2 + $0xf0] sm:$0xff]
    %v1635 = vld [vmem:[#allocation2 + $0xf8] sm:$0xff]
    %v1636 = vld [vmem:[#allocation2 + $0x100] sm:$0xff]
    %v1637 = vld [vmem:[#allocation2 + $0x108] sm:$0xff]
    %v1638 = vld [vmem:[#allocation2 + $0x110] sm:$0xff]
    %v1639 = vld [vmem:[#allocation2 + $0x118] sm:$0xff]
    %s1640 = scalar_lea.vmem %s1, 12
    %v1641 = vld [vmem:[%s1640] sm:$0xf]
    %v1643 = vsel %vm134, %v1568, 0
    %v1646 = vsel %vm134, %v1569, 0
    %v1649 = vsel %vm134, %v1570, 0
    %v1652 = vsel %vm134, %v1571, 0
    %v1655 = vsel %vm134, %v1572, 0
    %v1658 = vsel %vm134, %v1573, 0
    %v1661 = vsel %vm134, %v1574, 0
    %v1664 = vsel %vm134, %v1575, 0
    %v1667 = vsel %vm134, %v1576, 0
    %v1670 = vsel %vm134, %v1577, 0
    %v1673 = vsel %vm134, %v1578, 0
    %v1676 = vsel %vm134, %v1579, 0
    %v1679 = vsel %vm134, %v1580, 0
    %v1682 = vsel %vm134, %v1581, 0
    %v1685 = vsel %vm134, %v1582, 0
    %v1688 = vsel %vm134, %v1583, 0
    %v1691 = vsel %vm134, %v1584, 0
    %v1694 = vsel %vm134, %v1585, 0
    %v1697 = vsel %vm134, %v1586, 0
    %v1700 = vsel %vm134, %v1587, 0
    %v1703 = vsel %vm134, %v1588, 0
    %v1706 = vsel %vm134, %v1589, 0
    %v1709 = vsel %vm134, %v1590, 0
    %v1712 = vsel %vm134, %v1591, 0
    %v1715 = vsel %vm134, %v1592, 0
    %v1718 = vsel %vm134, %v1593, 0
    %v1721 = vsel %vm134, %v1594, 0
    %v1724 = vsel %vm134, %v1595, 0
    %v1727 = vsel %vm134, %v1596, 0
    %v1730 = vsel %vm134, %v1597, 0
    %v1733 = vsel %vm134, %v1598, 0
    %v1736 = vsel %vm134, %v1599, 0
    %v1739 = vsel %vm134, %v1600, 0
    %v1742 = vsel %vm134, %v1601, 0
    %v1745 = vsel %vm134, %v1602, 0
    %v1748 = vsel %vm134, %v1603, 0
    %v1751 = vsel %vm243, %v1641, 0
    %1753 = vmatprep.subr.mxu0 0.0
    %1754 = vmatpush1.msra.mxu0 %v1751
    %1755 = vmatprep.subr.mxu0 0.0
    %1756 = vmatpush1.msra.mxu0 0.0
    %1757 = vmatprep.subr.mxu0 0.0
    %1758 = vmatpush1.msra.mxu0 0.0
    %1759 = vmatprep.subr.mxu0 0.0
    %1760 = vmatpush1.msra.mxu0 0.0
    %1761 = vmatprep.subr.mxu0 0.0
    %1762 = vmatpush1.msra.mxu0 0.0
    %1763 = vmatprep.subr.mxu0 0.0
    %1764 = vmatpush1.msra.mxu0 0.0
    %1765 = vmatprep.subr.mxu0 0.0
    %1766 = vmatpush1.msra.mxu0 0.0
    %1767 = vmatprep.subr.mxu0 0.0
    %1768 = vmatpush1.msra.mxu0 0.0
    %1769 = vmatprep.subr.mxu0 0.0
    %1770 = vmatpush1.msra.mxu0 0.0
    %1771 = vmatprep.subr.mxu0 0.0
    %1772 = vmatpush1.msra.mxu0 0.0
    %1773 = vmatprep.subr.mxu0 0.0
    %1774 = vmatpush1.msra.mxu0 0.0
    %1775 = vmatprep.subr.mxu0 0.0
    %1776 = vmatpush1.msra.mxu0 0.0
    %1777 = vmatprep.subr.mxu0 0.0
    %1778 = vmatpush1.msra.mxu0 0.0
    %1779 = vmatprep.subr.mxu0 0.0
    %1780 = vmatpush1.msra.mxu0 0.0
    %1781 = vmatprep.subr.mxu0 0.0
    %1782 = vmatpush1.msra.mxu0 0.0
    %1783 = vmatprep.subr.mxu0 0.0
    %1784 = vmatpush1.msra.mxu0 0.0
    %1785 = vmatprep.subr.mxu0 0.0
    %1786 = vmatpush1.msra.mxu0 0.0
    %1787 = vmatprep.subr.mxu0 0.0
    %1788 = vmatpush1.msra.mxu0 0.0
    %1789 = vmatprep.subr.mxu0 0.0
    %1790 = vmatpush1.msra.mxu0 0.0
    %1791 = vmatprep.subr.mxu0 0.0
    %1792 = vmatpush1.msra.mxu0 0.0
    %1793 = vmatprep.subr.mxu0 0.0
    %1794 = vmatpush1.msra.mxu0 0.0
    %1795 = vmatprep.subr.mxu0 0.0
    %1796 = vmatpush1.msra.mxu0 0.0
    %1797 = vmatprep.subr.mxu0 0.0
    %1798 = vmatpush1.msra.mxu0 0.0
    %1799 = vmatprep.subr.mxu0 0.0
    %1800 = vmatpush1.msra.mxu0 0.0
    %1801 = vmatprep.subr.mxu0 0.0
    %1802 = vmatpush1.msra.mxu0 0.0
    %1803 = vmatprep.subr.mxu0 0.0
    %1804 = vmatpush1.msra.mxu0 0.0
    %1805 = vmatprep.subr.mxu0 0.0
    %1806 = vmatpush1.msra.mxu0 0.0
    %1807 = vmatprep.subr.mxu0 0.0
    %1808 = vmatpush1.msra.mxu0 0.0
    %1809 = vmatprep.subr.mxu0 0.0
    %1810 = vmatpush1.msra.mxu0 0.0
    %1811 = vmatprep.subr.mxu0 0.0
    %1812 = vmatpush1.msra.mxu0 0.0
    %1813 = vmatprep.subr.mxu0 0.0
    %1814 = vmatpush1.msra.mxu0 0.0
    %1815 = vmatprep.subr.mxu0 0.0
    %1816 = vmatpush1.msra.mxu0 0.0
    %1817 = vmatprep.mubr.f32.mxu0 0.0
    %1818 = vmatmul.mubr.f32.gmra.mrb[0].mxu0 %v1643
    %v1819 = vpop.f32.mrb[0].mxu0
    %v1820 = vadd.f32 0.0, %v1819
    %v1821 = vpop.f32.mrb[0].mxu0
    %1822 = vmatprep.mubr.f32.mxu0 0.0
    %1823 = vmatmul.mubr.f32.gmra.mrb[0].mxu0 %v1646
    %v1824 = vpop.f32.mrb[0].mxu0
    %v1825 = vadd.f32 0.0, %v1824
    %v1826 = vpop.f32.mrb[0].mxu0
    %1827 = vmatprep.mubr.f32.mxu0 0.0
    %1828 = vmatmul.mubr.f32.gmra.mrb[0].mxu0 %v1649
    %v1829 = vpop.f32.mrb[0].mxu0
    %v1830 = vadd.f32 0.0, %v1829
    %v1831 = vpop.f32.mrb[0].mxu0
    %1832 = vmatprep.mubr.f32.mxu0 0.0
    %1833 = vmatmul.mubr.f32.gmra.mrb[0].mxu0 %v1652
    %v1834 = vpop.f32.mrb[0].mxu0
    %v1835 = vadd.f32 0.0, %v1834
    %v1836 = vpop.f32.mrb[0].mxu0
    %1837 = vmatprep.mubr.f32.mxu0 0.0
    %1838 = vmatmul.mubr.f32.gmra.mrb[0].mxu0 %v1655
    %v1839 = vpop.f32.mrb[0].mxu0
    %v1840 = vadd.f32 0.0, %v1839
    %v1841 = vpop.f32.mrb[0].mxu0
    %1842 = vmatprep.mubr.f32.mxu0 0.0
    %1843 = vmatmul.mubr.f32.gmra.mrb[0].mxu0 %v1658
    %v1844 = vpop.f32.mrb[0].mxu0
    %v1845 = vadd.f32 0.0, %v1844
    %v1846 = vpop.f32.mrb[0].mxu0
    %1847 = vmatprep.mubr.f32.mxu0 0.0
    %1848 = vmatmul.mubr.f32.gmra.mrb[0].mxu0 %v1661
    %v1849 = vpop.f32.mrb[0].mxu0
    %v1850 = vadd.f32 0.0, %v1849
    %v1851 = vpop.f32.mrb[0].mxu0
    %1852 = vmatprep.mubr.f32.mxu0 0.0
    %1853 = vmatmul.mubr.f32.gmra.mrb[0].mxu0 %v1664
    %v1854 = vpop.f32.mrb[0].mxu0
    %v1855 = vadd.f32 0.0, %v1854
    %v1856 = vpop.f32.mrb[0].mxu0
    %1857 = vmatprep.mubr.f32.mxu0 0.0
    %1858 = vmatmul.mubr.f32.gmra.mrb[0].mxu0 %v1667
    %v1859 = vpop.f32.mrb[0].mxu0
    %v1860 = vadd.f32 0.0, %v1859
    %v1861 = vpop.f32.mrb[0].mxu0
    %1862 = vmatprep.mubr.f32.mxu0 0.0
    %1863 = vmatmul.mubr.f32.gmra.mrb[0].mxu0 %v1670
    %v1864 = vpop.f32.mrb[0].mxu0
    %v1865 = vadd.f32 0.0, %v1864
    %v1866 = vpop.f32.mrb[0].mxu0
    %1867 = vmatprep.mubr.f32.mxu0 0.0
    %1868 = vmatmul.mubr.f32.gmra.mrb[0].mxu0 %v1673
    %v1869 = vpop.f32.mrb[0].mxu0
    %v1870 = vadd.f32 0.0, %v1869
    %v1871 = vpop.f32.mrb[0].mxu0
    %1872 = vmatprep.mubr.f32.mxu0 0.0
    %1873 = vmatmul.mubr.f32.gmra.mrb[0].mxu0 %v1676
    %v1874 = vpop.f32.mrb[0].mxu0
    %v1875 = vadd.f32 0.0, %v1874
    %v1876 = vpop.f32.mrb[0].mxu0
    %1877 = vmatprep.mubr.f32.mxu0 0.0
    %1878 = vmatmul.mubr.f32.gmra.mrb[0].mxu0 %v1679
    %v1879 = vpop.f32.mrb[0].mxu0
    %v1880 = vadd.f32 0.0, %v1879
    %v1881 = vpop.f32.mrb[0].mxu0
    %1882 = vmatprep.mubr.f32.mxu0 0.0
    %1883 = vmatmul.mubr.f32.gmra.mrb[0].mxu0 %v1682
    %v1884 = vpop.f32.mrb[0].mxu0
    %v1885 = vadd.f32 0.0, %v1884
    %v1886 = vpop.f32.mrb[0].mxu0
    %1887 = vmatprep.mubr.f32.mxu0 0.0
    %1888 = vmatmul.mubr.f32.gmra.mrb[0].mxu0 %v1685
    %v1889 = vpop.f32.mrb[0].mxu0
    %v1890 = vadd.f32 0.0, %v1889
    %v1891 = vpop.f32.mrb[0].mxu0
    %1892 = vmatprep.mubr.f32.mxu0 0.0
    %1893 = vmatmul.mubr.f32.gmra.mrb[0].mxu0 %v1688
    %v1894 = vpop.f32.mrb[0].mxu0
    %v1895 = vadd.f32 0.0, %v1894
    %v1896 = vpop.f32.mrb[0].mxu0
    %1897 = vmatprep.mubr.f32.mxu0 0.0
    %1898 = vmatmul.mubr.f32.gmra.mrb[0].mxu0 %v1691
    %v1899 = vpop.f32.mrb[0].mxu0
    %v1900 = vadd.f32 0.0, %v1899
    %v1901 = vpop.f32.mrb[0].mxu0
    %1902 = vmatprep.mubr.f32.mxu0 0.0
    %1903 = vmatmul.mubr.f32.gmra.mrb[0].mxu0 %v1694
    %v1904 = vpop.f32.mrb[0].mxu0
    %v1905 = vadd.f32 0.0, %v1904
    %v1906 = vpop.f32.mrb[0].mxu0
    %1907 = vmatprep.mubr.f32.mxu0 0.0
    %1908 = vmatmul.mubr.f32.gmra.mrb[0].mxu0 %v1697
    %v1909 = vpop.f32.mrb[0].mxu0
    %v1910 = vadd.f32 0.0, %v1909
    %v1911 = vpop.f32.mrb[0].mxu0
    %1912 = vmatprep.mubr.f32.mxu0 0.0
    %1913 = vmatmul.mubr.f32.gmra.mrb[0].mxu0 %v1700
    %v1914 = vpop.f32.mrb[0].mxu0
    %v1915 = vadd.f32 0.0, %v1914
    %v1916 = vpop.f32.mrb[0].mxu0
    %1917 = vmatprep.mubr.f32.mxu0 0.0
    %1918 = vmatmul.mubr.f32.gmra.mrb[0].mxu0 %v1703
    %v1919 = vpop.f32.mrb[0].mxu0
    %v1920 = vadd.f32 0.0, %v1919
    %v1921 = vpop.f32.mrb[0].mxu0
    %1922 = vmatprep.mubr.f32.mxu0 0.0
    %1923 = vmatmul.mubr.f32.gmra.mrb[0].mxu0 %v1706
    %v1924 = vpop.f32.mrb[0].mxu0
    %v1925 = vadd.f32 0.0, %v1924
    %v1926 = vpop.f32.mrb[0].mxu0
    %1927 = vmatprep.mubr.f32.mxu0 0.0
    %1928 = vmatmul.mubr.f32.gmra.mrb[0].mxu0 %v1709
    %v1929 = vpop.f32.mrb[0].mxu0
    %v1930 = vadd.f32 0.0, %v1929
    %v1931 = vpop.f32.mrb[0].mxu0
    %1932 = vmatprep.mubr.f32.mxu0 0.0
    %1933 = vmatmul.mubr.f32.gmra.mrb[0].mxu0 %v1712
    %v1934 = vpop.f32.mrb[0].mxu0
    %v1935 = vadd.f32 0.0, %v1934
    %v1936 = vpop.f32.mrb[0].mxu0
    %1937 = vmatprep.mubr.f32.mxu0 0.0
    %1938 = vmatmul.mubr.f32.gmra.mrb[0].mxu0 %v1715
    %v1939 = vpop.f32.mrb[0].mxu0
    %v1940 = vadd.f32 0.0, %v1939
    %v1941 = vpop.f32.mrb[0].mxu0
    %1942 = vmatprep.mubr.f32.mxu0 0.0
    %1943 = vmatmul.mubr.f32.gmra.mrb[0].mxu0 %v1718
    %v1944 = vpop.f32.mrb[0].mxu0
    %v1945 = vadd.f32 0.0, %v1944
    %v1946 = vpop.f32.mrb[0].mxu0
    %1947 = vmatprep.mubr.f32.mxu0 0.0
    %1948 = vmatmul.mubr.f32.gmra.mrb[0].mxu0 %v1721
    %v1949 = vpop.f32.mrb[0].mxu0
    %v1950 = vadd.f32 0.0, %v1949
    %v1951 = vpop.f32.mrb[0].mxu0
    %1952 = vmatprep.mubr.f32.mxu0 0.0
    %1953 = vmatmul.mubr.f32.gmra.mrb[0].mxu0 %v1724
    %v1954 = vpop.f32.mrb[0].mxu0
    %v1955 = vadd.f32 0.0, %v1954
    %v1956 = vpop.f32.mrb[0].mxu0
    %1957 = vmatprep.mubr.f32.mxu0 0.0
    %1958 = vmatmul.mubr.f32.gmra.mrb[0].mxu0 %v1727
    %v1959 = vpop.f32.mrb[0].mxu0
    %v1960 = vadd.f32 0.0, %v1959
    %v1961 = vpop.f32.mrb[0].mxu0
    %1962 = vmatprep.mubr.f32.mxu0 0.0
    %1963 = vmatmul.mubr.f32.gmra.mrb[0].mxu0 %v1730
    %v1964 = vpop.f32.mrb[0].mxu0
    %v1965 = vadd.f32 0.0, %v1964
    %v1966 = vpop.f32.mrb[0].mxu0
    %1967 = vmatprep.mubr.f32.mxu0 0.0
    %1968 = vmatmul.mubr.f32.gmra.mrb[0].mxu0 %v1733
    %v1969 = vpop.f32.mrb[0].mxu0
    %v1970 = vadd.f32 0.0, %v1969
    %v1971 = vpop.f32.mrb[0].mxu0
    %1972 = vmatprep.mubr.f32.mxu0 0.0
    %1973 = vmatmul.mubr.f32.gmra.mrb[0].mxu0 %v1736
    %v1974 = vpop.f32.mrb[0].mxu0
    %v1975 = vadd.f32 0.0, %v1974
    %v1976 = vpop.f32.mrb[0].mxu0
    %1977 = vmatprep.mubr.f32.mxu0 0.0
    %1978 = vmatmul.mubr.f32.gmra.mrb[0].mxu0 %v1739
    %v1979 = vpop.f32.mrb[0].mxu0
    %v1980 = vadd.f32 0.0, %v1979
    %v1981 = vpop.f32.mrb[0].mxu0
    %1982 = vmatprep.mubr.f32.mxu0 0.0
    %1983 = vmatmul.mubr.f32.gmra.mrb[0].mxu0 %v1742
    %v1984 = vpop.f32.mrb[0].mxu0
    %v1985 = vadd.f32 0.0, %v1984
    %v1986 = vpop.f32.mrb[0].mxu0
    %1987 = vmatprep.mubr.f32.mxu0 0.0
    %1988 = vmatmul.mubr.f32.gmra.mrb[0].mxu0 %v1745
    %v1989 = vpop.f32.mrb[0].mxu0
    %v1990 = vadd.f32 0.0, %v1989
    %v1991 = vpop.f32.mrb[0].mxu0
    %1992 = vmatprep.mubr.f32.mxu0 0.0
    %1993 = vmatmul.mubr.f32.gmra.mrb[0].mxu0 %v1748
    %v1994 = vpop.f32.mrb[0].mxu0
    %v1995 = vadd.f32 0.0, %v1994
    %v1996 = vpop.f32.mrb[0].mxu0
    %1997 = vdwg.mxu0
    %v1998 = vadd.f32 %v1604, %v1820
    %v1999 = vadd.f32 %v1605, %v1825
    %v2000 = vadd.f32 %v1606, %v1830
    %v2001 = vadd.f32 %v1607, %v1835
    %v2002 = vadd.f32 %v1608, %v1840
    %v2003 = vadd.f32 %v1609, %v1845
    %v2004 = vadd.f32 %v1610, %v1850
    %v2005 = vadd.f32 %v1611, %v1855
    %v2006 = vadd.f32 %v1612, %v1860
    %v2007 = vadd.f32 %v1613, %v1865
    %v2008 = vadd.f32 %v1614, %v1870
    %v2009 = vadd.f32 %v1615, %v1875
    %v2010 = vadd.f32 %v1616, %v1880
    %v2011 = vadd.f32 %v1617, %v1885
    %v2012 = vadd.f32 %v1618, %v1890
    %v2013 = vadd.f32 %v1619, %v1895
    %v2014 = vadd.f32 %v1620, %v1900
    %v2015 = vadd.f32 %v1621, %v1905
    %v2016 = vadd.f32 %v1622, %v1910
    %v2017 = vadd.f32 %v1623, %v1915
    %v2018 = vadd.f32 %v1624, %v1920
    %v2019 = vadd.f32 %v1625, %v1925
    %v2020 = vadd.f32 %v1626, %v1930
    %v2021 = vadd.f32 %v1627, %v1935
    %v2022 = vadd.f32 %v1628, %v1940
    %v2023 = vadd.f32 %v1629, %v1945
    %v2024 = vadd.f32 %v1630, %v1950
    %v2025 = vadd.f32 %v1631, %v1955
    %v2026 = vadd.f32 %v1632, %v1960
    %v2027 = vadd.f32 %v1633, %v1965
    %v2028 = vadd.f32 %v1634, %v1970
    %v2029 = vadd.f32 %v1635, %v1975
    %v2030 = vadd.f32 %v1636, %v1980
    %v2031 = vadd.f32 %v1637, %v1985
    %v2032 = vadd.f32 %v1638, %v1990
    %v2033 = vadd.f32 %v1639, %v1995
    %2034 = vst.msk [vmem:[#allocation2] sm:$0xff] %vm24, %v1998
    %2035 = vst.msk [vmem:[#allocation2 + $0x8] sm:$0xff] %vm24, %v1999
    %2036 = vst.msk [vmem:[#allocation2 + $0x10] sm:$0xff] %vm24, %v2000
    %2037 = vst.msk [vmem:[#allocation2 + $0x18] sm:$0xff] %vm24, %v2001
    %2038 = vst.msk [vmem:[#allocation2 + $0x20] sm:$0xff] %vm24, %v2002
    %2039 = vst.msk [vmem:[#allocation2 + $0x28] sm:$0xff] %vm24, %v2003
    %2040 = vst.msk [vmem:[#allocation2 + $0x30] sm:$0xff] %vm24, %v2004
    %2041 = vst.msk [vmem:[#allocation2 + $0x38] sm:$0xff] %vm24, %v2005
    %2042 = vst.msk [vmem:[#allocation2 + $0x40] sm:$0xff] %vm24, %v2006
    %2043 = vst.msk [vmem:[#allocation2 + $0x48] sm:$0xff] %vm24, %v2007
    %2044 = vst.msk [vmem:[#allocation2 + $0x50] sm:$0xff] %vm24, %v2008
    %2045 = vst.msk [vmem:[#allocation2 + $0x58] sm:$0xff] %vm24, %v2009
    %2046 = vst.msk [vmem:[#allocation2 + $0x60] sm:$0xff] %vm24, %v2010
    %2047 = vst.msk [vmem:[#allocation2 + $0x68] sm:$0xff] %vm24, %v2011
    %2048 = vst.msk [vmem:[#allocation2 + $0x70] sm:$0xff] %vm24, %v2012
    %2049 = vst.msk [vmem:[#allocation2 + $0x78] sm:$0xff] %vm24, %v2013
    %2050 = vst.msk [vmem:[#allocation2 + $0x80] sm:$0xff] %vm24, %v2014
    %2051 = vst.msk [vmem:[#allocation2 + $0x88] sm:$0xff] %vm24, %v2015
    %2052 = vst.msk [vmem:[#allocation2 + $0x90] sm:$0xff] %vm24, %v2016
    %2053 = vst.msk [vmem:[#allocation2 + $0x98] sm:$0xff] %vm24, %v2017
    %2054 = vst.msk [vmem:[#allocation2 + $0xa0] sm:$0xff] %vm24, %v2018
    %2055 = vst.msk [vmem:[#allocation2 + $0xa8] sm:$0xff] %vm24, %v2019
    %2056 = vst.msk [vmem:[#allocation2 + $0xb0] sm:$0xff] %vm24, %v2020
    %2057 = vst.msk [vmem:[#allocation2 + $0xb8] sm:$0xff] %vm24, %v2021
    %2058 = vst.msk [vmem:[#allocation2 + $0xc0] sm:$0xff] %vm24, %v2022
    %2059 = vst.msk [vmem:[#allocation2 + $0xc8] sm:$0xff] %vm24, %v2023
    %2060 = vst.msk [vmem:[#allocation2 + $0xd0] sm:$0xff] %vm24, %v2024
    %2061 = vst.msk [vmem:[#allocation2 + $0xd8] sm:$0xff] %vm24, %v2025
    %2062 = vst.msk [vmem:[#allocation2 + $0xe0] sm:$0xff] %vm24, %v2026
    %2063 = vst.msk [vmem:[#allocation2 + $0xe8] sm:$0xff] %vm24, %v2027
    %2064 = vst.msk [vmem:[#allocation2 + $0xf0] sm:$0xff] %vm24, %v2028
    %2065 = vst.msk [vmem:[#allocation2 + $0xf8] sm:$0xff] %vm24, %v2029
    %2066 = vst.msk [vmem:[#allocation2 + $0x100] sm:$0xff] %vm24, %v2030
    %2067 = vst.msk [vmem:[#allocation2 + $0x108] sm:$0xff] %vm24, %v2031
    %2068 = vst.msk [vmem:[#allocation2 + $0x110] sm:$0xff] %vm24, %v2032
    %2069 = vst.msk [vmem:[#allocation2 + $0x118] sm:$0xff] %vm24, %v2033
    %v2070 = vld [vmem:[%s0 + $0x13] sm:$0xff]
    %v2071 = vld [vmem:[%s0 + $0x1b] sm:$0xff]
    %v2072 = vld [vmem:[%s0 + $0x23] sm:$0xff]
    %v2073 = vld [vmem:[%s0 + $0x2b] sm:$0xff]
    %v2074 = vld [vmem:[%s0 + $0x33] sm:$0xff]
    %v2075 = vld [vmem:[%s0 + $0x3b] sm:$0xff]
    %v2076 = vld [vmem:[%s0 + $0x43] sm:$0xff]
    %v2077 = vld [vmem:[%s0 + $0x4b] sm:$0xff]
    %v2078 = vld [vmem:[%s0 + $0x53] sm:$0xff]
    %v2079 = vld [vmem:[%s0 + $0x5b] sm:$0xff]
    %v2080 = vld [vmem:[%s0 + $0x63] sm:$0xff]
    %v2081 = vld [vmem:[%s0 + $0x6b] sm:$0xff]
    %v2082 = vld [vmem:[%s0 + $0x73] sm:$0xff]
    %v2083 = vld [vmem:[%s0 + $0x7b] sm:$0xff]
    %v2084 = vld [vmem:[%s0 + $0x83] sm:$0xff]
    %v2085 = vld [vmem:[%s0 + $0x8b] sm:$0xff]
    %v2086 = vld [vmem:[%s0 + $0x93] sm:$0xff]
    %v2087 = vld [vmem:[%s0 + $0x9b] sm:$0xff]
    %v2088 = vld [vmem:[%s0 + $0xa3] sm:$0xff]
    %v2089 = vld [vmem:[%s0 + $0xab] sm:$0xff]
    %v2090 = vld [vmem:[%s0 + $0xb3] sm:$0xff]
    %v2091 = vld [vmem:[%s0 + $0xbb] sm:$0xff]
    %v2092 = vld [vmem:[%s0 + $0xc3] sm:$0xff]
    %v2093 = vld [vmem:[%s0 + $0xcb] sm:$0xff]
    %v2094 = vld [vmem:[%s0 + $0xd3] sm:$0xff]
    %v2095 = vld [vmem:[%s0 + $0xdb] sm:$0xff]
    %v2096 = vld [vmem:[%s0 + $0xe3] sm:$0xff]
    %v2097 = vld [vmem:[%s0 + $0xeb] sm:$0xff]
    %v2098 = vld [vmem:[%s0 + $0xf3] sm:$0xff]
    %v2099 = vld [vmem:[%s0 + $0xfb] sm:$0xff]
    %v2100 = vld [vmem:[%s0 + $0x103] sm:$0xff]
    %v2101 = vld [vmem:[%s0 + $0x10b] sm:$0xff]
    %v2102 = vld [vmem:[%s0 + $0x113] sm:$0xff]
    %v2103 = vld [vmem:[%s0 + $0x11b] sm:$0xff]
    %v2104 = vld [vmem:[%s0 + $0x123] sm:$0xff]
    %v2105 = vld [vmem:[%s0 + $0x12b] sm:$0xff]
    %v2106 = vld [vmem:[#allocation2] sm:$0xff]
    %v2107 = vld [vmem:[#allocation2 + $0x8] sm:$0xff]
    %v2108 = vld [vmem:[#allocation2 + $0x10] sm:$0xff]
    %v2109 = vld [vmem:[#allocation2 + $0x18] sm:$0xff]
    %v2110 = vld [vmem:[#allocation2 + $0x20] sm:$0xff]
    %v2111 = vld [vmem:[#allocation2 + $0x28] sm:$0xff]
    %v2112 = vld [vmem:[#allocation2 + $0x30] sm:$0xff]
    %v2113 = vld [vmem:[#allocation2 + $0x38] sm:$0xff]
    %v2114 = vld [vmem:[#allocation2 + $0x40] sm:$0xff]
    %v2115 = vld [vmem:[#allocation2 + $0x48] sm:$0xff]
    %v2116 = vld [vmem:[#allocation2 + $0x50] sm:$0xff]
    %v2117 = vld [vmem:[#allocation2 + $0x58] sm:$0xff]
    %v2118 = vld [vmem:[#allocation2 + $0x60] sm:$0xff]
    %v2119 = vld [vmem:[#allocation2 + $0x68] sm:$0xff]
    %v2120 = vld [vmem:[#allocation2 + $0x70] sm:$0xff]
    %v2121 = vld [vmem:[#allocation2 + $0x78] sm:$0xff]
    %v2122 = vld [vmem:[#allocation2 + $0x80] sm:$0xff]
    %v2123 = vld [vmem:[#allocation2 + $0x88] sm:$0xff]
    %v2124 = vld [vmem:[#allocation2 + $0x90] sm:$0xff]
    %v2125 = vld [vmem:[#allocation2 + $0x98] sm:$0xff]
    %v2126 = vld [vmem:[#allocation2 + $0xa0] sm:$0xff]
    %v2127 = vld [vmem:[#allocation2 + $0xa8] sm:$0xff]
    %v2128 = vld [vmem:[#allocation2 + $0xb0] sm:$0xff]
    %v2129 = vld [vmem:[#allocation2 + $0xb8] sm:$0xff]
    %v2130 = vld [vmem:[#allocation2 + $0xc0] sm:$0xff]
    %v2131 = vld [vmem:[#allocation2 + $0xc8] sm:$0xff]
    %v2132 = vld [vmem:[#allocation2 + $0xd0] sm:$0xff]
    %v2133 = vld [vmem:[#allocation2 + $0xd8] sm:$0xff]
    %v2134 = vld [vmem:[#allocation2 + $0xe0] sm:$0xff]
    %v2135 = vld [vmem:[#allocation2 + $0xe8] sm:$0xff]
    %v2136 = vld [vmem:[#allocation2 + $0xf0] sm:$0xff]
    %v2137 = vld [vmem:[#allocation2 + $0xf8] sm:$0xff]
    %v2138 = vld [vmem:[#allocation2 + $0x100] sm:$0xff]
    %v2139 = vld [vmem:[#allocation2 + $0x108] sm:$0xff]
    %v2140 = vld [vmem:[#allocation2 + $0x110] sm:$0xff]
    %v2141 = vld [vmem:[#allocation2 + $0x118] sm:$0xff]
    %s2142 = scalar_lea.vmem %s1, 16
    %v2143 = vld [vmem:[%s2142] sm:$0xf]
    %v2145 = vsel %vm134, %v2070, 0
    %v2148 = vsel %vm134, %v2071, 0
    %v2151 = vsel %vm134, %v2072, 0
    %v2154 = vsel %vm134, %v2073, 0
    %v2157 = vsel %vm134, %v2074, 0
    %v2160 = vsel %vm134, %v2075, 0
    %v2163 = vsel %vm134, %v2076, 0
    %v2166 = vsel %vm134, %v2077, 0
    %v2169 = vsel %vm134, %v2078, 0
    %v2172 = vsel %vm134, %v2079, 0
    %v2175 = vsel %vm134, %v2080, 0
    %v2178 = vsel %vm134, %v2081, 0
    %v2181 = vsel %vm134, %v2082, 0
    %v2184 = vsel %vm134, %v2083, 0
    %v2187 = vsel %vm134, %v2084, 0
    %v2190 = vsel %vm134, %v2085, 0
    %v2193 = vsel %vm134, %v2086, 0
    %v2196 = vsel %vm134, %v2087, 0
    %v2199 = vsel %vm134, %v2088, 0
    %v2202 = vsel %vm134, %v2089, 0
    %v2205 = vsel %vm134, %v2090, 0
    %v2208 = vsel %vm134, %v2091, 0
    %v2211 = vsel %vm134, %v2092, 0
    %v2214 = vsel %vm134, %v2093, 0
    %v2217 = vsel %vm134, %v2094, 0
    %v2220 = vsel %vm134, %v2095, 0
    %v2223 = vsel %vm134, %v2096, 0
    %v2226 = vsel %vm134, %v2097, 0
    %v2229 = vsel %vm134, %v2098, 0
    %v2232 = vsel %vm134, %v2099, 0
    %v2235 = vsel %vm134, %v2100, 0
    %v2238 = vsel %vm134, %v2101, 0
    %v2241 = vsel %vm134, %v2102, 0
    %v2244 = vsel %vm134, %v2103, 0
    %v2247 = vsel %vm134, %v2104, 0
    %v2250 = vsel %vm134, %v2105, 0
    %v2253 = vsel %vm243, %v2143, 0
    %2255 = vmatprep.subr.mxu0 0.0
    %2256 = vmatpush1.msra.mxu0 %v2253
    %2257 = vmatprep.subr.mxu0 0.0
    %2258 = vmatpush1.msra.mxu0 0.0
    %2259 = vmatprep.subr.mxu0 0.0
    %2260 = vmatpush1.msra.mxu0 0.0
    %2261 = vmatprep.subr.mxu0 0.0
    %2262 = vmatpush1.msra.mxu0 0.0
    %2263 = vmatprep.subr.mxu0 0.0
    %2264 = vmatpush1.msra.mxu0 0.0
    %2265 = vmatprep.subr.mxu0 0.0
    %2266 = vmatpush1.msra.mxu0 0.0
    %2267 = vmatprep.subr.mxu0 0.0
    %2268 = vmatpush1.msra.mxu0 0.0
    %2269 = vmatprep.subr.mxu0 0.0
    %2270 = vmatpush1.msra.mxu0 0.0
    %2271 = vmatprep.subr.mxu0 0.0
    %2272 = vmatpush1.msra.mxu0 0.0
    %2273 = vmatprep.subr.mxu0 0.0
    %2274 = vmatpush1.msra.mxu0 0.0
    %2275 = vmatprep.subr.mxu0 0.0
    %2276 = vmatpush1.msra.mxu0 0.0
    %2277 = vmatprep.subr.mxu0 0.0
    %2278 = vmatpush1.msra.mxu0 0.0
    %2279 = vmatprep.subr.mxu0 0.0
    %2280 = vmatpush1.msra.mxu0 0.0
    %2281 = vmatprep.subr.mxu0 0.0
    %2282 = vmatpush1.msra.mxu0 0.0
    %2283 = vmatprep.subr.mxu0 0.0
    %2284 = vmatpush1.msra.mxu0 0.0
    %2285 = vmatprep.subr.mxu0 0.0
    %2286 = vmatpush1.msra.mxu0 0.0
    %2287 = vmatprep.subr.mxu0 0.0
    %2288 = vmatpush1.msra.mxu0 0.0
    %2289 = vmatprep.subr.mxu0 0.0
    %2290 = vmatpush1.msra.mxu0 0.0
    %2291 = vmatprep.subr.mxu0 0.0
    %2292 = vmatpush1.msra.mxu0 0.0
    %2293 = vmatprep.subr.mxu0 0.0
    %2294 = vmatpush1.msra.mxu0 0.0
    %2295 = vmatprep.subr.mxu0 0.0
    %2296 = vmatpush1.msra.mxu0 0.0
    %2297 = vmatprep.subr.mxu0 0.0
    %2298 = vmatpush1.msra.mxu0 0.0
    %2299 = vmatprep.subr.mxu0 0.0
    %2300 = vmatpush1.msra.mxu0 0.0
    %2301 = vmatprep.subr.mxu0 0.0
    %2302 = vmatpush1.msra.mxu0 0.0
    %2303 = vmatprep.subr.mxu0 0.0
    %2304 = vmatpush1.msra.mxu0 0.0
    %2305 = vmatprep.subr.mxu0 0.0
    %2306 = vmatpush1.msra.mxu0 0.0
    %2307 = vmatprep.subr.mxu0 0.0
    %2308 = vmatpush1.msra.mxu0 0.0
    %2309 = vmatprep.subr.mxu0 0.0
    %2310 = vmatpush1.msra.mxu0 0.0
    %2311 = vmatprep.subr.mxu0 0.0
    %2312 = vmatpush1.msra.mxu0 0.0
    %2313 = vmatprep.subr.mxu0 0.0
    %2314 = vmatpush1.msra.mxu0 0.0
    %2315 = vmatprep.subr.mxu0 0.0
    %2316 = vmatpush1.msra.mxu0 0.0
    %2317 = vmatprep.subr.mxu0 0.0
    %2318 = vmatpush1.msra.mxu0 0.0
    %2319 = vmatprep.mubr.f32.mxu0 0.0
    %2320 = vmatmul.mubr.f32.gmra.mrb[0].mxu0 %v2145
    %v2321 = vpop.f32.mrb[0].mxu0
    %v2322 = vadd.f32 0.0, %v2321
    %v2323 = vpop.f32.mrb[0].mxu0
    %2324 = vmatprep.mubr.f32.mxu0 0.0
    %2325 = vmatmul.mubr.f32.gmra.mrb[0].mxu0 %v2148
    %v2326 = vpop.f32.mrb[0].mxu0
    %v2327 = vadd.f32 0.0, %v2326
    %v2328 = vpop.f32.mrb[0].mxu0
    %2329 = vmatprep.mubr.f32.mxu0 0.0
    %2330 = vmatmul.mubr.f32.gmra.mrb[0].mxu0 %v2151
    %v2331 = vpop.f32.mrb[0].mxu0
    %v2332 = vadd.f32 0.0, %v2331
    %v2333 = vpop.f32.mrb[0].mxu0
    %2334 = vmatprep.mubr.f32.mxu0 0.0
    %2335 = vmatmul.mubr.f32.gmra.mrb[0].mxu0 %v2154
    %v2336 = vpop.f32.mrb[0].mxu0
    %v2337 = vadd.f32 0.0, %v2336
    %v2338 = vpop.f32.mrb[0].mxu0
    %2339 = vmatprep.mubr.f32.mxu0 0.0
    %2340 = vmatmul.mubr.f32.gmra.mrb[0].mxu0 %v2157
    %v2341 = vpop.f32.mrb[0].mxu0
    %v2342 = vadd.f32 0.0, %v2341
    %v2343 = vpop.f32.mrb[0].mxu0
    %2344 = vmatprep.mubr.f32.mxu0 0.0
    %2345 = vmatmul.mubr.f32.gmra.mrb[0].mxu0 %v2160
    %v2346 = vpop.f32.mrb[0].mxu0
    %v2347 = vadd.f32 0.0, %v2346
    %v2348 = vpop.f32.mrb[0].mxu0
    %2349 = vmatprep.mubr.f32.mxu0 0.0
    %2350 = vmatmul.mubr.f32.gmra.mrb[0].mxu0 %v2163
    %v2351 = vpop.f32.mrb[0].mxu0
    %v2352 = vadd.f32 0.0, %v2351
    %v2353 = vpop.f32.mrb[0].mxu0
    %2354 = vmatprep.mubr.f32.mxu0 0.0
    %2355 = vmatmul.mubr.f32.gmra.mrb[0].mxu0 %v2166
    %v2356 = vpop.f32.mrb[0].mxu0
    %v2357 = vadd.f32 0.0, %v2356
    %v2358 = vpop.f32.mrb[0].mxu0
    %2359 = vmatprep.mubr.f32.mxu0 0.0
    %2360 = vmatmul.mubr.f32.gmra.mrb[0].mxu0 %v2169
    %v2361 = vpop.f32.mrb[0].mxu0
    %v2362 = vadd.f32 0.0, %v2361
    %v2363 = vpop.f32.mrb[0].mxu0
    %2364 = vmatprep.mubr.f32.mxu0 0.0
    %2365 = vmatmul.mubr.f32.gmra.mrb[0].mxu0 %v2172
    %v2366 = vpop.f32.mrb[0].mxu0
    %v2367 = vadd.f32 0.0, %v2366
    %v2368 = vpop.f32.mrb[0].mxu0
    %2369 = vmatprep.mubr.f32.mxu0 0.0
    %2370 = vmatmul.mubr.f32.gmra.mrb[0].mxu0 %v2175
    %v2371 = vpop.f32.mrb[0].mxu0
    %v2372 = vadd.f32 0.0, %v2371
    %v2373 = vpop.f32.mrb[0].mxu0
    %2374 = vmatprep.mubr.f32.mxu0 0.0
    %2375 = vmatmul.mubr.f32.gmra.mrb[0].mxu0 %v2178
    %v2376 = vpop.f32.mrb[0].mxu0
    %v2377 = vadd.f32 0.0, %v2376
    %v2378 = vpop.f32.mrb[0].mxu0
    %2379 = vmatprep.mubr.f32.mxu0 0.0
    %2380 = vmatmul.mubr.f32.gmra.mrb[0].mxu0 %v2181
    %v2381 = vpop.f32.mrb[0].mxu0
    %v2382 = vadd.f32 0.0, %v2381
    %v2383 = vpop.f32.mrb[0].mxu0
    %2384 = vmatprep.mubr.f32.mxu0 0.0
    %2385 = vmatmul.mubr.f32.gmra.mrb[0].mxu0 %v2184
    %v2386 = vpop.f32.mrb[0].mxu0
    %v2387 = vadd.f32 0.0, %v2386
    %v2388 = vpop.f32.mrb[0].mxu0
    %2389 = vmatprep.mubr.f32.mxu0 0.0
    %2390 = vmatmul.mubr.f32.gmra.mrb[0].mxu0 %v2187
    %v2391 = vpop.f32.mrb[0].mxu0
    %v2392 = vadd.f32 0.0, %v2391
    %v2393 = vpop.f32.mrb[0].mxu0
    %2394 = vmatprep.mubr.f32.mxu0 0.0
    %2395 = vmatmul.mubr.f32.gmra.mrb[0].mxu0 %v2190
    %v2396 = vpop.f32.mrb[0].mxu0
    %v2397 = vadd.f32 0.0, %v2396
    %v2398 = vpop.f32.mrb[0].mxu0
    %2399 = vmatprep.mubr.f32.mxu0 0.0
    %2400 = vmatmul.mubr.f32.gmra.mrb[0].mxu0 %v2193
    %v2401 = vpop.f32.mrb[0].mxu0
    %v2402 = vadd.f32 0.0, %v2401
    %v2403 = vpop.f32.mrb[0].mxu0
    %2404 = vmatprep.mubr.f32.mxu0 0.0
    %2405 = vmatmul.mubr.f32.gmra.mrb[0].mxu0 %v2196
    %v2406 = vpop.f32.mrb[0].mxu0
    %v2407 = vadd.f32 0.0, %v2406
    %v2408 = vpop.f32.mrb[0].mxu0
    %2409 = vmatprep.mubr.f32.mxu0 0.0
    %2410 = vmatmul.mubr.f32.gmra.mrb[0].mxu0 %v2199
    %v2411 = vpop.f32.mrb[0].mxu0
    %v2412 = vadd.f32 0.0, %v2411
    %v2413 = vpop.f32.mrb[0].mxu0
    %2414 = vmatprep.mubr.f32.mxu0 0.0
    %2415 = vmatmul.mubr.f32.gmra.mrb[0].mxu0 %v2202
    %v2416 = vpop.f32.mrb[0].mxu0
    %v2417 = vadd.f32 0.0, %v2416
    %v2418 = vpop.f32.mrb[0].mxu0
    %2419 = vmatprep.mubr.f32.mxu0 0.0
    %2420 = vmatmul.mubr.f32.gmra.mrb[0].mxu0 %v2205
    %v2421 = vpop.f32.mrb[0].mxu0
    %v2422 = vadd.f32 0.0, %v2421
    %v2423 = vpop.f32.mrb[0].mxu0
    %2424 = vmatprep.mubr.f32.mxu0 0.0
    %2425 = vmatmul.mubr.f32.gmra.mrb[0].mxu0 %v2208
    %v2426 = vpop.f32.mrb[0].mxu0
    %v2427 = vadd.f32 0.0, %v2426
    %v2428 = vpop.f32.mrb[0].mxu0
    %2429 = vmatprep.mubr.f32.mxu0 0.0
    %2430 = vmatmul.mubr.f32.gmra.mrb[0].mxu0 %v2211
    %v2431 = vpop.f32.mrb[0].mxu0
    %v2432 = vadd.f32 0.0, %v2431
    %v2433 = vpop.f32.mrb[0].mxu0
    %2434 = vmatprep.mubr.f32.mxu0 0.0
    %2435 = vmatmul.mubr.f32.gmra.mrb[0].mxu0 %v2214
    %v2436 = vpop.f32.mrb[0].mxu0
    %v2437 = vadd.f32 0.0, %v2436
    %v2438 = vpop.f32.mrb[0].mxu0
    %2439 = vmatprep.mubr.f32.mxu0 0.0
    %2440 = vmatmul.mubr.f32.gmra.mrb[0].mxu0 %v2217
    %v2441 = vpop.f32.mrb[0].mxu0
    %v2442 = vadd.f32 0.0, %v2441
    %v2443 = vpop.f32.mrb[0].mxu0
    %2444 = vmatprep.mubr.f32.mxu0 0.0
    %2445 = vmatmul.mubr.f32.gmra.mrb[0].mxu0 %v2220
    %v2446 = vpop.f32.mrb[0].mxu0
    %v2447 = vadd.f32 0.0, %v2446
    %v2448 = vpop.f32.mrb[0].mxu0
    %2449 = vmatprep.mubr.f32.mxu0 0.0
    %2450 = vmatmul.mubr.f32.gmra.mrb[0].mxu0 %v2223
    %v2451 = vpop.f32.mrb[0].mxu0
    %v2452 = vadd.f32 0.0, %v2451
    %v2453 = vpop.f32.mrb[0].mxu0
    %2454 = vmatprep.mubr.f32.mxu0 0.0
    %2455 = vmatmul.mubr.f32.gmra.mrb[0].mxu0 %v2226
    %v2456 = vpop.f32.mrb[0].mxu0
    %v2457 = vadd.f32 0.0, %v2456
    %v2458 = vpop.f32.mrb[0].mxu0
    %2459 = vmatprep.mubr.f32.mxu0 0.0
    %2460 = vmatmul.mubr.f32.gmra.mrb[0].mxu0 %v2229
    %v2461 = vpop.f32.mrb[0].mxu0
    %v2462 = vadd.f32 0.0, %v2461
    %v2463 = vpop.f32.mrb[0].mxu0
    %2464 = vmatprep.mubr.f32.mxu0 0.0
    %2465 = vmatmul.mubr.f32.gmra.mrb[0].mxu0 %v2232
    %v2466 = vpop.f32.mrb[0].mxu0
    %v2467 = vadd.f32 0.0, %v2466
    %v2468 = vpop.f32.mrb[0].mxu0
    %2469 = vmatprep.mubr.f32.mxu0 0.0
    %2470 = vmatmul.mubr.f32.gmra.mrb[0].mxu0 %v2235
    %v2471 = vpop.f32.mrb[0].mxu0
    %v2472 = vadd.f32 0.0, %v2471
    %v2473 = vpop.f32.mrb[0].mxu0
    %2474 = vmatprep.mubr.f32.mxu0 0.0
    %2475 = vmatmul.mubr.f32.gmra.mrb[0].mxu0 %v2238
    %v2476 = vpop.f32.mrb[0].mxu0
    %v2477 = vadd.f32 0.0, %v2476
    %v2478 = vpop.f32.mrb[0].mxu0
    %2479 = vmatprep.mubr.f32.mxu0 0.0
    %2480 = vmatmul.mubr.f32.gmra.mrb[0].mxu0 %v2241
    %v2481 = vpop.f32.mrb[0].mxu0
    %v2482 = vadd.f32 0.0, %v2481
    %v2483 = vpop.f32.mrb[0].mxu0
    %2484 = vmatprep.mubr.f32.mxu0 0.0
    %2485 = vmatmul.mubr.f32.gmra.mrb[0].mxu0 %v2244
    %v2486 = vpop.f32.mrb[0].mxu0
    %v2487 = vadd.f32 0.0, %v2486
    %v2488 = vpop.f32.mrb[0].mxu0
    %2489 = vmatprep.mubr.f32.mxu0 0.0
    %2490 = vmatmul.mubr.f32.gmra.mrb[0].mxu0 %v2247
    %v2491 = vpop.f32.mrb[0].mxu0
    %v2492 = vadd.f32 0.0, %v2491
    %v2493 = vpop.f32.mrb[0].mxu0
    %2494 = vmatprep.mubr.f32.mxu0 0.0
    %2495 = vmatmul.mubr.f32.gmra.mrb[0].mxu0 %v2250
    %v2496 = vpop.f32.mrb[0].mxu0
    %v2497 = vadd.f32 0.0, %v2496
    %v2498 = vpop.f32.mrb[0].mxu0
    %2499 = vdwg.mxu0
    %v2500 = vadd.f32 %v2106, %v2322
    %v2501 = vadd.f32 %v2107, %v2327
    %v2502 = vadd.f32 %v2108, %v2332
    %v2503 = vadd.f32 %v2109, %v2337
    %v2504 = vadd.f32 %v2110, %v2342
    %v2505 = vadd.f32 %v2111, %v2347
    %v2506 = vadd.f32 %v2112, %v2352
    %v2507 = vadd.f32 %v2113, %v2357
    %v2508 = vadd.f32 %v2114, %v2362
    %v2509 = vadd.f32 %v2115, %v2367
    %v2510 = vadd.f32 %v2116, %v2372
    %v2511 = vadd.f32 %v2117, %v2377
    %v2512 = vadd.f32 %v2118, %v2382
    %v2513 = vadd.f32 %v2119, %v2387
    %v2514 = vadd.f32 %v2120, %v2392
    %v2515 = vadd.f32 %v2121, %v2397
    %v2516 = vadd.f32 %v2122, %v2402
    %v2517 = vadd.f32 %v2123, %v2407
    %v2518 = vadd.f32 %v2124, %v2412
    %v2519 = vadd.f32 %v2125, %v2417
    %v2520 = vadd.f32 %v2126, %v2422
    %v2521 = vadd.f32 %v2127, %v2427
    %v2522 = vadd.f32 %v2128, %v2432
    %v2523 = vadd.f32 %v2129, %v2437
    %v2524 = vadd.f32 %v2130, %v2442
    %v2525 = vadd.f32 %v2131, %v2447
    %v2526 = vadd.f32 %v2132, %v2452
    %v2527 = vadd.f32 %v2133, %v2457
    %v2528 = vadd.f32 %v2134, %v2462
    %v2529 = vadd.f32 %v2135, %v2467
    %v2530 = vadd.f32 %v2136, %v2472
    %v2531 = vadd.f32 %v2137, %v2477
    %v2532 = vadd.f32 %v2138, %v2482
    %v2533 = vadd.f32 %v2139, %v2487
    %v2534 = vadd.f32 %v2140, %v2492
    %v2535 = vadd.f32 %v2141, %v2497
    %2536 = vst.msk [vmem:[#allocation2] sm:$0xff] %vm24, %v2500
    %2537 = vst.msk [vmem:[#allocation2 + $0x8] sm:$0xff] %vm24, %v2501
    %2538 = vst.msk [vmem:[#allocation2 + $0x10] sm:$0xff] %vm24, %v2502
    %2539 = vst.msk [vmem:[#allocation2 + $0x18] sm:$0xff] %vm24, %v2503
    %2540 = vst.msk [vmem:[#allocation2 + $0x20] sm:$0xff] %vm24, %v2504
    %2541 = vst.msk [vmem:[#allocation2 + $0x28] sm:$0xff] %vm24, %v2505
    %2542 = vst.msk [vmem:[#allocation2 + $0x30] sm:$0xff] %vm24, %v2506
    %2543 = vst.msk [vmem:[#allocation2 + $0x38] sm:$0xff] %vm24, %v2507
    %2544 = vst.msk [vmem:[#allocation2 + $0x40] sm:$0xff] %vm24, %v2508
    %2545 = vst.msk [vmem:[#allocation2 + $0x48] sm:$0xff] %vm24, %v2509
    %2546 = vst.msk [vmem:[#allocation2 + $0x50] sm:$0xff] %vm24, %v2510
    %2547 = vst.msk [vmem:[#allocation2 + $0x58] sm:$0xff] %vm24, %v2511
    %2548 = vst.msk [vmem:[#allocation2 + $0x60] sm:$0xff] %vm24, %v2512
    %2549 = vst.msk [vmem:[#allocation2 + $0x68] sm:$0xff] %vm24, %v2513
    %2550 = vst.msk [vmem:[#allocation2 + $0x70] sm:$0xff] %vm24, %v2514
    %2551 = vst.msk [vmem:[#allocation2 + $0x78] sm:$0xff] %vm24, %v2515
    %2552 = vst.msk [vmem:[#allocation2 + $0x80] sm:$0xff] %vm24, %v2516
    %2553 = vst.msk [vmem:[#allocation2 + $0x88] sm:$0xff] %vm24, %v2517
    %2554 = vst.msk [vmem:[#allocation2 + $0x90] sm:$0xff] %vm24, %v2518
    %2555 = vst.msk [vmem:[#allocation2 + $0x98] sm:$0xff] %vm24, %v2519
    %2556 = vst.msk [vmem:[#allocation2 + $0xa0] sm:$0xff] %vm24, %v2520
    %2557 = vst.msk [vmem:[#allocation2 + $0xa8] sm:$0xff] %vm24, %v2521
    %2558 = vst.msk [vmem:[#allocation2 + $0xb0] sm:$0xff] %vm24, %v2522
    %2559 = vst.msk [vmem:[#allocation2 + $0xb8] sm:$0xff] %vm24, %v2523
    %2560 = vst.msk [vmem:[#allocation2 + $0xc0] sm:$0xff] %vm24, %v2524
    %2561 = vst.msk [vmem:[#allocation2 + $0xc8] sm:$0xff] %vm24, %v2525
    %2562 = vst.msk [vmem:[#allocation2 + $0xd0] sm:$0xff] %vm24, %v2526
    %2563 = vst.msk [vmem:[#allocation2 + $0xd8] sm:$0xff] %vm24, %v2527
    %2564 = vst.msk [vmem:[#allocation2 + $0xe0] sm:$0xff] %vm24, %v2528
    %2565 = vst.msk [vmem:[#allocation2 + $0xe8] sm:$0xff] %vm24, %v2529
    %2566 = vst.msk [vmem:[#allocation2 + $0xf0] sm:$0xff] %vm24, %v2530
    %2567 = vst.msk [vmem:[#allocation2 + $0xf8] sm:$0xff] %vm24, %v2531
    %2568 = vst.msk [vmem:[#allocation2 + $0x100] sm:$0xff] %vm24, %v2532
    %2569 = vst.msk [vmem:[#allocation2 + $0x108] sm:$0xff] %vm24, %v2533
    %2570 = vst.msk [vmem:[#allocation2 + $0x110] sm:$0xff] %vm24, %v2534
    %2571 = vst.msk [vmem:[#allocation2 + $0x118] sm:$0xff] %vm24, %v2535
    %v2572 = vld [vmem:[%s0 + $0x14] sm:$0xff]
    %v2573 = vld [vmem:[%s0 + $0x1c] sm:$0xff]
    %v2574 = vld [vmem:[%s0 + $0x24] sm:$0xff]
    %v2575 = vld [vmem:[%s0 + $0x2c] sm:$0xff]
    %v2576 = vld [vmem:[%s0 + $0x34] sm:$0xff]
    %v2577 = vld [vmem:[%s0 + $0x3c] sm:$0xff]
    %v2578 = vld [vmem:[%s0 + $0x44] sm:$0xff]
    %v2579 = vld [vmem:[%s0 + $0x4c] sm:$0xff]
    %v2580 = vld [vmem:[%s0 + $0x54] sm:$0xff]
    %v2581 = vld [vmem:[%s0 + $0x5c] sm:$0xff]
    %v2582 = vld [vmem:[%s0 + $0x64] sm:$0xff]
    %v2583 = vld [vmem:[%s0 + $0x6c] sm:$0xff]
    %v2584 = vld [vmem:[%s0 + $0x74] sm:$0xff]
    %v2585 = vld [vmem:[%s0 + $0x7c] sm:$0xff]
    %v2586 = vld [vmem:[%s0 + $0x84] sm:$0xff]
    %v2587 = vld [vmem:[%s0 + $0x8c] sm:$0xff]
    %v2588 = vld [vmem:[%s0 + $0x94] sm:$0xff]
    %v2589 = vld [vmem:[%s0 + $0x9c] sm:$0xff]
    %v2590 = vld [vmem:[%s0 + $0xa4] sm:$0xff]
    %v2591 = vld [vmem:[%s0 + $0xac] sm:$0xff]
    %v2592 = vld [vmem:[%s0 + $0xb4] sm:$0xff]
    %v2593 = vld [vmem:[%s0 + $0xbc] sm:$0xff]
    %v2594 = vld [vmem:[%s0 + $0xc4] sm:$0xff]
    %v2595 = vld [vmem:[%s0 + $0xcc] sm:$0xff]
    %v2596 = vld [vmem:[%s0 + $0xd4] sm:$0xff]
    %v2597 = vld [vmem:[%s0 + $0xdc] sm:$0xff]
    %v2598 = vld [vmem:[%s0 + $0xe4] sm:$0xff]
    %v2599 = vld [vmem:[%s0 + $0xec] sm:$0xff]
    %v2600 = vld [vmem:[%s0 + $0xf4] sm:$0xff]
    %v2601 = vld [vmem:[%s0 + $0xfc] sm:$0xff]
    %v2602 = vld [vmem:[%s0 + $0x104] sm:$0xff]
    %v2603 = vld [vmem:[%s0 + $0x10c] sm:$0xff]
    %v2604 = vld [vmem:[%s0 + $0x114] sm:$0xff]
    %v2605 = vld [vmem:[%s0 + $0x11c] sm:$0xff]
    %v2606 = vld [vmem:[%s0 + $0x124] sm:$0xff]
    %v2607 = vld [vmem:[%s0 + $0x12c] sm:$0xff]
    %v2608 = vld [vmem:[#allocation2] sm:$0xff]
    %v2609 = vld [vmem:[#allocation2 + $0x8] sm:$0xff]
    %v2610 = vld [vmem:[#allocation2 + $0x10] sm:$0xff]
    %v2611 = vld [vmem:[#allocation2 + $0x18] sm:$0xff]
    %v2612 = vld [vmem:[#allocation2 + $0x20] sm:$0xff]
    %v2613 = vld [vmem:[#allocation2 + $0x28] sm:$0xff]
    %v2614 = vld [vmem:[#allocation2 + $0x30] sm:$0xff]
    %v2615 = vld [vmem:[#allocation2 + $0x38] sm:$0xff]
    %v2616 = vld [vmem:[#allocation2 + $0x40] sm:$0xff]
    %v2617 = vld [vmem:[#allocation2 + $0x48] sm:$0xff]
    %v2618 = vld [vmem:[#allocation2 + $0x50] sm:$0xff]
    %v2619 = vld [vmem:[#allocation2 + $0x58] sm:$0xff]
    %v2620 = vld [vmem:[#allocation2 + $0x60] sm:$0xff]
    %v2621 = vld [vmem:[#allocation2 + $0x68] sm:$0xff]
    %v2622 = vld [vmem:[#allocation2 + $0x70] sm:$0xff]
    %v2623 = vld [vmem:[#allocation2 + $0x78] sm:$0xff]
    %v2624 = vld [vmem:[#allocation2 + $0x80] sm:$0xff]
    %v2625 = vld [vmem:[#allocation2 + $0x88] sm:$0xff]
    %v2626 = vld [vmem:[#allocation2 + $0x90] sm:$0xff]
    %v2627 = vld [vmem:[#allocation2 + $0x98] sm:$0xff]
    %v2628 = vld [vmem:[#allocation2 + $0xa0] sm:$0xff]
    %v2629 = vld [vmem:[#allocation2 + $0xa8] sm:$0xff]
    %v2630 = vld [vmem:[#allocation2 + $0xb0] sm:$0xff]
    %v2631 = vld [vmem:[#allocation2 + $0xb8] sm:$0xff]
    %v2632 = vld [vmem:[#allocation2 + $0xc0] sm:$0xff]
    %v2633 = vld [vmem:[#allocation2 + $0xc8] sm:$0xff]
    %v2634 = vld [vmem:[#allocation2 + $0xd0] sm:$0xff]
    %v2635 = vld [vmem:[#allocation2 + $0xd8] sm:$0xff]
    %v2636 = vld [vmem:[#allocation2 + $0xe0] sm:$0xff]
    %v2637 = vld [vmem:[#allocation2 + $0xe8] sm:$0xff]
    %v2638 = vld [vmem:[#allocation2 + $0xf0] sm:$0xff]
    %v2639 = vld [vmem:[#allocation2 + $0xf8] sm:$0xff]
    %v2640 = vld [vmem:[#allocation2 + $0x100] sm:$0xff]
    %v2641 = vld [vmem:[#allocation2 + $0x108] sm:$0xff]
    %v2642 = vld [vmem:[#allocation2 + $0x110] sm:$0xff]
    %v2643 = vld [vmem:[#allocation2 + $0x118] sm:$0xff]
    %s2644 = scalar_lea.vmem %s1, 20
    %v2645 = vld [vmem:[%s2644] sm:$0xf]
    %v2647 = vsel %vm134, %v2572, 0
    %v2650 = vsel %vm134, %v2573, 0
    %v2653 = vsel %vm134, %v2574, 0
    %v2656 = vsel %vm134, %v2575, 0
    %v2659 = vsel %vm134, %v2576, 0
    %v2662 = vsel %vm134, %v2577, 0
    %v2665 = vsel %vm134, %v2578, 0
    %v2668 = vsel %vm134, %v2579, 0
    %v2671 = vsel %vm134, %v2580, 0
    %v2674 = vsel %vm134, %v2581, 0
    %v2677 = vsel %vm134, %v2582, 0
    %v2680 = vsel %vm134, %v2583, 0
    %v2683 = vsel %vm134, %v2584, 0
    %v2686 = vsel %vm134, %v2585, 0
    %v2689 = vsel %vm134, %v2586, 0
    %v2692 = vsel %vm134, %v2587, 0
    %v2695 = vsel %vm134, %v2588, 0
    %v2698 = vsel %vm134, %v2589, 0
    %v2701 = vsel %vm134, %v2590, 0
    %v2704 = vsel %vm134, %v2591, 0
    %v2707 = vsel %vm134, %v2592, 0
    %v2710 = vsel %vm134, %v2593, 0
    %v2713 = vsel %vm134, %v2594, 0
    %v2716 = vsel %vm134, %v2595, 0
    %v2719 = vsel %vm134, %v2596, 0
    %v2722 = vsel %vm134, %v2597, 0
    %v2725 = vsel %vm134, %v2598, 0
    %v2728 = vsel %vm134, %v2599, 0
    %v2731 = vsel %vm134, %v2600, 0
    %v2734 = vsel %vm134, %v2601, 0
    %v2737 = vsel %vm134, %v2602, 0
    %v2740 = vsel %vm134, %v2603, 0
    %v2743 = vsel %vm134, %v2604, 0
    %v2746 = vsel %vm134, %v2605, 0
    %v2749 = vsel %vm134, %v2606, 0
    %v2752 = vsel %vm134, %v2607, 0
    %v2755 = vsel %vm243, %v2645, 0
    %2757 = vmatprep.subr.mxu0 0.0
    %2758 = vmatpush1.msra.mxu0 %v2755
    %2759 = vmatprep.subr.mxu0 0.0
    %2760 = vmatpush1.msra.mxu0 0.0
    %2761 = vmatprep.subr.mxu0 0.0
    %2762 = vmatpush1.msra.mxu0 0.0
    %2763 = vmatprep.subr.mxu0 0.0
    %2764 = vmatpush1.msra.mxu0 0.0
    %2765 = vmatprep.subr.mxu0 0.0
    %2766 = vmatpush1.msra.mxu0 0.0
    %2767 = vmatprep.subr.mxu0 0.0
    %2768 = vmatpush1.msra.mxu0 0.0
    %2769 = vmatprep.subr.mxu0 0.0
    %2770 = vmatpush1.msra.mxu0 0.0
    %2771 = vmatprep.subr.mxu0 0.0
    %2772 = vmatpush1.msra.mxu0 0.0
    %2773 = vmatprep.subr.mxu0 0.0
    %2774 = vmatpush1.msra.mxu0 0.0
    %2775 = vmatprep.subr.mxu0 0.0
    %2776 = vmatpush1.msra.mxu0 0.0
    %2777 = vmatprep.subr.mxu0 0.0
    %2778 = vmatpush1.msra.mxu0 0.0
    %2779 = vmatprep.subr.mxu0 0.0
    %2780 = vmatpush1.msra.mxu0 0.0
    %2781 = vmatprep.subr.mxu0 0.0
    %2782 = vmatpush1.msra.mxu0 0.0
    %2783 = vmatprep.subr.mxu0 0.0
    %2784 = vmatpush1.msra.mxu0 0.0
    %2785 = vmatprep.subr.mxu0 0.0
    %2786 = vmatpush1.msra.mxu0 0.0
    %2787 = vmatprep.subr.mxu0 0.0
    %2788 = vmatpush1.msra.mxu0 0.0
    %2789 = vmatprep.subr.mxu0 0.0
    %2790 = vmatpush1.msra.mxu0 0.0
    %2791 = vmatprep.subr.mxu0 0.0
    %2792 = vmatpush1.msra.mxu0 0.0
    %2793 = vmatprep.subr.mxu0 0.0
    %2794 = vmatpush1.msra.mxu0 0.0
    %2795 = vmatprep.subr.mxu0 0.0
    %2796 = vmatpush1.msra.mxu0 0.0
    %2797 = vmatprep.subr.mxu0 0.0
    %2798 = vmatpush1.msra.mxu0 0.0
    %2799 = vmatprep.subr.mxu0 0.0
    %2800 = vmatpush1.msra.mxu0 0.0
    %2801 = vmatprep.subr.mxu0 0.0
    %2802 = vmatpush1.msra.mxu0 0.0
    %2803 = vmatprep.subr.mxu0 0.0
    %2804 = vmatpush1.msra.mxu0 0.0
    %2805 = vmatprep.subr.mxu0 0.0
    %2806 = vmatpush1.msra.mxu0 0.0
    %2807 = vmatprep.subr.mxu0 0.0
    %2808 = vmatpush1.msra.mxu0 0.0
    %2809 = vmatprep.subr.mxu0 0.0
    %2810 = vmatpush1.msra.mxu0 0.0
    %2811 = vmatprep.subr.mxu0 0.0
    %2812 = vmatpush1.msra.mxu0 0.0
    %2813 = vmatprep.subr.mxu0 0.0
    %2814 = vmatpush1.msra.mxu0 0.0
    %2815 = vmatprep.subr.mxu0 0.0
    %2816 = vmatpush1.msra.mxu0 0.0
    %2817 = vmatprep.subr.mxu0 0.0
    %2818 = vmatpush1.msra.mxu0 0.0
    %2819 = vmatprep.subr.mxu0 0.0
    %2820 = vmatpush1.msra.mxu0 0.0
    %2821 = vmatprep.mubr.f32.mxu0 0.0
    %2822 = vmatmul.mubr.f32.gmra.mrb[0].mxu0 %v2647
    %v2823 = vpop.f32.mrb[0].mxu0
    %v2824 = vadd.f32 0.0, %v2823
    %v2825 = vpop.f32.mrb[0].mxu0
    %2826 = vmatprep.mubr.f32.mxu0 0.0
    %2827 = vmatmul.mubr.f32.gmra.mrb[0].mxu0 %v2650
    %v2828 = vpop.f32.mrb[0].mxu0
    %v2829 = vadd.f32 0.0, %v2828
    %v2830 = vpop.f32.mrb[0].mxu0
    %2831 = vmatprep.mubr.f32.mxu0 0.0
    %2832 = vmatmul.mubr.f32.gmra.mrb[0].mxu0 %v2653
    %v2833 = vpop.f32.mrb[0].mxu0
    %v2834 = vadd.f32 0.0, %v2833
    %v2835 = vpop.f32.mrb[0].mxu0
    %2836 = vmatprep.mubr.f32.mxu0 0.0
    %2837 = vmatmul.mubr.f32.gmra.mrb[0].mxu0 %v2656
    %v2838 = vpop.f32.mrb[0].mxu0
    %v2839 = vadd.f32 0.0, %v2838
    %v2840 = vpop.f32.mrb[0].mxu0
    %2841 = vmatprep.mubr.f32.mxu0 0.0
    %2842 = vmatmul.mubr.f32.gmra.mrb[0].mxu0 %v2659
    %v2843 = vpop.f32.mrb[0].mxu0
    %v2844 = vadd.f32 0.0, %v2843
    %v2845 = vpop.f32.mrb[0].mxu0
    %2846 = vmatprep.mubr.f32.mxu0 0.0
    %2847 = vmatmul.mubr.f32.gmra.mrb[0].mxu0 %v2662
    %v2848 = vpop.f32.mrb[0].mxu0
    %v2849 = vadd.f32 0.0, %v2848
    %v2850 = vpop.f32.mrb[0].mxu0
    %2851 = vmatprep.mubr.f32.mxu0 0.0
    %2852 = vmatmul.mubr.f32.gmra.mrb[0].mxu0 %v2665
    %v2853 = vpop.f32.mrb[0].mxu0
    %v2854 = vadd.f32 0.0, %v2853
    %v2855 = vpop.f32.mrb[0].mxu0
    %2856 = vmatprep.mubr.f32.mxu0 0.0
    %2857 = vmatmul.mubr.f32.gmra.mrb[0].mxu0 %v2668
    %v2858 = vpop.f32.mrb[0].mxu0
    %v2859 = vadd.f32 0.0, %v2858
    %v2860 = vpop.f32.mrb[0].mxu0
    %2861 = vmatprep.mubr.f32.mxu0 0.0
    %2862 = vmatmul.mubr.f32.gmra.mrb[0].mxu0 %v2671
    %v2863 = vpop.f32.mrb[0].mxu0
    %v2864 = vadd.f32 0.0, %v2863
    %v2865 = vpop.f32.mrb[0].mxu0
    %2866 = vmatprep.mubr.f32.mxu0 0.0
    %2867 = vmatmul.mubr.f32.gmra.mrb[0].mxu0 %v2674
    %v2868 = vpop.f32.mrb[0].mxu0
    %v2869 = vadd.f32 0.0, %v2868
    %v2870 = vpop.f32.mrb[0].mxu0
    %2871 = vmatprep.mubr.f32.mxu0 0.0
    %2872 = vmatmul.mubr.f32.gmra.mrb[0].mxu0 %v2677
    %v2873 = vpop.f32.mrb[0].mxu0
    %v2874 = vadd.f32 0.0, %v2873
    %v2875 = vpop.f32.mrb[0].mxu0
    %2876 = vmatprep.mubr.f32.mxu0 0.0
    %2877 = vmatmul.mubr.f32.gmra.mrb[0].mxu0 %v2680
    %v2878 = vpop.f32.mrb[0].mxu0
    %v2879 = vadd.f32 0.0, %v2878
    %v2880 = vpop.f32.mrb[0].mxu0
    %2881 = vmatprep.mubr.f32.mxu0 0.0
    %2882 = vmatmul.mubr.f32.gmra.mrb[0].mxu0 %v2683
    %v2883 = vpop.f32.mrb[0].mxu0
    %v2884 = vadd.f32 0.0, %v2883
    %v2885 = vpop.f32.mrb[0].mxu0
    %2886 = vmatprep.mubr.f32.mxu0 0.0
    %2887 = vmatmul.mubr.f32.gmra.mrb[0].mxu0 %v2686
    %v2888 = vpop.f32.mrb[0].mxu0
    %v2889 = vadd.f32 0.0, %v2888
    %v2890 = vpop.f32.mrb[0].mxu0
    %2891 = vmatprep.mubr.f32.mxu0 0.0
    %2892 = vmatmul.mubr.f32.gmra.mrb[0].mxu0 %v2689
    %v2893 = vpop.f32.mrb[0].mxu0
    %v2894 = vadd.f32 0.0, %v2893
    %v2895 = vpop.f32.mrb[0].mxu0
    %2896 = vmatprep.mubr.f32.mxu0 0.0
    %2897 = vmatmul.mubr.f32.gmra.mrb[0].mxu0 %v2692
    %v2898 = vpop.f32.mrb[0].mxu0
    %v2899 = vadd.f32 0.0, %v2898
    %v2900 = vpop.f32.mrb[0].mxu0
    %2901 = vmatprep.mubr.f32.mxu0 0.0
    %2902 = vmatmul.mubr.f32.gmra.mrb[0].mxu0 %v2695
    %v2903 = vpop.f32.mrb[0].mxu0
    %v2904 = vadd.f32 0.0, %v2903
    %v2905 = vpop.f32.mrb[0].mxu0
    %2906 = vmatprep.mubr.f32.mxu0 0.0
    %2907 = vmatmul.mubr.f32.gmra.mrb[0].mxu0 %v2698
    %v2908 = vpop.f32.mrb[0].mxu0
    %v2909 = vadd.f32 0.0, %v2908
    %v2910 = vpop.f32.mrb[0].mxu0
    %2911 = vmatprep.mubr.f32.mxu0 0.0
    %2912 = vmatmul.mubr.f32.gmra.mrb[0].mxu0 %v2701
    %v2913 = vpop.f32.mrb[0].mxu0
    %v2914 = vadd.f32 0.0, %v2913
    %v2915 = vpop.f32.mrb[0].mxu0
    %2916 = vmatprep.mubr.f32.mxu0 0.0
    %2917 = vmatmul.mubr.f32.gmra.mrb[0].mxu0 %v2704
    %v2918 = vpop.f32.mrb[0].mxu0
    %v2919 = vadd.f32 0.0, %v2918
    %v2920 = vpop.f32.mrb[0].mxu0
    %2921 = vmatprep.mubr.f32.mxu0 0.0
    %2922 = vmatmul.mubr.f32.gmra.mrb[0].mxu0 %v2707
    %v2923 = vpop.f32.mrb[0].mxu0
    %v2924 = vadd.f32 0.0, %v2923
    %v2925 = vpop.f32.mrb[0].mxu0
    %2926 = vmatprep.mubr.f32.mxu0 0.0
    %2927 = vmatmul.mubr.f32.gmra.mrb[0].mxu0 %v2710
    %v2928 = vpop.f32.mrb[0].mxu0
    %v2929 = vadd.f32 0.0, %v2928
    %v2930 = vpop.f32.mrb[0].mxu0
    %2931 = vmatprep.mubr.f32.mxu0 0.0
    %2932 = vmatmul.mubr.f32.gmra.mrb[0].mxu0 %v2713
    %v2933 = vpop.f32.mrb[0].mxu0
    %v2934 = vadd.f32 0.0, %v2933
    %v2935 = vpop.f32.mrb[0].mxu0
    %2936 = vmatprep.mubr.f32.mxu0 0.0
    %2937 = vmatmul.mubr.f32.gmra.mrb[0].mxu0 %v2716
    %v2938 = vpop.f32.mrb[0].mxu0
    %v2939 = vadd.f32 0.0, %v2938
    %v2940 = vpop.f32.mrb[0].mxu0
    %2941 = vmatprep.mubr.f32.mxu0 0.0
    %2942 = vmatmul.mubr.f32.gmra.mrb[0].mxu0 %v2719
    %v2943 = vpop.f32.mrb[0].mxu0
    %v2944 = vadd.f32 0.0, %v2943
    %v2945 = vpop.f32.mrb[0].mxu0
    %2946 = vmatprep.mubr.f32.mxu0 0.0
    %2947 = vmatmul.mubr.f32.gmra.mrb[0].mxu0 %v2722
    %v2948 = vpop.f32.mrb[0].mxu0
    %v2949 = vadd.f32 0.0, %v2948
    %v2950 = vpop.f32.mrb[0].mxu0
    %2951 = vmatprep.mubr.f32.mxu0 0.0
    %2952 = vmatmul.mubr.f32.gmra.mrb[0].mxu0 %v2725
    %v2953 = vpop.f32.mrb[0].mxu0
    %v2954 = vadd.f32 0.0, %v2953
    %v2955 = vpop.f32.mrb[0].mxu0
    %2956 = vmatprep.mubr.f32.mxu0 0.0
    %2957 = vmatmul.mubr.f32.gmra.mrb[0].mxu0 %v2728
    %v2958 = vpop.f32.mrb[0].mxu0
    %v2959 = vadd.f32 0.0, %v2958
    %v2960 = vpop.f32.mrb[0].mxu0
    %2961 = vmatprep.mubr.f32.mxu0 0.0
    %2962 = vmatmul.mubr.f32.gmra.mrb[0].mxu0 %v2731
    %v2963 = vpop.f32.mrb[0].mxu0
    %v2964 = vadd.f32 0.0, %v2963
    %v2965 = vpop.f32.mrb[0].mxu0
    %2966 = vmatprep.mubr.f32.mxu0 0.0
    %2967 = vmatmul.mubr.f32.gmra.mrb[0].mxu0 %v2734
    %v2968 = vpop.f32.mrb[0].mxu0
    %v2969 = vadd.f32 0.0, %v2968
    %v2970 = vpop.f32.mrb[0].mxu0
    %2971 = vmatprep.mubr.f32.mxu0 0.0
    %2972 = vmatmul.mubr.f32.gmra.mrb[0].mxu0 %v2737
    %v2973 = vpop.f32.mrb[0].mxu0
    %v2974 = vadd.f32 0.0, %v2973
    %v2975 = vpop.f32.mrb[0].mxu0
    %2976 = vmatprep.mubr.f32.mxu0 0.0
    %2977 = vmatmul.mubr.f32.gmra.mrb[0].mxu0 %v2740
    %v2978 = vpop.f32.mrb[0].mxu0
    %v2979 = vadd.f32 0.0, %v2978
    %v2980 = vpop.f32.mrb[0].mxu0
    %2981 = vmatprep.mubr.f32.mxu0 0.0
    %2982 = vmatmul.mubr.f32.gmra.mrb[0].mxu0 %v2743
    %v2983 = vpop.f32.mrb[0].mxu0
    %v2984 = vadd.f32 0.0, %v2983
    %v2985 = vpop.f32.mrb[0].mxu0
    %2986 = vmatprep.mubr.f32.mxu0 0.0
    %2987 = vmatmul.mubr.f32.gmra.mrb[0].mxu0 %v2746
    %v2988 = vpop.f32.mrb[0].mxu0
    %v2989 = vadd.f32 0.0, %v2988
    %v2990 = vpop.f32.mrb[0].mxu0
    %2991 = vmatprep.mubr.f32.mxu0 0.0
    %2992 = vmatmul.mubr.f32.gmra.mrb[0].mxu0 %v2749
    %v2993 = vpop.f32.mrb[0].mxu0
    %v2994 = vadd.f32 0.0, %v2993
    %v2995 = vpop.f32.mrb[0].mxu0
    %2996 = vmatprep.mubr.f32.mxu0 0.0
    %2997 = vmatmul.mubr.f32.gmra.mrb[0].mxu0 %v2752
    %v2998 = vpop.f32.mrb[0].mxu0
    %v2999 = vadd.f32 0.0, %v2998
    %v3000 = vpop.f32.mrb[0].mxu0
    %3001 = vdwg.mxu0
    %v3002 = vadd.f32 %v2608, %v2824
    %v3003 = vadd.f32 %v2609, %v2829
    %v3004 = vadd.f32 %v2610, %v2834
    %v3005 = vadd.f32 %v2611, %v2839
    %v3006 = vadd.f32 %v2612, %v2844
    %v3007 = vadd.f32 %v2613, %v2849
    %v3008 = vadd.f32 %v2614, %v2854
    %v3009 = vadd.f32 %v2615, %v2859
    %v3010 = vadd.f32 %v2616, %v2864
    %v3011 = vadd.f32 %v2617, %v2869
    %v3012 = vadd.f32 %v2618, %v2874
    %v3013 = vadd.f32 %v2619, %v2879
    %v3014 = vadd.f32 %v2620, %v2884
    %v3015 = vadd.f32 %v2621, %v2889
    %v3016 = vadd.f32 %v2622, %v2894
    %v3017 = vadd.f32 %v2623, %v2899
    %v3018 = vadd.f32 %v2624, %v2904
    %v3019 = vadd.f32 %v2625, %v2909
    %v3020 = vadd.f32 %v2626, %v2914
    %v3021 = vadd.f32 %v2627, %v2919
    %v3022 = vadd.f32 %v2628, %v2924
    %v3023 = vadd.f32 %v2629, %v2929
    %v3024 = vadd.f32 %v2630, %v2934
    %v3025 = vadd.f32 %v2631, %v2939
    %v3026 = vadd.f32 %v2632, %v2944
    %v3027 = vadd.f32 %v2633, %v2949
    %v3028 = vadd.f32 %v2634, %v2954
    %v3029 = vadd.f32 %v2635, %v2959
    %v3030 = vadd.f32 %v2636, %v2964
    %v3031 = vadd.f32 %v2637, %v2969
    %v3032 = vadd.f32 %v2638, %v2974
    %v3033 = vadd.f32 %v2639, %v2979
    %v3034 = vadd.f32 %v2640, %v2984
    %v3035 = vadd.f32 %v2641, %v2989
    %v3036 = vadd.f32 %v2642, %v2994
    %v3037 = vadd.f32 %v2643, %v2999
    %3038 = vst.msk [vmem:[#allocation2] sm:$0xff] %vm24, %v3002
    %3039 = vst.msk [vmem:[#allocation2 + $0x8] sm:$0xff] %vm24, %v3003
    %3040 = vst.msk [vmem:[#allocation2 + $0x10] sm:$0xff] %vm24, %v3004
    %3041 = vst.msk [vmem:[#allocation2 + $0x18] sm:$0xff] %vm24, %v3005
    %3042 = vst.msk [vmem:[#allocation2 + $0x20] sm:$0xff] %vm24, %v3006
    %3043 = vst.msk [vmem:[#allocation2 + $0x28] sm:$0xff] %vm24, %v3007
    %3044 = vst.msk [vmem:[#allocation2 + $0x30] sm:$0xff] %vm24, %v3008
    %3045 = vst.msk [vmem:[#allocation2 + $0x38] sm:$0xff] %vm24, %v3009
    %3046 = vst.msk [vmem:[#allocation2 + $0x40] sm:$0xff] %vm24, %v3010
    %3047 = vst.msk [vmem:[#allocation2 + $0x48] sm:$0xff] %vm24, %v3011
    %3048 = vst.msk [vmem:[#allocation2 + $0x50] sm:$0xff] %vm24, %v3012
    %3049 = vst.msk [vmem:[#allocation2 + $0x58] sm:$0xff] %vm24, %v3013
    %3050 = vst.msk [vmem:[#allocation2 + $0x60] sm:$0xff] %vm24, %v3014
    %3051 = vst.msk [vmem:[#allocation2 + $0x68] sm:$0xff] %vm24, %v3015
    %3052 = vst.msk [vmem:[#allocation2 + $0x70] sm:$0xff] %vm24, %v3016
    %3053 = vst.msk [vmem:[#allocation2 + $0x78] sm:$0xff] %vm24, %v3017
    %3054 = vst.msk [vmem:[#allocation2 + $0x80] sm:$0xff] %vm24, %v3018
    %3055 = vst.msk [vmem:[#allocation2 + $0x88] sm:$0xff] %vm24, %v3019
    %3056 = vst.msk [vmem:[#allocation2 + $0x90] sm:$0xff] %vm24, %v3020
    %3057 = vst.msk [vmem:[#allocation2 + $0x98] sm:$0xff] %vm24, %v3021
    %3058 = vst.msk [vmem:[#allocation2 + $0xa0] sm:$0xff] %vm24, %v3022
    %3059 = vst.msk [vmem:[#allocation2 + $0xa8] sm:$0xff] %vm24, %v3023
    %3060 = vst.msk [vmem:[#allocation2 + $0xb0] sm:$0xff] %vm24, %v3024
    %3061 = vst.msk [vmem:[#allocation2 + $0xb8] sm:$0xff] %vm24, %v3025
    %3062 = vst.msk [vmem:[#allocation2 + $0xc0] sm:$0xff] %vm24, %v3026
    %3063 = vst.msk [vmem:[#allocation2 + $0xc8] sm:$0xff] %vm24, %v3027
    %3064 = vst.msk [vmem:[#allocation2 + $0xd0] sm:$0xff] %vm24, %v3028
    %3065 = vst.msk [vmem:[#allocation2 + $0xd8] sm:$0xff] %vm24, %v3029
    %3066 = vst.msk [vmem:[#allocation2 + $0xe0] sm:$0xff] %vm24, %v3030
    %3067 = vst.msk [vmem:[#allocation2 + $0xe8] sm:$0xff] %vm24, %v3031
    %3068 = vst.msk [vmem:[#allocation2 + $0xf0] sm:$0xff] %vm24, %v3032
    %3069 = vst.msk [vmem:[#allocation2 + $0xf8] sm:$0xff] %vm24, %v3033
    %3070 = vst.msk [vmem:[#allocation2 + $0x100] sm:$0xff] %vm24, %v3034
    %3071 = vst.msk [vmem:[#allocation2 + $0x108] sm:$0xff] %vm24, %v3035
    %3072 = vst.msk [vmem:[#allocation2 + $0x110] sm:$0xff] %vm24, %v3036
    %3073 = vst.msk [vmem:[#allocation2 + $0x118] sm:$0xff] %vm24, %v3037
    %v3074 = vld [vmem:[%s0 + $0x24] sm:$0xff]
    %v3075 = vld [vmem:[%s0 + $0x2c] sm:$0xff]
    %v3076 = vld [vmem:[%s0 + $0x34] sm:$0xff]
    %v3077 = vld [vmem:[%s0 + $0x3c] sm:$0xff]
    %v3078 = vld [vmem:[%s0 + $0x44] sm:$0xff]
    %v3079 = vld [vmem:[%s0 + $0x4c] sm:$0xff]
    %v3080 = vld [vmem:[%s0 + $0x54] sm:$0xff]
    %v3081 = vld [vmem:[%s0 + $0x5c] sm:$0xff]
    %v3082 = vld [vmem:[%s0 + $0x64] sm:$0xff]
    %v3083 = vld [vmem:[%s0 + $0x6c] sm:$0xff]
    %v3084 = vld [vmem:[%s0 + $0x74] sm:$0xff]
    %v3085 = vld [vmem:[%s0 + $0x7c] sm:$0xff]
    %v3086 = vld [vmem:[%s0 + $0x84] sm:$0xff]
    %v3087 = vld [vmem:[%s0 + $0x8c] sm:$0xff]
    %v3088 = vld [vmem:[%s0 + $0x94] sm:$0xff]
    %v3089 = vld [vmem:[%s0 + $0x9c] sm:$0xff]
    %v3090 = vld [vmem:[%s0 + $0xa4] sm:$0xff]
    %v3091 = vld [vmem:[%s0 + $0xac] sm:$0xff]
    %v3092 = vld [vmem:[%s0 + $0xb4] sm:$0xff]
    %v3093 = vld [vmem:[%s0 + $0xbc] sm:$0xff]
    %v3094 = vld [vmem:[%s0 + $0xc4] sm:$0xff]
    %v3095 = vld [vmem:[%s0 + $0xcc] sm:$0xff]
    %v3096 = vld [vmem:[%s0 + $0xd4] sm:$0xff]
    %v3097 = vld [vmem:[%s0 + $0xdc] sm:$0xff]
    %v3098 = vld [vmem:[%s0 + $0xe4] sm:$0xff]
    %v3099 = vld [vmem:[%s0 + $0xec] sm:$0xff]
    %v3100 = vld [vmem:[%s0 + $0xf4] sm:$0xff]
    %v3101 = vld [vmem:[%s0 + $0xfc] sm:$0xff]
    %v3102 = vld [vmem:[%s0 + $0x104] sm:$0xff]
    %v3103 = vld [vmem:[%s0 + $0x10c] sm:$0xff]
    %v3104 = vld [vmem:[%s0 + $0x114] sm:$0xff]
    %v3105 = vld [vmem:[%s0 + $0x11c] sm:$0xff]
    %v3106 = vld [vmem:[%s0 + $0x124] sm:$0xff]
    %v3107 = vld [vmem:[%s0 + $0x12c] sm:$0xff]
    %v3108 = vld [vmem:[%s0 + $0x134] sm:$0xff]
    %v3109 = vld [vmem:[%s0 + $0x13c] sm:$0xff]
    %v3110 = vld [vmem:[#allocation2] sm:$0xff]
    %v3111 = vld [vmem:[#allocation2 + $0x8] sm:$0xff]
    %v3112 = vld [vmem:[#allocation2 + $0x10] sm:$0xff]
    %v3113 = vld [vmem:[#allocation2 + $0x18] sm:$0xff]
    %v3114 = vld [vmem:[#allocation2 + $0x20] sm:$0xff]
    %v3115 = vld [vmem:[#allocation2 + $0x28] sm:$0xff]
    %v3116 = vld [vmem:[#allocation2 + $0x30] sm:$0xff]
    %v3117 = vld [vmem:[#allocation2 + $0x38] sm:$0xff]
    %v3118 = vld [vmem:[#allocation2 + $0x40] sm:$0xff]
    %v3119 = vld [vmem:[#allocation2 + $0x48] sm:$0xff]
    %v3120 = vld [vmem:[#allocation2 + $0x50] sm:$0xff]
    %v3121 = vld [vmem:[#allocation2 + $0x58] sm:$0xff]
    %v3122 = vld [vmem:[#allocation2 + $0x60] sm:$0xff]
    %v3123 = vld [vmem:[#allocation2 + $0x68] sm:$0xff]
    %v3124 = vld [vmem:[#allocation2 + $0x70] sm:$0xff]
    %v3125 = vld [vmem:[#allocation2 + $0x78] sm:$0xff]
    %v3126 = vld [vmem:[#allocation2 + $0x80] sm:$0xff]
    %v3127 = vld [vmem:[#allocation2 + $0x88] sm:$0xff]
    %v3128 = vld [vmem:[#allocation2 + $0x90] sm:$0xff]
    %v3129 = vld [vmem:[#allocation2 + $0x98] sm:$0xff]
    %v3130 = vld [vmem:[#allocation2 + $0xa0] sm:$0xff]
    %v3131 = vld [vmem:[#allocation2 + $0xa8] sm:$0xff]
    %v3132 = vld [vmem:[#allocation2 + $0xb0] sm:$0xff]
    %v3133 = vld [vmem:[#allocation2 + $0xb8] sm:$0xff]
    %v3134 = vld [vmem:[#allocation2 + $0xc0] sm:$0xff]
    %v3135 = vld [vmem:[#allocation2 + $0xc8] sm:$0xff]
    %v3136 = vld [vmem:[#allocation2 + $0xd0] sm:$0xff]
    %v3137 = vld [vmem:[#allocation2 + $0xd8] sm:$0xff]
    %v3138 = vld [vmem:[#allocation2 + $0xe0] sm:$0xff]
    %v3139 = vld [vmem:[#allocation2 + $0xe8] sm:$0xff]
    %v3140 = vld [vmem:[#allocation2 + $0xf0] sm:$0xff]
    %v3141 = vld [vmem:[#allocation2 + $0xf8] sm:$0xff]
    %v3142 = vld [vmem:[#allocation2 + $0x100] sm:$0xff]
    %v3143 = vld [vmem:[#allocation2 + $0x108] sm:$0xff]
    %v3144 = vld [vmem:[#allocation2 + $0x110] sm:$0xff]
    %v3145 = vld [vmem:[#allocation2 + $0x118] sm:$0xff]
    %s3146 = scalar_lea.vmem %s1, 24
    %v3147 = vld [vmem:[%s3146] sm:$0xf]
    %v3149 = vsel %vm134, %v3074, 0
    %v3152 = vsel %vm134, %v3075, 0
    %v3155 = vsel %vm134, %v3076, 0
    %v3158 = vsel %vm134, %v3077, 0
    %v3161 = vsel %vm134, %v3078, 0
    %v3164 = vsel %vm134, %v3079, 0
    %v3167 = vsel %vm134, %v3080, 0
    %v3170 = vsel %vm134, %v3081, 0
    %v3173 = vsel %vm134, %v3082, 0
    %v3176 = vsel %vm134, %v3083, 0
    %v3179 = vsel %vm134, %v3084, 0
    %v3182 = vsel %vm134, %v3085, 0
    %v3185 = vsel %vm134, %v3086, 0
    %v3188 = vsel %vm134, %v3087, 0
    %v3191 = vsel %vm134, %v3088, 0
    %v3194 = vsel %vm134, %v3089, 0
    %v3197 = vsel %vm134, %v3090, 0
    %v3200 = vsel %vm134, %v3091, 0
    %v3203 = vsel %vm134, %v3092, 0
    %v3206 = vsel %vm134, %v3093, 0
    %v3209 = vsel %vm134, %v3094, 0
    %v3212 = vsel %vm134, %v3095, 0
    %v3215 = vsel %vm134, %v3096, 0
    %v3218 = vsel %vm134, %v3097, 0
    %v3221 = vsel %vm134, %v3098, 0
    %v3224 = vsel %vm134, %v3099, 0
    %v3227 = vsel %vm134, %v3100, 0
    %v3230 = vsel %vm134, %v3101, 0
    %v3233 = vsel %vm134, %v3102, 0
    %v3236 = vsel %vm134, %v3103, 0
    %v3239 = vsel %vm134, %v3104, 0
    %v3242 = vsel %vm134, %v3105, 0
    %v3245 = vsel %vm134, %v3106, 0
    %v3248 = vsel %vm134, %v3107, 0
    %v3251 = vsel %vm134, %v3108, 0
    %v3254 = vsel %vm134, %v3109, 0
    %v3257 = vsel %vm243, %v3147, 0
    %3259 = vmatprep.subr.mxu0 0.0
    %3260 = vmatpush1.msra.mxu0 %v3257
    %3261 = vmatprep.subr.mxu0 0.0
    %3262 = vmatpush1.msra.mxu0 0.0
    %3263 = vmatprep.subr.mxu0 0.0
    %3264 = vmatpush1.msra.mxu0 0.0
    %3265 = vmatprep.subr.mxu0 0.0
    %3266 = vmatpush1.msra.mxu0 0.0
    %3267 = vmatprep.subr.mxu0 0.0
    %3268 = vmatpush1.msra.mxu0 0.0
    %3269 = vmatprep.subr.mxu0 0.0
    %3270 = vmatpush1.msra.mxu0 0.0
    %3271 = vmatprep.subr.mxu0 0.0
    %3272 = vmatpush1.msra.mxu0 0.0
    %3273 = vmatprep.subr.mxu0 0.0
    %3274 = vmatpush1.msra.mxu0 0.0
    %3275 = vmatprep.subr.mxu0 0.0
    %3276 = vmatpush1.msra.mxu0 0.0
    %3277 = vmatprep.subr.mxu0 0.0
    %3278 = vmatpush1.msra.mxu0 0.0
    %3279 = vmatprep.subr.mxu0 0.0
    %3280 = vmatpush1.msra.mxu0 0.0
    %3281 = vmatprep.subr.mxu0 0.0
    %3282 = vmatpush1.msra.mxu0 0.0
    %3283 = vmatprep.subr.mxu0 0.0
    %3284 = vmatpush1.msra.mxu0 0.0
    %3285 = vmatprep.subr.mxu0 0.0
    %3286 = vmatpush1.msra.mxu0 0.0
    %3287 = vmatprep.subr.mxu0 0.0
    %3288 = vmatpush1.msra.mxu0 0.0
    %3289 = vmatprep.subr.mxu0 0.0
    %3290 = vmatpush1.msra.mxu0 0.0
    %3291 = vmatprep.subr.mxu0 0.0
    %3292 = vmatpush1.msra.mxu0 0.0
    %3293 = vmatprep.subr.mxu0 0.0
    %3294 = vmatpush1.msra.mxu0 0.0
    %3295 = vmatprep.subr.mxu0 0.0
    %3296 = vmatpush1.msra.mxu0 0.0
    %3297 = vmatprep.subr.mxu0 0.0
    %3298 = vmatpush1.msra.mxu0 0.0
    %3299 = vmatprep.subr.mxu0 0.0
    %3300 = vmatpush1.msra.mxu0 0.0
    %3301 = vmatprep.subr.mxu0 0.0
    %3302 = vmatpush1.msra.mxu0 0.0
    %3303 = vmatprep.subr.mxu0 0.0
    %3304 = vmatpush1.msra.mxu0 0.0
    %3305 = vmatprep.subr.mxu0 0.0
    %3306 = vmatpush1.msra.mxu0 0.0
    %3307 = vmatprep.subr.mxu0 0.0
    %3308 = vmatpush1.msra.mxu0 0.0
    %3309 = vmatprep.subr.mxu0 0.0
    %3310 = vmatpush1.msra.mxu0 0.0
    %3311 = vmatprep.subr.mxu0 0.0
    %3312 = vmatpush1.msra.mxu0 0.0
    %3313 = vmatprep.subr.mxu0 0.0
    %3314 = vmatpush1.msra.mxu0 0.0
    %3315 = vmatprep.subr.mxu0 0.0
    %3316 = vmatpush1.msra.mxu0 0.0
    %3317 = vmatprep.subr.mxu0 0.0
    %3318 = vmatpush1.msra.mxu0 0.0
    %3319 = vmatprep.subr.mxu0 0.0
    %3320 = vmatpush1.msra.mxu0 0.0
    %3321 = vmatprep.subr.mxu0 0.0
    %3322 = vmatpush1.msra.mxu0 0.0
    %3323 = vmatprep.mubr.f32.mxu0 0.0
    %3324 = vmatmul.mubr.f32.gmra.mrb[0].mxu0 %v3149
    %v3325 = vpop.f32.mrb[0].mxu0
    %v3326 = vadd.f32 0.0, %v3325
    %v3327 = vpop.f32.mrb[0].mxu0
    %3328 = vmatprep.mubr.f32.mxu0 0.0
    %3329 = vmatmul.mubr.f32.gmra.mrb[0].mxu0 %v3152
    %v3330 = vpop.f32.mrb[0].mxu0
    %v3331 = vadd.f32 0.0, %v3330
    %v3332 = vpop.f32.mrb[0].mxu0
    %3333 = vmatprep.mubr.f32.mxu0 0.0
    %3334 = vmatmul.mubr.f32.gmra.mrb[0].mxu0 %v3155
    %v3335 = vpop.f32.mrb[0].mxu0
    %v3336 = vadd.f32 0.0, %v3335
    %v3337 = vpop.f32.mrb[0].mxu0
    %3338 = vmatprep.mubr.f32.mxu0 0.0
    %3339 = vmatmul.mubr.f32.gmra.mrb[0].mxu0 %v3158
    %v3340 = vpop.f32.mrb[0].mxu0
    %v3341 = vadd.f32 0.0, %v3340
    %v3342 = vpop.f32.mrb[0].mxu0
    %3343 = vmatprep.mubr.f32.mxu0 0.0
    %3344 = vmatmul.mubr.f32.gmra.mrb[0].mxu0 %v3161
    %v3345 = vpop.f32.mrb[0].mxu0
    %v3346 = vadd.f32 0.0, %v3345
    %v3347 = vpop.f32.mrb[0].mxu0
    %3348 = vmatprep.mubr.f32.mxu0 0.0
    %3349 = vmatmul.mubr.f32.gmra.mrb[0].mxu0 %v3164
    %v3350 = vpop.f32.mrb[0].mxu0
    %v3351 = vadd.f32 0.0, %v3350
    %v3352 = vpop.f32.mrb[0].mxu0
    %3353 = vmatprep.mubr.f32.mxu0 0.0
    %3354 = vmatmul.mubr.f32.gmra.mrb[0].mxu0 %v3167
    %v3355 = vpop.f32.mrb[0].mxu0
    %v3356 = vadd.f32 0.0, %v3355
    %v3357 = vpop.f32.mrb[0].mxu0
    %3358 = vmatprep.mubr.f32.mxu0 0.0
    %3359 = vmatmul.mubr.f32.gmra.mrb[0].mxu0 %v3170
    %v3360 = vpop.f32.mrb[0].mxu0
    %v3361 = vadd.f32 0.0, %v3360
    %v3362 = vpop.f32.mrb[0].mxu0
    %3363 = vmatprep.mubr.f32.mxu0 0.0
    %3364 = vmatmul.mubr.f32.gmra.mrb[0].mxu0 %v3173
    %v3365 = vpop.f32.mrb[0].mxu0
    %v3366 = vadd.f32 0.0, %v3365
    %v3367 = vpop.f32.mrb[0].mxu0
    %3368 = vmatprep.mubr.f32.mxu0 0.0
    %3369 = vmatmul.mubr.f32.gmra.mrb[0].mxu0 %v3176
    %v3370 = vpop.f32.mrb[0].mxu0
    %v3371 = vadd.f32 0.0, %v3370
    %v3372 = vpop.f32.mrb[0].mxu0
    %3373 = vmatprep.mubr.f32.mxu0 0.0
    %3374 = vmatmul.mubr.f32.gmra.mrb[0].mxu0 %v3179
    %v3375 = vpop.f32.mrb[0].mxu0
    %v3376 = vadd.f32 0.0, %v3375
    %v3377 = vpop.f32.mrb[0].mxu0
    %3378 = vmatprep.mubr.f32.mxu0 0.0
    %3379 = vmatmul.mubr.f32.gmra.mrb[0].mxu0 %v3182
    %v3380 = vpop.f32.mrb[0].mxu0
    %v3381 = vadd.f32 0.0, %v3380
    %v3382 = vpop.f32.mrb[0].mxu0
    %3383 = vmatprep.mubr.f32.mxu0 0.0
    %3384 = vmatmul.mubr.f32.gmra.mrb[0].mxu0 %v3185
    %v3385 = vpop.f32.mrb[0].mxu0
    %v3386 = vadd.f32 0.0, %v3385
    %v3387 = vpop.f32.mrb[0].mxu0
    %3388 = vmatprep.mubr.f32.mxu0 0.0
    %3389 = vmatmul.mubr.f32.gmra.mrb[0].mxu0 %v3188
    %v3390 = vpop.f32.mrb[0].mxu0
    %v3391 = vadd.f32 0.0, %v3390
    %v3392 = vpop.f32.mrb[0].mxu0
    %3393 = vmatprep.mubr.f32.mxu0 0.0
    %3394 = vmatmul.mubr.f32.gmra.mrb[0].mxu0 %v3191
    %v3395 = vpop.f32.mrb[0].mxu0
    %v3396 = vadd.f32 0.0, %v3395
    %v3397 = vpop.f32.mrb[0].mxu0
    %3398 = vmatprep.mubr.f32.mxu0 0.0
    %3399 = vmatmul.mubr.f32.gmra.mrb[0].mxu0 %v3194
    %v3400 = vpop.f32.mrb[0].mxu0
    %v3401 = vadd.f32 0.0, %v3400
    %v3402 = vpop.f32.mrb[0].mxu0
    %3403 = vmatprep.mubr.f32.mxu0 0.0
    %3404 = vmatmul.mubr.f32.gmra.mrb[0].mxu0 %v3197
    %v3405 = vpop.f32.mrb[0].mxu0
    %v3406 = vadd.f32 0.0, %v3405
    %v3407 = vpop.f32.mrb[0].mxu0
    %3408 = vmatprep.mubr.f32.mxu0 0.0
    %3409 = vmatmul.mubr.f32.gmra.mrb[0].mxu0 %v3200
    %v3410 = vpop.f32.mrb[0].mxu0
    %v3411 = vadd.f32 0.0, %v3410
    %v3412 = vpop.f32.mrb[0].mxu0
    %3413 = vmatprep.mubr.f32.mxu0 0.0
    %3414 = vmatmul.mubr.f32.gmra.mrb[0].mxu0 %v3203
    %v3415 = vpop.f32.mrb[0].mxu0
    %v3416 = vadd.f32 0.0, %v3415
    %v3417 = vpop.f32.mrb[0].mxu0
    %3418 = vmatprep.mubr.f32.mxu0 0.0
    %3419 = vmatmul.mubr.f32.gmra.mrb[0].mxu0 %v3206
    %v3420 = vpop.f32.mrb[0].mxu0
    %v3421 = vadd.f32 0.0, %v3420
    %v3422 = vpop.f32.mrb[0].mxu0
    %3423 = vmatprep.mubr.f32.mxu0 0.0
    %3424 = vmatmul.mubr.f32.gmra.mrb[0].mxu0 %v3209
    %v3425 = vpop.f32.mrb[0].mxu0
    %v3426 = vadd.f32 0.0, %v3425
    %v3427 = vpop.f32.mrb[0].mxu0
    %3428 = vmatprep.mubr.f32.mxu0 0.0
    %3429 = vmatmul.mubr.f32.gmra.mrb[0].mxu0 %v3212
    %v3430 = vpop.f32.mrb[0].mxu0
    %v3431 = vadd.f32 0.0, %v3430
    %v3432 = vpop.f32.mrb[0].mxu0
    %3433 = vmatprep.mubr.f32.mxu0 0.0
    %3434 = vmatmul.mubr.f32.gmra.mrb[0].mxu0 %v3215
    %v3435 = vpop.f32.mrb[0].mxu0
    %v3436 = vadd.f32 0.0, %v3435
    %v3437 = vpop.f32.mrb[0].mxu0
    %3438 = vmatprep.mubr.f32.mxu0 0.0
    %3439 = vmatmul.mubr.f32.gmra.mrb[0].mxu0 %v3218
    %v3440 = vpop.f32.mrb[0].mxu0
    %v3441 = vadd.f32 0.0, %v3440
    %v3442 = vpop.f32.mrb[0].mxu0
    %3443 = vmatprep.mubr.f32.mxu0 0.0
    %3444 = vmatmul.mubr.f32.gmra.mrb[0].mxu0 %v3221
    %v3445 = vpop.f32.mrb[0].mxu0
    %v3446 = vadd.f32 0.0, %v3445
    %v3447 = vpop.f32.mrb[0].mxu0
    %3448 = vmatprep.mubr.f32.mxu0 0.0
    %3449 = vmatmul.mubr.f32.gmra.mrb[0].mxu0 %v3224
    %v3450 = vpop.f32.mrb[0].mxu0
    %v3451 = vadd.f32 0.0, %v3450
    %v3452 = vpop.f32.mrb[0].mxu0
    %3453 = vmatprep.mubr.f32.mxu0 0.0
    %3454 = vmatmul.mubr.f32.gmra.mrb[0].mxu0 %v3227
    %v3455 = vpop.f32.mrb[0].mxu0
    %v3456 = vadd.f32 0.0, %v3455
    %v3457 = vpop.f32.mrb[0].mxu0
    %3458 = vmatprep.mubr.f32.mxu0 0.0
    %3459 = vmatmul.mubr.f32.gmra.mrb[0].mxu0 %v3230
    %v3460 = vpop.f32.mrb[0].mxu0
    %v3461 = vadd.f32 0.0, %v3460
    %v3462 = vpop.f32.mrb[0].mxu0
    %3463 = vmatprep.mubr.f32.mxu0 0.0
    %3464 = vmatmul.mubr.f32.gmra.mrb[0].mxu0 %v3233
    %v3465 = vpop.f32.mrb[0].mxu0
    %v3466 = vadd.f32 0.0, %v3465
    %v3467 = vpop.f32.mrb[0].mxu0
    %3468 = vmatprep.mubr.f32.mxu0 0.0
    %3469 = vmatmul.mubr.f32.gmra.mrb[0].mxu0 %v3236
    %v3470 = vpop.f32.mrb[0].mxu0
    %v3471 = vadd.f32 0.0, %v3470
    %v3472 = vpop.f32.mrb[0].mxu0
    %3473 = vmatprep.mubr.f32.mxu0 0.0
    %3474 = vmatmul.mubr.f32.gmra.mrb[0].mxu0 %v3239
    %v3475 = vpop.f32.mrb[0].mxu0
    %v3476 = vadd.f32 0.0, %v3475
    %v3477 = vpop.f32.mrb[0].mxu0
    %3478 = vmatprep.mubr.f32.mxu0 0.0
    %3479 = vmatmul.mubr.f32.gmra.mrb[0].mxu0 %v3242
    %v3480 = vpop.f32.mrb[0].mxu0
    %v3481 = vadd.f32 0.0, %v3480
    %v3482 = vpop.f32.mrb[0].mxu0
    %3483 = vmatprep.mubr.f32.mxu0 0.0
    %3484 = vmatmul.mubr.f32.gmra.mrb[0].mxu0 %v3245
    %v3485 = vpop.f32.mrb[0].mxu0
    %v3486 = vadd.f32 0.0, %v3485
    %v3487 = vpop.f32.mrb[0].mxu0
    %3488 = vmatprep.mubr.f32.mxu0 0.0
    %3489 = vmatmul.mubr.f32.gmra.mrb[0].mxu0 %v3248
    %v3490 = vpop.f32.mrb[0].mxu0
    %v3491 = vadd.f32 0.0, %v3490
    %v3492 = vpop.f32.mrb[0].mxu0
    %3493 = vmatprep.mubr.f32.mxu0 0.0
    %3494 = vmatmul.mubr.f32.gmra.mrb[0].mxu0 %v3251
    %v3495 = vpop.f32.mrb[0].mxu0
    %v3496 = vadd.f32 0.0, %v3495
    %v3497 = vpop.f32.mrb[0].mxu0
    %3498 = vmatprep.mubr.f32.mxu0 0.0
    %3499 = vmatmul.mubr.f32.gmra.mrb[0].mxu0 %v3254
    %v3500 = vpop.f32.mrb[0].mxu0
    %v3501 = vadd.f32 0.0, %v3500
    %v3502 = vpop.f32.mrb[0].mxu0
    %3503 = vdwg.mxu0
    %v3504 = vadd.f32 %v3110, %v3326
    %v3505 = vadd.f32 %v3111, %v3331
    %v3506 = vadd.f32 %v3112, %v3336
    %v3507 = vadd.f32 %v3113, %v3341
    %v3508 = vadd.f32 %v3114, %v3346
    %v3509 = vadd.f32 %v3115, %v3351
    %v3510 = vadd.f32 %v3116, %v3356
    %v3511 = vadd.f32 %v3117, %v3361
    %v3512 = vadd.f32 %v3118, %v3366
    %v3513 = vadd.f32 %v3119, %v3371
    %v3514 = vadd.f32 %v3120, %v3376
    %v3515 = vadd.f32 %v3121, %v3381
    %v3516 = vadd.f32 %v3122, %v3386
    %v3517 = vadd.f32 %v3123, %v3391
    %v3518 = vadd.f32 %v3124, %v3396
    %v3519 = vadd.f32 %v3125, %v3401
    %v3520 = vadd.f32 %v3126, %v3406
    %v3521 = vadd.f32 %v3127, %v3411
    %v3522 = vadd.f32 %v3128, %v3416
    %v3523 = vadd.f32 %v3129, %v3421
    %v3524 = vadd.f32 %v3130, %v3426
    %v3525 = vadd.f32 %v3131, %v3431
    %v3526 = vadd.f32 %v3132, %v3436
    %v3527 = vadd.f32 %v3133, %v3441
    %v3528 = vadd.f32 %v3134, %v3446
    %v3529 = vadd.f32 %v3135, %v3451
    %v3530 = vadd.f32 %v3136, %v3456
    %v3531 = vadd.f32 %v3137, %v3461
    %v3532 = vadd.f32 %v3138, %v3466
    %v3533 = vadd.f32 %v3139, %v3471
    %v3534 = vadd.f32 %v3140, %v3476
    %v3535 = vadd.f32 %v3141, %v3481
    %v3536 = vadd.f32 %v3142, %v3486
    %v3537 = vadd.f32 %v3143, %v3491
    %v3538 = vadd.f32 %v3144, %v3496
    %v3539 = vadd.f32 %v3145, %v3501
    %3540 = vst.msk [vmem:[#allocation2] sm:$0xff] %vm24, %v3504
    %3541 = vst.msk [vmem:[#allocation2 + $0x8] sm:$0xff] %vm24, %v3505
    %3542 = vst.msk [vmem:[#allocation2 + $0x10] sm:$0xff] %vm24, %v3506
    %3543 = vst.msk [vmem:[#allocation2 + $0x18] sm:$0xff] %vm24, %v3507
    %3544 = vst.msk [vmem:[#allocation2 + $0x20] sm:$0xff] %vm24, %v3508
    %3545 = vst.msk [vmem:[#allocation2 + $0x28] sm:$0xff] %vm24, %v3509
    %3546 = vst.msk [vmem:[#allocation2 + $0x30] sm:$0xff] %vm24, %v3510
    %3547 = vst.msk [vmem:[#allocation2 + $0x38] sm:$0xff] %vm24, %v3511
    %3548 = vst.msk [vmem:[#allocation2 + $0x40] sm:$0xff] %vm24, %v3512
    %3549 = vst.msk [vmem:[#allocation2 + $0x48] sm:$0xff] %vm24, %v3513
    %3550 = vst.msk [vmem:[#allocation2 + $0x50] sm:$0xff] %vm24, %v3514
    %3551 = vst.msk [vmem:[#allocation2 + $0x58] sm:$0xff] %vm24, %v3515
    %3552 = vst.msk [vmem:[#allocation2 + $0x60] sm:$0xff] %vm24, %v3516
    %3553 = vst.msk [vmem:[#allocation2 + $0x68] sm:$0xff] %vm24, %v3517
    %3554 = vst.msk [vmem:[#allocation2 + $0x70] sm:$0xff] %vm24, %v3518
    %3555 = vst.msk [vmem:[#allocation2 + $0x78] sm:$0xff] %vm24, %v3519
    %3556 = vst.msk [vmem:[#allocation2 + $0x80] sm:$0xff] %vm24, %v3520
    %3557 = vst.msk [vmem:[#allocation2 + $0x88] sm:$0xff] %vm24, %v3521
    %3558 = vst.msk [vmem:[#allocation2 + $0x90] sm:$0xff] %vm24, %v3522
    %3559 = vst.msk [vmem:[#allocation2 + $0x98] sm:$0xff] %vm24, %v3523
    %3560 = vst.msk [vmem:[#allocation2 + $0xa0] sm:$0xff] %vm24, %v3524
    %3561 = vst.msk [vmem:[#allocation2 + $0xa8] sm:$0xff] %vm24, %v3525
    %3562 = vst.msk [vmem:[#allocation2 + $0xb0] sm:$0xff] %vm24, %v3526
    %3563 = vst.msk [vmem:[#allocation2 + $0xb8] sm:$0xff] %vm24, %v3527
    %3564 = vst.msk [vmem:[#allocation2 + $0xc0] sm:$0xff] %vm24, %v3528
    %3565 = vst.msk [vmem:[#allocation2 + $0xc8] sm:$0xff] %vm24, %v3529
    %3566 = vst.msk [vmem:[#allocation2 + $0xd0] sm:$0xff] %vm24, %v3530
    %3567 = vst.msk [vmem:[#allocation2 + $0xd8] sm:$0xff] %vm24, %v3531
    %3568 = vst.msk [vmem:[#allocation2 + $0xe0] sm:$0xff] %vm24, %v3532
    %3569 = vst.msk [vmem:[#allocation2 + $0xe8] sm:$0xff] %vm24, %v3533
    %3570 = vst.msk [vmem:[#allocation2 + $0xf0] sm:$0xff] %vm24, %v3534
    %3571 = vst.msk [vmem:[#allocation2 + $0xf8] sm:$0xff] %vm24, %v3535
    %3572 = vst.msk [vmem:[#allocation2 + $0x100] sm:$0xff] %vm24, %v3536
    %3573 = vst.msk [vmem:[#allocation2 + $0x108] sm:$0xff] %vm24, %v3537
    %3574 = vst.msk [vmem:[#allocation2 + $0x110] sm:$0xff] %vm24, %v3538
    %3575 = vst.msk [vmem:[#allocation2 + $0x118] sm:$0xff] %vm24, %v3539
    %v3576 = vld [vmem:[%s0 + $0x25] sm:$0xff]
    %v3577 = vld [vmem:[%s0 + $0x2d] sm:$0xff]
    %v3578 = vld [vmem:[%s0 + $0x35] sm:$0xff]
    %v3579 = vld [vmem:[%s0 + $0x3d] sm:$0xff]
    %v3580 = vld [vmem:[%s0 + $0x45] sm:$0xff]
    %v3581 = vld [vmem:[%s0 + $0x4d] sm:$0xff]
    %v3582 = vld [vmem:[%s0 + $0x55] sm:$0xff]
    %v3583 = vld [vmem:[%s0 + $0x5d] sm:$0xff]
    %v3584 = vld [vmem:[%s0 + $0x65] sm:$0xff]
    %v3585 = vld [vmem:[%s0 + $0x6d] sm:$0xff]
    %v3586 = vld [vmem:[%s0 + $0x75] sm:$0xff]
    %v3587 = vld [vmem:[%s0 + $0x7d] sm:$0xff]
    %v3588 = vld [vmem:[%s0 + $0x85] sm:$0xff]
    %v3589 = vld [vmem:[%s0 + $0x8d] sm:$0xff]
    %v3590 = vld [vmem:[%s0 + $0x95] sm:$0xff]
    %v3591 = vld [vmem:[%s0 + $0x9d] sm:$0xff]
    %v3592 = vld [vmem:[%s0 + $0xa5] sm:$0xff]
    %v3593 = vld [vmem:[%s0 + $0xad] sm:$0xff]
    %v3594 = vld [vmem:[%s0 + $0xb5] sm:$0xff]
    %v3595 = vld [vmem:[%s0 + $0xbd] sm:$0xff]
    %v3596 = vld [vmem:[%s0 + $0xc5] sm:$0xff]
    %v3597 = vld [vmem:[%s0 + $0xcd] sm:$0xff]
    %v3598 = vld [vmem:[%s0 + $0xd5] sm:$0xff]
    %v3599 = vld [vmem:[%s0 + $0xdd] sm:$0xff]
    %v3600 = vld [vmem:[%s0 + $0xe5] sm:$0xff]
    %v3601 = vld [vmem:[%s0 + $0xed] sm:$0xff]
    %v3602 = vld [vmem:[%s0 + $0xf5] sm:$0xff]
    %v3603 = vld [vmem:[%s0 + $0xfd] sm:$0xff]
    %v3604 = vld [vmem:[%s0 + $0x105] sm:$0xff]
    %v3605 = vld [vmem:[%s0 + $0x10d] sm:$0xff]
    %v3606 = vld [vmem:[%s0 + $0x115] sm:$0xff]
    %v3607 = vld [vmem:[%s0 + $0x11d] sm:$0xff]
    %v3608 = vld [vmem:[%s0 + $0x125] sm:$0xff]
    %v3609 = vld [vmem:[%s0 + $0x12d] sm:$0xff]
    %v3610 = vld [vmem:[%s0 + $0x135] sm:$0xff]
    %v3611 = vld [vmem:[%s0 + $0x13d] sm:$0xff]
    %v3612 = vld [vmem:[#allocation2] sm:$0xff]
    %v3613 = vld [vmem:[#allocation2 + $0x8] sm:$0xff]
    %v3614 = vld [vmem:[#allocation2 + $0x10] sm:$0xff]
    %v3615 = vld [vmem:[#allocation2 + $0x18] sm:$0xff]
    %v3616 = vld [vmem:[#allocation2 + $0x20] sm:$0xff]
    %v3617 = vld [vmem:[#allocation2 + $0x28] sm:$0xff]
    %v3618 = vld [vmem:[#allocation2 + $0x30] sm:$0xff]
    %v3619 = vld [vmem:[#allocation2 + $0x38] sm:$0xff]
    %v3620 = vld [vmem:[#allocation2 + $0x40] sm:$0xff]
    %v3621 = vld [vmem:[#allocation2 + $0x48] sm:$0xff]
    %v3622 = vld [vmem:[#allocation2 + $0x50] sm:$0xff]
    %v3623 = vld [vmem:[#allocation2 + $0x58] sm:$0xff]
    %v3624 = vld [vmem:[#allocation2 + $0x60] sm:$0xff]
    %v3625 = vld [vmem:[#allocation2 + $0x68] sm:$0xff]
    %v3626 = vld [vmem:[#allocation2 + $0x70] sm:$0xff]
    %v3627 = vld [vmem:[#allocation2 + $0x78] sm:$0xff]
    %v3628 = vld [vmem:[#allocation2 + $0x80] sm:$0xff]
    %v3629 = vld [vmem:[#allocation2 + $0x88] sm:$0xff]
    %v3630 = vld [vmem:[#allocation2 + $0x90] sm:$0xff]
    %v3631 = vld [vmem:[#allocation2 + $0x98] sm:$0xff]
    %v3632 = vld [vmem:[#allocation2 + $0xa0] sm:$0xff]
    %v3633 = vld [vmem:[#allocation2 + $0xa8] sm:$0xff]
    %v3634 = vld [vmem:[#allocation2 + $0xb0] sm:$0xff]
    %v3635 = vld [vmem:[#allocation2 + $0xb8] sm:$0xff]
    %v3636 = vld [vmem:[#allocation2 + $0xc0] sm:$0xff]
    %v3637 = vld [vmem:[#allocation2 + $0xc8] sm:$0xff]
    %v3638 = vld [vmem:[#allocation2 + $0xd0] sm:$0xff]
    %v3639 = vld [vmem:[#allocation2 + $0xd8] sm:$0xff]
    %v3640 = vld [vmem:[#allocation2 + $0xe0] sm:$0xff]
    %v3641 = vld [vmem:[#allocation2 + $0xe8] sm:$0xff]
    %v3642 = vld [vmem:[#allocation2 + $0xf0] sm:$0xff]
    %v3643 = vld [vmem:[#allocation2 + $0xf8] sm:$0xff]
    %v3644 = vld [vmem:[#allocation2 + $0x100] sm:$0xff]
    %v3645 = vld [vmem:[#allocation2 + $0x108] sm:$0xff]
    %v3646 = vld [vmem:[#allocation2 + $0x110] sm:$0xff]
    %v3647 = vld [vmem:[#allocation2 + $0x118] sm:$0xff]
    %s3648 = scalar_lea.vmem %s1, 28
    %v3649 = vld [vmem:[%s3648] sm:$0xf]
    %v3651 = vsel %vm134, %v3576, 0
    %v3654 = vsel %vm134, %v3577, 0
    %v3657 = vsel %vm134, %v3578, 0
    %v3660 = vsel %vm134, %v3579, 0
    %v3663 = vsel %vm134, %v3580, 0
    %v3666 = vsel %vm134, %v3581, 0
    %v3669 = vsel %vm134, %v3582, 0
    %v3672 = vsel %vm134, %v3583, 0
    %v3675 = vsel %vm134, %v3584, 0
    %v3678 = vsel %vm134, %v3585, 0
    %v3681 = vsel %vm134, %v3586, 0
    %v3684 = vsel %vm134, %v3587, 0
    %v3687 = vsel %vm134, %v3588, 0
    %v3690 = vsel %vm134, %v3589, 0
    %v3693 = vsel %vm134, %v3590, 0
    %v3696 = vsel %vm134, %v3591, 0
    %v3699 = vsel %vm134, %v3592, 0
    %v3702 = vsel %vm134, %v3593, 0
    %v3705 = vsel %vm134, %v3594, 0
    %v3708 = vsel %vm134, %v3595, 0
    %v3711 = vsel %vm134, %v3596, 0
    %v3714 = vsel %vm134, %v3597, 0
    %v3717 = vsel %vm134, %v3598, 0
    %v3720 = vsel %vm134, %v3599, 0
    %v3723 = vsel %vm134, %v3600, 0
    %v3726 = vsel %vm134, %v3601, 0
    %v3729 = vsel %vm134, %v3602, 0
    %v3732 = vsel %vm134, %v3603, 0
    %v3735 = vsel %vm134, %v3604, 0
    %v3738 = vsel %vm134, %v3605, 0
    %v3741 = vsel %vm134, %v3606, 0
    %v3744 = vsel %vm134, %v3607, 0
    %v3747 = vsel %vm134, %v3608, 0
    %v3750 = vsel %vm134, %v3609, 0
    %v3753 = vsel %vm134, %v3610, 0
    %v3756 = vsel %vm134, %v3611, 0
    %v3759 = vsel %vm243, %v3649, 0
    %3761 = vmatprep.subr.mxu0 0.0
    %3762 = vmatpush1.msra.mxu0 %v3759
    %3763 = vmatprep.subr.mxu0 0.0
    %3764 = vmatpush1.msra.mxu0 0.0
    %3765 = vmatprep.subr.mxu0 0.0
    %3766 = vmatpush1.msra.mxu0 0.0
    %3767 = vmatprep.subr.mxu0 0.0
    %3768 = vmatpush1.msra.mxu0 0.0
    %3769 = vmatprep.subr.mxu0 0.0
    %3770 = vmatpush1.msra.mxu0 0.0
    %3771 = vmatprep.subr.mxu0 0.0
    %3772 = vmatpush1.msra.mxu0 0.0
    %3773 = vmatprep.subr.mxu0 0.0
    %3774 = vmatpush1.msra.mxu0 0.0
    %3775 = vmatprep.subr.mxu0 0.0
    %3776 = vmatpush1.msra.mxu0 0.0
    %3777 = vmatprep.subr.mxu0 0.0
    %3778 = vmatpush1.msra.mxu0 0.0
    %3779 = vmatprep.subr.mxu0 0.0
    %3780 = vmatpush1.msra.mxu0 0.0
    %3781 = vmatprep.subr.mxu0 0.0
    %3782 = vmatpush1.msra.mxu0 0.0
    %3783 = vmatprep.subr.mxu0 0.0
    %3784 = vmatpush1.msra.mxu0 0.0
    %3785 = vmatprep.subr.mxu0 0.0
    %3786 = vmatpush1.msra.mxu0 0.0
    %3787 = vmatprep.subr.mxu0 0.0
    %3788 = vmatpush1.msra.mxu0 0.0
    %3789 = vmatprep.subr.mxu0 0.0
    %3790 = vmatpush1.msra.mxu0 0.0
    %3791 = vmatprep.subr.mxu0 0.0
    %3792 = vmatpush1.msra.mxu0 0.0
    %3793 = vmatprep.subr.mxu0 0.0
    %3794 = vmatpush1.msra.mxu0 0.0
    %3795 = vmatprep.subr.mxu0 0.0
    %3796 = vmatpush1.msra.mxu0 0.0
    %3797 = vmatprep.subr.mxu0 0.0
    %3798 = vmatpush1.msra.mxu0 0.0
    %3799 = vmatprep.subr.mxu0 0.0
    %3800 = vmatpush1.msra.mxu0 0.0
    %3801 = vmatprep.subr.mxu0 0.0
    %3802 = vmatpush1.msra.mxu0 0.0
    %3803 = vmatprep.subr.mxu0 0.0
    %3804 = vmatpush1.msra.mxu0 0.0
    %3805 = vmatprep.subr.mxu0 0.0
    %3806 = vmatpush1.msra.mxu0 0.0
    %3807 = vmatprep.subr.mxu0 0.0
    %3808 = vmatpush1.msra.mxu0 0.0
    %3809 = vmatprep.subr.mxu0 0.0
    %3810 = vmatpush1.msra.mxu0 0.0
    %3811 = vmatprep.subr.mxu0 0.0
    %3812 = vmatpush1.msra.mxu0 0.0
    %3813 = vmatprep.subr.mxu0 0.0
    %3814 = vmatpush1.msra.mxu0 0.0
    %3815 = vmatprep.subr.mxu0 0.0
    %3816 = vmatpush1.msra.mxu0 0.0
    %3817 = vmatprep.subr.mxu0 0.0
    %3818 = vmatpush1.msra.mxu0 0.0
    %3819 = vmatprep.subr.mxu0 0.0
    %3820 = vmatpush1.msra.mxu0 0.0
    %3821 = vmatprep.subr.mxu0 0.0
    %3822 = vmatpush1.msra.mxu0 0.0
    %3823 = vmatprep.subr.mxu0 0.0
    %3824 = vmatpush1.msra.mxu0 0.0
    %3825 = vmatprep.mubr.f32.mxu0 0.0
    %3826 = vmatmul.mubr.f32.gmra.mrb[0].mxu0 %v3651
    %v3827 = vpop.f32.mrb[0].mxu0
    %v3828 = vadd.f32 0.0, %v3827
    %v3829 = vpop.f32.mrb[0].mxu0
    %3830 = vmatprep.mubr.f32.mxu0 0.0
    %3831 = vmatmul.mubr.f32.gmra.mrb[0].mxu0 %v3654
    %v3832 = vpop.f32.mrb[0].mxu0
    %v3833 = vadd.f32 0.0, %v3832
    %v3834 = vpop.f32.mrb[0].mxu0
    %3835 = vmatprep.mubr.f32.mxu0 0.0
    %3836 = vmatmul.mubr.f32.gmra.mrb[0].mxu0 %v3657
    %v3837 = vpop.f32.mrb[0].mxu0
    %v3838 = vadd.f32 0.0, %v3837
    %v3839 = vpop.f32.mrb[0].mxu0
    %3840 = vmatprep.mubr.f32.mxu0 0.0
    %3841 = vmatmul.mubr.f32.gmra.mrb[0].mxu0 %v3660
    %v3842 = vpop.f32.mrb[0].mxu0
    %v3843 = vadd.f32 0.0, %v3842
    %v3844 = vpop.f32.mrb[0].mxu0
    %3845 = vmatprep.mubr.f32.mxu0 0.0
    %3846 = vmatmul.mubr.f32.gmra.mrb[0].mxu0 %v3663
    %v3847 = vpop.f32.mrb[0].mxu0
    %v3848 = vadd.f32 0.0, %v3847
    %v3849 = vpop.f32.mrb[0].mxu0
    %3850 = vmatprep.mubr.f32.mxu0 0.0
    %3851 = vmatmul.mubr.f32.gmra.mrb[0].mxu0 %v3666
    %v3852 = vpop.f32.mrb[0].mxu0
    %v3853 = vadd.f32 0.0, %v3852
    %v3854 = vpop.f32.mrb[0].mxu0
    %3855 = vmatprep.mubr.f32.mxu0 0.0
    %3856 = vmatmul.mubr.f32.gmra.mrb[0].mxu0 %v3669
    %v3857 = vpop.f32.mrb[0].mxu0
    %v3858 = vadd.f32 0.0, %v3857
    %v3859 = vpop.f32.mrb[0].mxu0
    %3860 = vmatprep.mubr.f32.mxu0 0.0
    %3861 = vmatmul.mubr.f32.gmra.mrb[0].mxu0 %v3672
    %v3862 = vpop.f32.mrb[0].mxu0
    %v3863 = vadd.f32 0.0, %v3862
    %v3864 = vpop.f32.mrb[0].mxu0
    %3865 = vmatprep.mubr.f32.mxu0 0.0
    %3866 = vmatmul.mubr.f32.gmra.mrb[0].mxu0 %v3675
    %v3867 = vpop.f32.mrb[0].mxu0
    %v3868 = vadd.f32 0.0, %v3867
    %v3869 = vpop.f32.mrb[0].mxu0
    %3870 = vmatprep.mubr.f32.mxu0 0.0
    %3871 = vmatmul.mubr.f32.gmra.mrb[0].mxu0 %v3678
    %v3872 = vpop.f32.mrb[0].mxu0
    %v3873 = vadd.f32 0.0, %v3872
    %v3874 = vpop.f32.mrb[0].mxu0
    %3875 = vmatprep.mubr.f32.mxu0 0.0
    %3876 = vmatmul.mubr.f32.gmra.mrb[0].mxu0 %v3681
    %v3877 = vpop.f32.mrb[0].mxu0
    %v3878 = vadd.f32 0.0, %v3877
    %v3879 = vpop.f32.mrb[0].mxu0
    %3880 = vmatprep.mubr.f32.mxu0 0.0
    %3881 = vmatmul.mubr.f32.gmra.mrb[0].mxu0 %v3684
    %v3882 = vpop.f32.mrb[0].mxu0
    %v3883 = vadd.f32 0.0, %v3882
    %v3884 = vpop.f32.mrb[0].mxu0
    %3885 = vmatprep.mubr.f32.mxu0 0.0
    %3886 = vmatmul.mubr.f32.gmra.mrb[0].mxu0 %v3687
    %v3887 = vpop.f32.mrb[0].mxu0
    %v3888 = vadd.f32 0.0, %v3887
    %v3889 = vpop.f32.mrb[0].mxu0
    %3890 = vmatprep.mubr.f32.mxu0 0.0
    %3891 = vmatmul.mubr.f32.gmra.mrb[0].mxu0 %v3690
    %v3892 = vpop.f32.mrb[0].mxu0
    %v3893 = vadd.f32 0.0, %v3892
    %v3894 = vpop.f32.mrb[0].mxu0
    %3895 = vmatprep.mubr.f32.mxu0 0.0
    %3896 = vmatmul.mubr.f32.gmra.mrb[0].mxu0 %v3693
    %v3897 = vpop.f32.mrb[0].mxu0
    %v3898 = vadd.f32 0.0, %v3897
    %v3899 = vpop.f32.mrb[0].mxu0
    %3900 = vmatprep.mubr.f32.mxu0 0.0
    %3901 = vmatmul.mubr.f32.gmra.mrb[0].mxu0 %v3696
    %v3902 = vpop.f32.mrb[0].mxu0
    %v3903 = vadd.f32 0.0, %v3902
    %v3904 = vpop.f32.mrb[0].mxu0
    %3905 = vmatprep.mubr.f32.mxu0 0.0
    %3906 = vmatmul.mubr.f32.gmra.mrb[0].mxu0 %v3699
    %v3907 = vpop.f32.mrb[0].mxu0
    %v3908 = vadd.f32 0.0, %v3907
    %v3909 = vpop.f32.mrb[0].mxu0
    %3910 = vmatprep.mubr.f32.mxu0 0.0
    %3911 = vmatmul.mubr.f32.gmra.mrb[0].mxu0 %v3702
    %v3912 = vpop.f32.mrb[0].mxu0
    %v3913 = vadd.f32 0.0, %v3912
    %v3914 = vpop.f32.mrb[0].mxu0
    %3915 = vmatprep.mubr.f32.mxu0 0.0
    %3916 = vmatmul.mubr.f32.gmra.mrb[0].mxu0 %v3705
    %v3917 = vpop.f32.mrb[0].mxu0
    %v3918 = vadd.f32 0.0, %v3917
    %v3919 = vpop.f32.mrb[0].mxu0
    %3920 = vmatprep.mubr.f32.mxu0 0.0
    %3921 = vmatmul.mubr.f32.gmra.mrb[0].mxu0 %v3708
    %v3922 = vpop.f32.mrb[0].mxu0
    %v3923 = vadd.f32 0.0, %v3922
    %v3924 = vpop.f32.mrb[0].mxu0
    %3925 = vmatprep.mubr.f32.mxu0 0.0
    %3926 = vmatmul.mubr.f32.gmra.mrb[0].mxu0 %v3711
    %v3927 = vpop.f32.mrb[0].mxu0
    %v3928 = vadd.f32 0.0, %v3927
    %v3929 = vpop.f32.mrb[0].mxu0
    %3930 = vmatprep.mubr.f32.mxu0 0.0
    %3931 = vmatmul.mubr.f32.gmra.mrb[0].mxu0 %v3714
    %v3932 = vpop.f32.mrb[0].mxu0
    %v3933 = vadd.f32 0.0, %v3932
    %v3934 = vpop.f32.mrb[0].mxu0
    %3935 = vmatprep.mubr.f32.mxu0 0.0
    %3936 = vmatmul.mubr.f32.gmra.mrb[0].mxu0 %v3717
    %v3937 = vpop.f32.mrb[0].mxu0
    %v3938 = vadd.f32 0.0, %v3937
    %v3939 = vpop.f32.mrb[0].mxu0
    %3940 = vmatprep.mubr.f32.mxu0 0.0
    %3941 = vmatmul.mubr.f32.gmra.mrb[0].mxu0 %v3720
    %v3942 = vpop.f32.mrb[0].mxu0
    %v3943 = vadd.f32 0.0, %v3942
    %v3944 = vpop.f32.mrb[0].mxu0
    %3945 = vmatprep.mubr.f32.mxu0 0.0
    %3946 = vmatmul.mubr.f32.gmra.mrb[0].mxu0 %v3723
    %v3947 = vpop.f32.mrb[0].mxu0
    %v3948 = vadd.f32 0.0, %v3947
    %v3949 = vpop.f32.mrb[0].mxu0
    %3950 = vmatprep.mubr.f32.mxu0 0.0
    %3951 = vmatmul.mubr.f32.gmra.mrb[0].mxu0 %v3726
    %v3952 = vpop.f32.mrb[0].mxu0
    %v3953 = vadd.f32 0.0, %v3952
    %v3954 = vpop.f32.mrb[0].mxu0
    %3955 = vmatprep.mubr.f32.mxu0 0.0
    %3956 = vmatmul.mubr.f32.gmra.mrb[0].mxu0 %v3729
    %v3957 = vpop.f32.mrb[0].mxu0
    %v3958 = vadd.f32 0.0, %v3957
    %v3959 = vpop.f32.mrb[0].mxu0
    %3960 = vmatprep.mubr.f32.mxu0 0.0
    %3961 = vmatmul.mubr.f32.gmra.mrb[0].mxu0 %v3732
    %v3962 = vpop.f32.mrb[0].mxu0
    %v3963 = vadd.f32 0.0, %v3962
    %v3964 = vpop.f32.mrb[0].mxu0
    %3965 = vmatprep.mubr.f32.mxu0 0.0
    %3966 = vmatmul.mubr.f32.gmra.mrb[0].mxu0 %v3735
    %v3967 = vpop.f32.mrb[0].mxu0
    %v3968 = vadd.f32 0.0, %v3967
    %v3969 = vpop.f32.mrb[0].mxu0
    %3970 = vmatprep.mubr.f32.mxu0 0.0
    %3971 = vmatmul.mubr.f32.gmra.mrb[0].mxu0 %v3738
    %v3972 = vpop.f32.mrb[0].mxu0
    %v3973 = vadd.f32 0.0, %v3972
    %v3974 = vpop.f32.mrb[0].mxu0
    %3975 = vmatprep.mubr.f32.mxu0 0.0
    %3976 = vmatmul.mubr.f32.gmra.mrb[0].mxu0 %v3741
    %v3977 = vpop.f32.mrb[0].mxu0
    %v3978 = vadd.f32 0.0, %v3977
    %v3979 = vpop.f32.mrb[0].mxu0
    %3980 = vmatprep.mubr.f32.mxu0 0.0
    %3981 = vmatmul.mubr.f32.gmra.mrb[0].mxu0 %v3744
    %v3982 = vpop.f32.mrb[0].mxu0
    %v3983 = vadd.f32 0.0, %v3982
    %v3984 = vpop.f32.mrb[0].mxu0
    %3985 = vmatprep.mubr.f32.mxu0 0.0
    %3986 = vmatmul.mubr.f32.gmra.mrb[0].mxu0 %v3747
    %v3987 = vpop.f32.mrb[0].mxu0
    %v3988 = vadd.f32 0.0, %v3987
    %v3989 = vpop.f32.mrb[0].mxu0
    %3990 = vmatprep.mubr.f32.mxu0 0.0
    %3991 = vmatmul.mubr.f32.gmra.mrb[0].mxu0 %v3750
    %v3992 = vpop.f32.mrb[0].mxu0
    %v3993 = vadd.f32 0.0, %v3992
    %v3994 = vpop.f32.mrb[0].mxu0
    %3995 = vmatprep.mubr.f32.mxu0 0.0
    %3996 = vmatmul.mubr.f32.gmra.mrb[0].mxu0 %v3753
    %v3997 = vpop.f32.mrb[0].mxu0
    %v3998 = vadd.f32 0.0, %v3997
    %v3999 = vpop.f32.mrb[0].mxu0
    %4000 = vmatprep.mubr.f32.mxu0 0.0
    %4001 = vmatmul.mubr.f32.gmra.mrb[0].mxu0 %v3756
    %v4002 = vpop.f32.mrb[0].mxu0
    %v4003 = vadd.f32 0.0, %v4002
    %v4004 = vpop.f32.mrb[0].mxu0
    %4005 = vdwg.mxu0
    %v4006 = vadd.f32 %v3612, %v3828
    %v4007 = vadd.f32 %v3613, %v3833
    %v4008 = vadd.f32 %v3614, %v3838
    %v4009 = vadd.f32 %v3615, %v3843
    %v4010 = vadd.f32 %v3616, %v3848
    %v4011 = vadd.f32 %v3617, %v3853
    %v4012 = vadd.f32 %v3618, %v3858
    %v4013 = vadd.f32 %v3619, %v3863
    %v4014 = vadd.f32 %v3620, %v3868
    %v4015 = vadd.f32 %v3621, %v3873
    %v4016 = vadd.f32 %v3622, %v3878
    %v4017 = vadd.f32 %v3623, %v3883
    %v4018 = vadd.f32 %v3624, %v3888
    %v4019 = vadd.f32 %v3625, %v3893
    %v4020 = vadd.f32 %v3626, %v3898
    %v4021 = vadd.f32 %v3627, %v3903
    %v4022 = vadd.f32 %v3628, %v3908
    %v4023 = vadd.f32 %v3629, %v3913
    %v4024 = vadd.f32 %v3630, %v3918
    %v4025 = vadd.f32 %v3631, %v3923
    %v4026 = vadd.f32 %v3632, %v3928
    %v4027 = vadd.f32 %v3633, %v3933
    %v4028 = vadd.f32 %v3634, %v3938
    %v4029 = vadd.f32 %v3635, %v3943
    %v4030 = vadd.f32 %v3636, %v3948
    %v4031 = vadd.f32 %v3637, %v3953
    %v4032 = vadd.f32 %v3638, %v3958
    %v4033 = vadd.f32 %v3639, %v3963
    %v4034 = vadd.f32 %v3640, %v3968
    %v4035 = vadd.f32 %v3641, %v3973
    %v4036 = vadd.f32 %v3642, %v3978
    %v4037 = vadd.f32 %v3643, %v3983
    %v4038 = vadd.f32 %v3644, %v3988
    %v4039 = vadd.f32 %v3645, %v3993
    %v4040 = vadd.f32 %v3646, %v3998
    %v4041 = vadd.f32 %v3647, %v4003
    %4042 = vst.msk [vmem:[#allocation2] sm:$0xff] %vm24, %v4006
    %4043 = vst.msk [vmem:[#allocation2 + $0x8] sm:$0xff] %vm24, %v4007
    %4044 = vst.msk [vmem:[#allocation2 + $0x10] sm:$0xff] %vm24, %v4008
    %4045 = vst.msk [vmem:[#allocation2 + $0x18] sm:$0xff] %vm24, %v4009
    %4046 = vst.msk [vmem:[#allocation2 + $0x20] sm:$0xff] %vm24, %v4010
    %4047 = vst.msk [vmem:[#allocation2 + $0x28] sm:$0xff] %vm24, %v4011
    %4048 = vst.msk [vmem:[#allocation2 + $0x30] sm:$0xff] %vm24, %v4012
    %4049 = vst.msk [vmem:[#allocation2 + $0x38] sm:$0xff] %vm24, %v4013
    %4050 = vst.msk [vmem:[#allocation2 + $0x40] sm:$0xff] %vm24, %v4014
    %4051 = vst.msk [vmem:[#allocation2 + $0x48] sm:$0xff] %vm24, %v4015
    %4052 = vst.msk [vmem:[#allocation2 + $0x50] sm:$0xff] %vm24, %v4016
    %4053 = vst.msk [vmem:[#allocation2 + $0x58] sm:$0xff] %vm24, %v4017
    %4054 = vst.msk [vmem:[#allocation2 + $0x60] sm:$0xff] %vm24, %v4018
    %4055 = vst.msk [vmem:[#allocation2 + $0x68] sm:$0xff] %vm24, %v4019
    %4056 = vst.msk [vmem:[#allocation2 + $0x70] sm:$0xff] %vm24, %v4020
    %4057 = vst.msk [vmem:[#allocation2 + $0x78] sm:$0xff] %vm24, %v4021
    %4058 = vst.msk [vmem:[#allocation2 + $0x80] sm:$0xff] %vm24, %v4022
    %4059 = vst.msk [vmem:[#allocation2 + $0x88] sm:$0xff] %vm24, %v4023
    %4060 = vst.msk [vmem:[#allocation2 + $0x90] sm:$0xff] %vm24, %v4024
    %4061 = vst.msk [vmem:[#allocation2 + $0x98] sm:$0xff] %vm24, %v4025
    %4062 = vst.msk [vmem:[#allocation2 + $0xa0] sm:$0xff] %vm24, %v4026
    %4063 = vst.msk [vmem:[#allocation2 + $0xa8] sm:$0xff] %vm24, %v4027
    %4064 = vst.msk [vmem:[#allocation2 + $0xb0] sm:$0xff] %vm24, %v4028
    %4065 = vst.msk [vmem:[#allocation2 + $0xb8] sm:$0xff] %vm24, %v4029
    %4066 = vst.msk [vmem:[#allocation2 + $0xc0] sm:$0xff] %vm24, %v4030
    %4067 = vst.msk [vmem:[#allocation2 + $0xc8] sm:$0xff] %vm24, %v4031
    %4068 = vst.msk [vmem:[#allocation2 + $0xd0] sm:$0xff] %vm24, %v4032
    %4069 = vst.msk [vmem:[#allocation2 + $0xd8] sm:$0xff] %vm24, %v4033
    %4070 = vst.msk [vmem:[#allocation2 + $0xe0] sm:$0xff] %vm24, %v4034
    %4071 = vst.msk [vmem:[#allocation2 + $0xe8] sm:$0xff] %vm24, %v4035
    %4072 = vst.msk [vmem:[#allocation2 + $0xf0] sm:$0xff] %vm24, %v4036
    %4073 = vst.msk [vmem:[#allocation2 + $0xf8] sm:$0xff] %vm24, %v4037
    %4074 = vst.msk [vmem:[#allocation2 + $0x100] sm:$0xff] %vm24, %v4038
    %4075 = vst.msk [vmem:[#allocation2 + $0x108] sm:$0xff] %vm24, %v4039
    %4076 = vst.msk [vmem:[#allocation2 + $0x110] sm:$0xff] %vm24, %v4040
    %4077 = vst.msk [vmem:[#allocation2 + $0x118] sm:$0xff] %vm24, %v4041
    %v4078 = vld [vmem:[%s0 + $0x26] sm:$0xff]
    %v4079 = vld [vmem:[%s0 + $0x2e] sm:$0xff]
    %v4080 = vld [vmem:[%s0 + $0x36] sm:$0xff]
    %v4081 = vld [vmem:[%s0 + $0x3e] sm:$0xff]
    %v4082 = vld [vmem:[%s0 + $0x46] sm:$0xff]
    %v4083 = vld [vmem:[%s0 + $0x4e] sm:$0xff]
    %v4084 = vld [vmem:[%s0 + $0x56] sm:$0xff]
    %v4085 = vld [vmem:[%s0 + $0x5e] sm:$0xff]
    %v4086 = vld [vmem:[%s0 + $0x66] sm:$0xff]
    %v4087 = vld [vmem:[%s0 + $0x6e] sm:$0xff]
    %v4088 = vld [vmem:[%s0 + $0x76] sm:$0xff]
    %v4089 = vld [vmem:[%s0 + $0x7e] sm:$0xff]
    %v4090 = vld [vmem:[%s0 + $0x86] sm:$0xff]
    %v4091 = vld [vmem:[%s0 + $0x8e] sm:$0xff]
    %v4092 = vld [vmem:[%s0 + $0x96] sm:$0xff]
    %v4093 = vld [vmem:[%s0 + $0x9e] sm:$0xff]
    %v4094 = vld [vmem:[%s0 + $0xa6] sm:$0xff]
    %v4095 = vld [vmem:[%s0 + $0xae] sm:$0xff]
    %v4096 = vld [vmem:[%s0 + $0xb6] sm:$0xff]
    %v4097 = vld [vmem:[%s0 + $0xbe] sm:$0xff]
    %v4098 = vld [vmem:[%s0 + $0xc6] sm:$0xff]
    %v4099 = vld [vmem:[%s0 + $0xce] sm:$0xff]
    %v4100 = vld [vmem:[%s0 + $0xd6] sm:$0xff]
    %v4101 = vld [vmem:[%s0 + $0xde] sm:$0xff]
    %v4102 = vld [vmem:[%s0 + $0xe6] sm:$0xff]
    %v4103 = vld [vmem:[%s0 + $0xee] sm:$0xff]
    %v4104 = vld [vmem:[%s0 + $0xf6] sm:$0xff]
    %v4105 = vld [vmem:[%s0 + $0xfe] sm:$0xff]
    %v4106 = vld [vmem:[%s0 + $0x106] sm:$0xff]
    %v4107 = vld [vmem:[%s0 + $0x10e] sm:$0xff]
    %v4108 = vld [vmem:[%s0 + $0x116] sm:$0xff]
    %v4109 = vld [vmem:[%s0 + $0x11e] sm:$0xff]
    %v4110 = vld [vmem:[%s0 + $0x126] sm:$0xff]
    %v4111 = vld [vmem:[%s0 + $0x12e] sm:$0xff]
    %v4112 = vld [vmem:[%s0 + $0x136] sm:$0xff]
    %v4113 = vld [vmem:[%s0 + $0x13e] sm:$0xff]
    %v4114 = vld [vmem:[#allocation2] sm:$0xff]
    %v4115 = vld [vmem:[#allocation2 + $0x8] sm:$0xff]
    %v4116 = vld [vmem:[#allocation2 + $0x10] sm:$0xff]
    %v4117 = vld [vmem:[#allocation2 + $0x18] sm:$0xff]
    %v4118 = vld [vmem:[#allocation2 + $0x20] sm:$0xff]
    %v4119 = vld [vmem:[#allocation2 + $0x28] sm:$0xff]
    %v4120 = vld [vmem:[#allocation2 + $0x30] sm:$0xff]
    %v4121 = vld [vmem:[#allocation2 + $0x38] sm:$0xff]
    %v4122 = vld [vmem:[#allocation2 + $0x40] sm:$0xff]
    %v4123 = vld [vmem:[#allocation2 + $0x48] sm:$0xff]
    %v4124 = vld [vmem:[#allocation2 + $0x50] sm:$0xff]
    %v4125 = vld [vmem:[#allocation2 + $0x58] sm:$0xff]
    %v4126 = vld [vmem:[#allocation2 + $0x60] sm:$0xff]
    %v4127 = vld [vmem:[#allocation2 + $0x68] sm:$0xff]
    %v4128 = vld [vmem:[#allocation2 + $0x70] sm:$0xff]
    %v4129 = vld [vmem:[#allocation2 + $0x78] sm:$0xff]
    %v4130 = vld [vmem:[#allocation2 + $0x80] sm:$0xff]
    %v4131 = vld [vmem:[#allocation2 + $0x88] sm:$0xff]
    %v4132 = vld [vmem:[#allocation2 + $0x90] sm:$0xff]
    %v4133 = vld [vmem:[#allocation2 + $0x98] sm:$0xff]
    %v4134 = vld [vmem:[#allocation2 + $0xa0] sm:$0xff]
    %v4135 = vld [vmem:[#allocation2 + $0xa8] sm:$0xff]
    %v4136 = vld [vmem:[#allocation2 + $0xb0] sm:$0xff]
    %v4137 = vld [vmem:[#allocation2 + $0xb8] sm:$0xff]
    %v4138 = vld [vmem:[#allocation2 + $0xc0] sm:$0xff]
    %v4139 = vld [vmem:[#allocation2 + $0xc8] sm:$0xff]
    %v4140 = vld [vmem:[#allocation2 + $0xd0] sm:$0xff]
    %v4141 = vld [vmem:[#allocation2 + $0xd8] sm:$0xff]
    %v4142 = vld [vmem:[#allocation2 + $0xe0] sm:$0xff]
    %v4143 = vld [vmem:[#allocation2 + $0xe8] sm:$0xff]
    %v4144 = vld [vmem:[#allocation2 + $0xf0] sm:$0xff]
    %v4145 = vld [vmem:[#allocation2 + $0xf8] sm:$0xff]
    %v4146 = vld [vmem:[#allocation2 + $0x100] sm:$0xff]
    %v4147 = vld [vmem:[#allocation2 + $0x108] sm:$0xff]
    %v4148 = vld [vmem:[#allocation2 + $0x110] sm:$0xff]
    %v4149 = vld [vmem:[#allocation2 + $0x118] sm:$0xff]
    %s4150 = scalar_lea.vmem %s1, 32
    %v4151 = vld [vmem:[%s4150] sm:$0xf]
    %v4153 = vsel %vm134, %v4078, 0
    %v4156 = vsel %vm134, %v4079, 0
    %v4159 = vsel %vm134, %v4080, 0
    %v4162 = vsel %vm134, %v4081, 0
    %v4165 = vsel %vm134, %v4082, 0
    %v4168 = vsel %vm134, %v4083, 0
    %v4171 = vsel %vm134, %v4084, 0
    %v4174 = vsel %vm134, %v4085, 0
    %v4177 = vsel %vm134, %v4086, 0
    %v4180 = vsel %vm134, %v4087, 0
    %v4183 = vsel %vm134, %v4088, 0
    %v4186 = vsel %vm134, %v4089, 0
    %v4189 = vsel %vm134, %v4090, 0
    %v4192 = vsel %vm134, %v4091, 0
    %v4195 = vsel %vm134, %v4092, 0
    %v4198 = vsel %vm134, %v4093, 0
    %v4201 = vsel %vm134, %v4094, 0
    %v4204 = vsel %vm134, %v4095, 0
    %v4207 = vsel %vm134, %v4096, 0
    %v4210 = vsel %vm134, %v4097, 0
    %v4213 = vsel %vm134, %v4098, 0
    %v4216 = vsel %vm134, %v4099, 0
    %v4219 = vsel %vm134, %v4100, 0
    %v4222 = vsel %vm134, %v4101, 0
    %v4225 = vsel %vm134, %v4102, 0
    %v4228 = vsel %vm134, %v4103, 0
    %v4231 = vsel %vm134, %v4104, 0
    %v4234 = vsel %vm134, %v4105, 0
    %v4237 = vsel %vm134, %v4106, 0
    %v4240 = vsel %vm134, %v4107, 0
    %v4243 = vsel %vm134, %v4108, 0
    %v4246 = vsel %vm134, %v4109, 0
    %v4249 = vsel %vm134, %v4110, 0
    %v4252 = vsel %vm134, %v4111, 0
    %v4255 = vsel %vm134, %v4112, 0
    %v4258 = vsel %vm134, %v4113, 0
    %v4261 = vsel %vm243, %v4151, 0
    %4263 = vmatprep.subr.mxu0 0.0
    %4264 = vmatpush1.msra.mxu0 %v4261
    %4265 = vmatprep.subr.mxu0 0.0
    %4266 = vmatpush1.msra.mxu0 0.0
    %4267 = vmatprep.subr.mxu0 0.0
    %4268 = vmatpush1.msra.mxu0 0.0
    %4269 = vmatprep.subr.mxu0 0.0
    %4270 = vmatpush1.msra.mxu0 0.0
    %4271 = vmatprep.subr.mxu0 0.0
    %4272 = vmatpush1.msra.mxu0 0.0
    %4273 = vmatprep.subr.mxu0 0.0
    %4274 = vmatpush1.msra.mxu0 0.0
    %4275 = vmatprep.subr.mxu0 0.0
    %4276 = vmatpush1.msra.mxu0 0.0
    %4277 = vmatprep.subr.mxu0 0.0
    %4278 = vmatpush1.msra.mxu0 0.0
    %4279 = vmatprep.subr.mxu0 0.0
    %4280 = vmatpush1.msra.mxu0 0.0
    %4281 = vmatprep.subr.mxu0 0.0
    %4282 = vmatpush1.msra.mxu0 0.0
    %4283 = vmatprep.subr.mxu0 0.0
    %4284 = vmatpush1.msra.mxu0 0.0
    %4285 = vmatprep.subr.mxu0 0.0
    %4286 = vmatpush1.msra.mxu0 0.0
    %4287 = vmatprep.subr.mxu0 0.0
    %4288 = vmatpush1.msra.mxu0 0.0
    %4289 = vmatprep.subr.mxu0 0.0
    %4290 = vmatpush1.msra.mxu0 0.0
    %4291 = vmatprep.subr.mxu0 0.0
    %4292 = vmatpush1.msra.mxu0 0.0
    %4293 = vmatprep.subr.mxu0 0.0
    %4294 = vmatpush1.msra.mxu0 0.0
    %4295 = vmatprep.subr.mxu0 0.0
    %4296 = vmatpush1.msra.mxu0 0.0
    %4297 = vmatprep.subr.mxu0 0.0
    %4298 = vmatpush1.msra.mxu0 0.0
    %4299 = vmatprep.subr.mxu0 0.0
    %4300 = vmatpush1.msra.mxu0 0.0
    %4301 = vmatprep.subr.mxu0 0.0
    %4302 = vmatpush1.msra.mxu0 0.0
    %4303 = vmatprep.subr.mxu0 0.0
    %4304 = vmatpush1.msra.mxu0 0.0
    %4305 = vmatprep.subr.mxu0 0.0
    %4306 = vmatpush1.msra.mxu0 0.0
    %4307 = vmatprep.subr.mxu0 0.0
    %4308 = vmatpush1.msra.mxu0 0.0
    %4309 = vmatprep.subr.mxu0 0.0
    %4310 = vmatpush1.msra.mxu0 0.0
    %4311 = vmatprep.subr.mxu0 0.0
    %4312 = vmatpush1.msra.mxu0 0.0
    %4313 = vmatprep.subr.mxu0 0.0
    %4314 = vmatpush1.msra.mxu0 0.0
    %4315 = vmatprep.subr.mxu0 0.0
    %4316 = vmatpush1.msra.mxu0 0.0
    %4317 = vmatprep.subr.mxu0 0.0
    %4318 = vmatpush1.msra.mxu0 0.0
    %4319 = vmatprep.subr.mxu0 0.0
    %4320 = vmatpush1.msra.mxu0 0.0
    %4321 = vmatprep.subr.mxu0 0.0
    %4322 = vmatpush1.msra.mxu0 0.0
    %4323 = vmatprep.subr.mxu0 0.0
    %4324 = vmatpush1.msra.mxu0 0.0
    %4325 = vmatprep.subr.mxu0 0.0
    %4326 = vmatpush1.msra.mxu0 0.0
    %4327 = vmatprep.mubr.f32.mxu0 0.0
    %4328 = vmatmul.mubr.f32.gmra.mrb[0].mxu0 %v4153
    %v4329 = vpop.f32.mrb[0].mxu0
    %v4330 = vadd.f32 0.0, %v4329
    %v4331 = vpop.f32.mrb[0].mxu0
    %4332 = vmatprep.mubr.f32.mxu0 0.0
    %4333 = vmatmul.mubr.f32.gmra.mrb[0].mxu0 %v4156
    %v4334 = vpop.f32.mrb[0].mxu0
    %v4335 = vadd.f32 0.0, %v4334
    %v4336 = vpop.f32.mrb[0].mxu0
    %4337 = vmatprep.mubr.f32.mxu0 0.0
    %4338 = vmatmul.mubr.f32.gmra.mrb[0].mxu0 %v4159
    %v4339 = vpop.f32.mrb[0].mxu0
    %v4340 = vadd.f32 0.0, %v4339
    %v4341 = vpop.f32.mrb[0].mxu0
    %4342 = vmatprep.mubr.f32.mxu0 0.0
    %4343 = vmatmul.mubr.f32.gmra.mrb[0].mxu0 %v4162
    %v4344 = vpop.f32.mrb[0].mxu0
    %v4345 = vadd.f32 0.0, %v4344
    %v4346 = vpop.f32.mrb[0].mxu0
    %4347 = vmatprep.mubr.f32.mxu0 0.0
    %4348 = vmatmul.mubr.f32.gmra.mrb[0].mxu0 %v4165
    %v4349 = vpop.f32.mrb[0].mxu0
    %v4350 = vadd.f32 0.0, %v4349
    %v4351 = vpop.f32.mrb[0].mxu0
    %4352 = vmatprep.mubr.f32.mxu0 0.0
    %4353 = vmatmul.mubr.f32.gmra.mrb[0].mxu0 %v4168
    %v4354 = vpop.f32.mrb[0].mxu0
    %v4355 = vadd.f32 0.0, %v4354
    %v4356 = vpop.f32.mrb[0].mxu0
    %4357 = vmatprep.mubr.f32.mxu0 0.0
    %4358 = vmatmul.mubr.f32.gmra.mrb[0].mxu0 %v4171
    %v4359 = vpop.f32.mrb[0].mxu0
    %v4360 = vadd.f32 0.0, %v4359
    %v4361 = vpop.f32.mrb[0].mxu0
    %4362 = vmatprep.mubr.f32.mxu0 0.0
    %4363 = vmatmul.mubr.f32.gmra.mrb[0].mxu0 %v4174
    %v4364 = vpop.f32.mrb[0].mxu0
    %v4365 = vadd.f32 0.0, %v4364
    %v4366 = vpop.f32.mrb[0].mxu0
    %4367 = vmatprep.mubr.f32.mxu0 0.0
    %4368 = vmatmul.mubr.f32.gmra.mrb[0].mxu0 %v4177
    %v4369 = vpop.f32.mrb[0].mxu0
    %v4370 = vadd.f32 0.0, %v4369
    %v4371 = vpop.f32.mrb[0].mxu0
    %4372 = vmatprep.mubr.f32.mxu0 0.0
    %4373 = vmatmul.mubr.f32.gmra.mrb[0].mxu0 %v4180
    %v4374 = vpop.f32.mrb[0].mxu0
    %v4375 = vadd.f32 0.0, %v4374
    %v4376 = vpop.f32.mrb[0].mxu0
    %4377 = vmatprep.mubr.f32.mxu0 0.0
    %4378 = vmatmul.mubr.f32.gmra.mrb[0].mxu0 %v4183
    %v4379 = vpop.f32.mrb[0].mxu0
    %v4380 = vadd.f32 0.0, %v4379
    %v4381 = vpop.f32.mrb[0].mxu0
    %4382 = vmatprep.mubr.f32.mxu0 0.0
    %4383 = vmatmul.mubr.f32.gmra.mrb[0].mxu0 %v4186
    %v4384 = vpop.f32.mrb[0].mxu0
    %v4385 = vadd.f32 0.0, %v4384
    %v4386 = vpop.f32.mrb[0].mxu0
    %4387 = vmatprep.mubr.f32.mxu0 0.0
    %4388 = vmatmul.mubr.f32.gmra.mrb[0].mxu0 %v4189
    %v4389 = vpop.f32.mrb[0].mxu0
    %v4390 = vadd.f32 0.0, %v4389
    %v4391 = vpop.f32.mrb[0].mxu0
    %4392 = vmatprep.mubr.f32.mxu0 0.0
    %4393 = vmatmul.mubr.f32.gmra.mrb[0].mxu0 %v4192
    %v4394 = vpop.f32.mrb[0].mxu0
    %v4395 = vadd.f32 0.0, %v4394
    %v4396 = vpop.f32.mrb[0].mxu0
    %4397 = vmatprep.mubr.f32.mxu0 0.0
    %4398 = vmatmul.mubr.f32.gmra.mrb[0].mxu0 %v4195
    %v4399 = vpop.f32.mrb[0].mxu0
    %v4400 = vadd.f32 0.0, %v4399
    %v4401 = vpop.f32.mrb[0].mxu0
    %4402 = vmatprep.mubr.f32.mxu0 0.0
    %4403 = vmatmul.mubr.f32.gmra.mrb[0].mxu0 %v4198
    %v4404 = vpop.f32.mrb[0].mxu0
    %v4405 = vadd.f32 0.0, %v4404
    %v4406 = vpop.f32.mrb[0].mxu0
    %4407 = vmatprep.mubr.f32.mxu0 0.0
    %4408 = vmatmul.mubr.f32.gmra.mrb[0].mxu0 %v4201
    %v4409 = vpop.f32.mrb[0].mxu0
    %v4410 = vadd.f32 0.0, %v4409
    %v4411 = vpop.f32.mrb[0].mxu0
    %4412 = vmatprep.mubr.f32.mxu0 0.0
    %4413 = vmatmul.mubr.f32.gmra.mrb[0].mxu0 %v4204
    %v4414 = vpop.f32.mrb[0].mxu0
    %v4415 = vadd.f32 0.0, %v4414
    %v4416 = vpop.f32.mrb[0].mxu0
    %4417 = vmatprep.mubr.f32.mxu0 0.0
    %4418 = vmatmul.mubr.f32.gmra.mrb[0].mxu0 %v4207
    %v4419 = vpop.f32.mrb[0].mxu0
    %v4420 = vadd.f32 0.0, %v4419
    %v4421 = vpop.f32.mrb[0].mxu0
    %4422 = vmatprep.mubr.f32.mxu0 0.0
    %4423 = vmatmul.mubr.f32.gmra.mrb[0].mxu0 %v4210
    %v4424 = vpop.f32.mrb[0].mxu0
    %v4425 = vadd.f32 0.0, %v4424
    %v4426 = vpop.f32.mrb[0].mxu0
    %4427 = vmatprep.mubr.f32.mxu0 0.0
    %4428 = vmatmul.mubr.f32.gmra.mrb[0].mxu0 %v4213
    %v4429 = vpop.f32.mrb[0].mxu0
    %v4430 = vadd.f32 0.0, %v4429
    %v4431 = vpop.f32.mrb[0].mxu0
    %4432 = vmatprep.mubr.f32.mxu0 0.0
    %4433 = vmatmul.mubr.f32.gmra.mrb[0].mxu0 %v4216
    %v4434 = vpop.f32.mrb[0].mxu0
    %v4435 = vadd.f32 0.0, %v4434
    %v4436 = vpop.f32.mrb[0].mxu0
    %4437 = vmatprep.mubr.f32.mxu0 0.0
    %4438 = vmatmul.mubr.f32.gmra.mrb[0].mxu0 %v4219
    %v4439 = vpop.f32.mrb[0].mxu0
    %v4440 = vadd.f32 0.0, %v4439
    %v4441 = vpop.f32.mrb[0].mxu0
    %4442 = vmatprep.mubr.f32.mxu0 0.0
    %4443 = vmatmul.mubr.f32.gmra.mrb[0].mxu0 %v4222
    %v4444 = vpop.f32.mrb[0].mxu0
    %v4445 = vadd.f32 0.0, %v4444
    %v4446 = vpop.f32.mrb[0].mxu0
    %4447 = vmatprep.mubr.f32.mxu0 0.0
    %4448 = vmatmul.mubr.f32.gmra.mrb[0].mxu0 %v4225
    %v4449 = vpop.f32.mrb[0].mxu0
    %v4450 = vadd.f32 0.0, %v4449
    %v4451 = vpop.f32.mrb[0].mxu0
    %4452 = vmatprep.mubr.f32.mxu0 0.0
    %4453 = vmatmul.mubr.f32.gmra.mrb[0].mxu0 %v4228
    %v4454 = vpop.f32.mrb[0].mxu0
    %v4455 = vadd.f32 0.0, %v4454
    %v4456 = vpop.f32.mrb[0].mxu0
    %4457 = vmatprep.mubr.f32.mxu0 0.0
    %4458 = vmatmul.mubr.f32.gmra.mrb[0].mxu0 %v4231
    %v4459 = vpop.f32.mrb[0].mxu0
    %v4460 = vadd.f32 0.0, %v4459
    %v4461 = vpop.f32.mrb[0].mxu0
    %4462 = vmatprep.mubr.f32.mxu0 0.0
    %4463 = vmatmul.mubr.f32.gmra.mrb[0].mxu0 %v4234
    %v4464 = vpop.f32.mrb[0].mxu0
    %v4465 = vadd.f32 0.0, %v4464
    %v4466 = vpop.f32.mrb[0].mxu0
    %4467 = vmatprep.mubr.f32.mxu0 0.0
    %4468 = vmatmul.mubr.f32.gmra.mrb[0].mxu0 %v4237
    %v4469 = vpop.f32.mrb[0].mxu0
    %v4470 = vadd.f32 0.0, %v4469
    %v4471 = vpop.f32.mrb[0].mxu0
    %4472 = vmatprep.mubr.f32.mxu0 0.0
    %4473 = vmatmul.mubr.f32.gmra.mrb[0].mxu0 %v4240
    %v4474 = vpop.f32.mrb[0].mxu0
    %v4475 = vadd.f32 0.0, %v4474
    %v4476 = vpop.f32.mrb[0].mxu0
    %4477 = vmatprep.mubr.f32.mxu0 0.0
    %4478 = vmatmul.mubr.f32.gmra.mrb[0].mxu0 %v4243
    %v4479 = vpop.f32.mrb[0].mxu0
    %v4480 = vadd.f32 0.0, %v4479
    %v4481 = vpop.f32.mrb[0].mxu0
    %4482 = vmatprep.mubr.f32.mxu0 0.0
    %4483 = vmatmul.mubr.f32.gmra.mrb[0].mxu0 %v4246
    %v4484 = vpop.f32.mrb[0].mxu0
    %v4485 = vadd.f32 0.0, %v4484
    %v4486 = vpop.f32.mrb[0].mxu0
    %4487 = vmatprep.mubr.f32.mxu0 0.0
    %4488 = vmatmul.mubr.f32.gmra.mrb[0].mxu0 %v4249
    %v4489 = vpop.f32.mrb[0].mxu0
    %v4490 = vadd.f32 0.0, %v4489
    %v4491 = vpop.f32.mrb[0].mxu0
    %4492 = vmatprep.mubr.f32.mxu0 0.0
    %4493 = vmatmul.mubr.f32.gmra.mrb[0].mxu0 %v4252
    %v4494 = vpop.f32.mrb[0].mxu0
    %v4495 = vadd.f32 0.0, %v4494
    %v4496 = vpop.f32.mrb[0].mxu0
    %4497 = vmatprep.mubr.f32.mxu0 0.0
    %4498 = vmatmul.mubr.f32.gmra.mrb[0].mxu0 %v4255
    %v4499 = vpop.f32.mrb[0].mxu0
    %v4500 = vadd.f32 0.0, %v4499
    %v4501 = vpop.f32.mrb[0].mxu0
    %4502 = vmatprep.mubr.f32.mxu0 0.0
    %4503 = vmatmul.mubr.f32.gmra.mrb[0].mxu0 %v4258
    %v4504 = vpop.f32.mrb[0].mxu0
    %v4505 = vadd.f32 0.0, %v4504
    %v4506 = vpop.f32.mrb[0].mxu0
    %4507 = vdwg.mxu0
    %v4508 = vadd.f32 %v4114, %v4330
    %v4509 = vadd.f32 %v4115, %v4335
    %v4510 = vadd.f32 %v4116, %v4340
    %v4511 = vadd.f32 %v4117, %v4345
    %v4512 = vadd.f32 %v4118, %v4350
    %v4513 = vadd.f32 %v4119, %v4355
    %v4514 = vadd.f32 %v4120, %v4360
    %v4515 = vadd.f32 %v4121, %v4365
    %v4516 = vadd.f32 %v4122, %v4370
    %v4517 = vadd.f32 %v4123, %v4375
    %v4518 = vadd.f32 %v4124, %v4380
    %v4519 = vadd.f32 %v4125, %v4385
    %v4520 = vadd.f32 %v4126, %v4390
    %v4521 = vadd.f32 %v4127, %v4395
    %v4522 = vadd.f32 %v4128, %v4400
    %v4523 = vadd.f32 %v4129, %v4405
    %v4524 = vadd.f32 %v4130, %v4410
    %v4525 = vadd.f32 %v4131, %v4415
    %v4526 = vadd.f32 %v4132, %v4420
    %v4527 = vadd.f32 %v4133, %v4425
    %v4528 = vadd.f32 %v4134, %v4430
    %v4529 = vadd.f32 %v4135, %v4435
    %v4530 = vadd.f32 %v4136, %v4440
    %v4531 = vadd.f32 %v4137, %v4445
    %v4532 = vadd.f32 %v4138, %v4450
    %v4533 = vadd.f32 %v4139, %v4455
    %v4534 = vadd.f32 %v4140, %v4460
    %v4535 = vadd.f32 %v4141, %v4465
    %v4536 = vadd.f32 %v4142, %v4470
    %v4537 = vadd.f32 %v4143, %v4475
    %v4538 = vadd.f32 %v4144, %v4480
    %v4539 = vadd.f32 %v4145, %v4485
    %v4540 = vadd.f32 %v4146, %v4490
    %v4541 = vadd.f32 %v4147, %v4495
    %v4542 = vadd.f32 %v4148, %v4500
    %v4543 = vadd.f32 %v4149, %v4505
    %4544 = vst.msk [vmem:[#allocation2] sm:$0xff] %vm24, %v4508
    %4545 = vst.msk [vmem:[#allocation2 + $0x8] sm:$0xff] %vm24, %v4509
    %4546 = vst.msk [vmem:[#allocation2 + $0x10] sm:$0xff] %vm24, %v4510
    %4547 = vst.msk [vmem:[#allocation2 + $0x18] sm:$0xff] %vm24, %v4511
    %4548 = vst.msk [vmem:[#allocation2 + $0x20] sm:$0xff] %vm24, %v4512
    %4549 = vst.msk [vmem:[#allocation2 + $0x28] sm:$0xff] %vm24, %v4513
    %4550 = vst.msk [vmem:[#allocation2 + $0x30] sm:$0xff] %vm24, %v4514
    %4551 = vst.msk [vmem:[#allocation2 + $0x38] sm:$0xff] %vm24, %v4515
    %4552 = vst.msk [vmem:[#allocation2 + $0x40] sm:$0xff] %vm24, %v4516
    %4553 = vst.msk [vmem:[#allocation2 + $0x48] sm:$0xff] %vm24, %v4517
    %4554 = vst.msk [vmem:[#allocation2 + $0x50] sm:$0xff] %vm24, %v4518
    %4555 = vst.msk [vmem:[#allocation2 + $0x58] sm:$0xff] %vm24, %v4519
    %4556 = vst.msk [vmem:[#allocation2 + $0x60] sm:$0xff] %vm24, %v4520
    %4557 = vst.msk [vmem:[#allocation2 + $0x68] sm:$0xff] %vm24, %v4521
    %4558 = vst.msk [vmem:[#allocation2 + $0x70] sm:$0xff] %vm24, %v4522
    %4559 = vst.msk [vmem:[#allocation2 + $0x78] sm:$0xff] %vm24, %v4523
    %4560 = vst.msk [vmem:[#allocation2 + $0x80] sm:$0xff] %vm24, %v4524
    %4561 = vst.msk [vmem:[#allocation2 + $0x88] sm:$0xff] %vm24, %v4525
    %4562 = vst.msk [vmem:[#allocation2 + $0x90] sm:$0xff] %vm24, %v4526
    %4563 = vst.msk [vmem:[#allocation2 + $0x98] sm:$0xff] %vm24, %v4527
    %4564 = vst.msk [vmem:[#allocation2 + $0xa0] sm:$0xff] %vm24, %v4528
    %4565 = vst.msk [vmem:[#allocation2 + $0xa8] sm:$0xff] %vm24, %v4529
    %4566 = vst.msk [vmem:[#allocation2 + $0xb0] sm:$0xff] %vm24, %v4530
    %4567 = vst.msk [vmem:[#allocation2 + $0xb8] sm:$0xff] %vm24, %v4531
    %4568 = vst.msk [vmem:[#allocation2 + $0xc0] sm:$0xff] %vm24, %v4532
    %4569 = vst.msk [vmem:[#allocation2 + $0xc8] sm:$0xff] %vm24, %v4533
    %4570 = vst.msk [vmem:[#allocation2 + $0xd0] sm:$0xff] %vm24, %v4534
    %4571 = vst.msk [vmem:[#allocation2 + $0xd8] sm:$0xff] %vm24, %v4535
    %4572 = vst.msk [vmem:[#allocation2 + $0xe0] sm:$0xff] %vm24, %v4536
    %4573 = vst.msk [vmem:[#allocation2 + $0xe8] sm:$0xff] %vm24, %v4537
    %4574 = vst.msk [vmem:[#allocation2 + $0xf0] sm:$0xff] %vm24, %v4538
    %4575 = vst.msk [vmem:[#allocation2 + $0xf8] sm:$0xff] %vm24, %v4539
    %4576 = vst.msk [vmem:[#allocation2 + $0x100] sm:$0xff] %vm24, %v4540
    %4577 = vst.msk [vmem:[#allocation2 + $0x108] sm:$0xff] %vm24, %v4541
    %4578 = vst.msk [vmem:[#allocation2 + $0x110] sm:$0xff] %vm24, %v4542
    %4579 = vst.msk [vmem:[#allocation2 + $0x118] sm:$0xff] %vm24, %v4543
    %v4580 = vld [vmem:[#allocation2] sm:$0xff]
    %v4581 = vld [vmem:[#allocation2 + $0x8] sm:$0xff]
    %v4582 = vld [vmem:[#allocation2 + $0x10] sm:$0xff]
    %v4583 = vld [vmem:[#allocation2 + $0x18] sm:$0xff]
    %v4584 = vld [vmem:[#allocation2 + $0x20] sm:$0xff]
    %v4585 = vld [vmem:[#allocation2 + $0x28] sm:$0xff]
    %v4586 = vld [vmem:[#allocation2 + $0x30] sm:$0xff]
    %v4587 = vld [vmem:[#allocation2 + $0x38] sm:$0xff]
    %v4588 = vld [vmem:[#allocation2 + $0x40] sm:$0xff]
    %v4589 = vld [vmem:[#allocation2 + $0x48] sm:$0xff]
    %v4590 = vld [vmem:[#allocation2 + $0x50] sm:$0xff]
    %v4591 = vld [vmem:[#allocation2 + $0x58] sm:$0xff]
    %v4592 = vld [vmem:[#allocation2 + $0x60] sm:$0xff]
    %v4593 = vld [vmem:[#allocation2 + $0x68] sm:$0xff]
    %v4594 = vld [vmem:[#allocation2 + $0x70] sm:$0xff]
    %v4595 = vld [vmem:[#allocation2 + $0x78] sm:$0xff]
    %v4596 = vld [vmem:[#allocation2 + $0x80] sm:$0xff]
    %v4597 = vld [vmem:[#allocation2 + $0x88] sm:$0xff]
    %v4598 = vld [vmem:[#allocation2 + $0x90] sm:$0xff]
    %v4599 = vld [vmem:[#allocation2 + $0x98] sm:$0xff]
    %v4600 = vld [vmem:[#allocation2 + $0xa0] sm:$0xff]
    %v4601 = vld [vmem:[#allocation2 + $0xa8] sm:$0xff]
    %v4602 = vld [vmem:[#allocation2 + $0xb0] sm:$0xff]
    %v4603 = vld [vmem:[#allocation2 + $0xb8] sm:$0xff]
    %v4604 = vld [vmem:[#allocation2 + $0xc0] sm:$0xff]
    %v4605 = vld [vmem:[#allocation2 + $0xc8] sm:$0xff]
    %v4606 = vld [vmem:[#allocation2 + $0xd0] sm:$0xff]
    %v4607 = vld [vmem:[#allocation2 + $0xd8] sm:$0xff]
    %v4608 = vld [vmem:[#allocation2 + $0xe0] sm:$0xff]
    %v4609 = vld [vmem:[#allocation2 + $0xe8] sm:$0xff]
    %v4610 = vld [vmem:[#allocation2 + $0xf0] sm:$0xff]
    %v4611 = vld [vmem:[#allocation2 + $0xf8] sm:$0xff]
    %v4612 = vld [vmem:[#allocation2 + $0x100] sm:$0xff]
    %v4613 = vld [vmem:[#allocation2 + $0x108] sm:$0xff]
    %v4614 = vld [vmem:[#allocation2 + $0x110] sm:$0xff]
    %v4615 = vld [vmem:[#allocation2 + $0x118] sm:$0xff]
    %v4616 = vld [vmem:[%s2] sm:$0x1]
    %v4618 = vlaneseq
    %v4619 = vshrl.u32 %v4618, 7
    %v4620 = vsub.s32 0, %v4619
    %v4621 = vrot.slane %v4616, %v4620
    %v4623 = vadd.f32 %v4580, %v4621
    %v4624 = vadd.f32 %v4581, %v4621
    %v4625 = vadd.f32 %v4582, %v4621
    %v4626 = vadd.f32 %v4583, %v4621
    %v4627 = vadd.f32 %v4584, %v4621
    %v4628 = vadd.f32 %v4585, %v4621
    %v4629 = vadd.f32 %v4586, %v4621
    %v4630 = vadd.f32 %v4587, %v4621
    %v4631 = vadd.f32 %v4588, %v4621
    %v4632 = vadd.f32 %v4589, %v4621
    %v4633 = vadd.f32 %v4590, %v4621
    %v4634 = vadd.f32 %v4591, %v4621
    %v4635 = vadd.f32 %v4592, %v4621
    %v4636 = vadd.f32 %v4593, %v4621
    %v4637 = vadd.f32 %v4594, %v4621
    %v4638 = vadd.f32 %v4595, %v4621
    %v4639 = vadd.f32 %v4596, %v4621
    %v4640 = vadd.f32 %v4597, %v4621
    %v4641 = vadd.f32 %v4598, %v4621
    %v4642 = vadd.f32 %v4599, %v4621
    %v4643 = vadd.f32 %v4600, %v4621
    %v4644 = vadd.f32 %v4601, %v4621
    %v4645 = vadd.f32 %v4602, %v4621
    %v4646 = vadd.f32 %v4603, %v4621
    %v4647 = vadd.f32 %v4604, %v4621
    %v4648 = vadd.f32 %v4605, %v4621
    %v4649 = vadd.f32 %v4606, %v4621
    %v4650 = vadd.f32 %v4607, %v4621
    %v4651 = vadd.f32 %v4608, %v4621
    %v4652 = vadd.f32 %v4609, %v4621
    %v4653 = vadd.f32 %v4610, %v4621
    %v4654 = vadd.f32 %v4611, %v4621
    %v4655 = vadd.f32 %v4612, %v4621
    %v4656 = vadd.f32 %v4613, %v4621
    %v4657 = vadd.f32 %v4614, %v4621
    %v4658 = vadd.f32 %v4615, %v4621
    %v4659 = vmax.f32 %v4623, 0.0
    %v4660 = vmax.f32 %v4624, 0.0
    %v4661 = vmax.f32 %v4625, 0.0
    %v4662 = vmax.f32 %v4626, 0.0
    %v4663 = vmax.f32 %v4627, 0.0
    %v4664 = vmax.f32 %v4628, 0.0
    %v4665 = vmax.f32 %v4629, 0.0
    %v4666 = vmax.f32 %v4630, 0.0
    %v4667 = vmax.f32 %v4631, 0.0
    %v4668 = vmax.f32 %v4632, 0.0
    %v4669 = vmax.f32 %v4633, 0.0
    %v4670 = vmax.f32 %v4634, 0.0
    %v4671 = vmax.f32 %v4635, 0.0
    %v4672 = vmax.f32 %v4636, 0.0
    %v4673 = vmax.f32 %v4637, 0.0
    %v4674 = vmax.f32 %v4638, 0.0
    %v4675 = vmax.f32 %v4639, 0.0
    %v4676 = vmax.f32 %v4640, 0.0
    %v4677 = vmax.f32 %v4641, 0.0
    %v4678 = vmax.f32 %v4642, 0.0
    %v4679 = vmax.f32 %v4643, 0.0
    %v4680 = vmax.f32 %v4644, 0.0
    %v4681 = vmax.f32 %v4645, 0.0
    %v4682 = vmax.f32 %v4646, 0.0
    %v4683 = vmax.f32 %v4647, 0.0
    %v4684 = vmax.f32 %v4648, 0.0
    %v4685 = vmax.f32 %v4649, 0.0
    %v4686 = vmax.f32 %v4650, 0.0
    %v4687 = vmax.f32 %v4651, 0.0
    %v4688 = vmax.f32 %v4652, 0.0
    %v4689 = vmax.f32 %v4653, 0.0
    %v4690 = vmax.f32 %v4654, 0.0
    %v4691 = vmax.f32 %v4655, 0.0
    %v4692 = vmax.f32 %v4656, 0.0
    %v4693 = vmax.f32 %v4657, 0.0
    %v4694 = vmax.f32 %v4658, 0.0
    %v4695 = vld [vmem:[%s3] sm:$0xff]
    %v4696 = vld [vmem:[%s4] sm:$0x1]
    %v4698 = vlaneseq
    %v4699 = vshrl.u32 %v4698, 7
    %v4700 = vsub.s32 0, %v4699
    %v4701 = vrot.slane %v4696, %v4700
    %v4704 = vsel %vm24, %v4659, 0
    %v4707 = vsel %vm24, %v4660, 0
    %v4710 = vsel %vm24, %v4661, 0
    %v4713 = vsel %vm24, %v4662, 0
    %v4716 = vsel %vm24, %v4663, 0
    %v4719 = vsel %vm24, %v4664, 0
    %v4722 = vsel %vm24, %v4665, 0
    %v4725 = vsel %vm24, %v4666, 0
    %v4728 = vsel %vm24, %v4667, 0
    %v4731 = vsel %vm24, %v4668, 0
    %v4734 = vsel %vm24, %v4669, 0
    %v4737 = vsel %vm24, %v4670, 0
    %v4740 = vsel %vm24, %v4671, 0
    %v4743 = vsel %vm24, %v4672, 0
    %v4746 = vsel %vm24, %v4673, 0
    %v4749 = vsel %vm24, %v4674, 0
    %v4752 = vsel %vm24, %v4675, 0
    %v4755 = vsel %vm24, %v4676, 0
    %v4758 = vsel %vm24, %v4677, 0
    %v4761 = vsel %vm24, %v4678, 0
    %v4764 = vsel %vm24, %v4679, 0
    %v4767 = vsel %vm24, %v4680, 0
    %v4770 = vsel %vm24, %v4681, 0
    %v4773 = vsel %vm24, %v4682, 0
    %v4776 = vsel %vm24, %v4683, 0
    %v4779 = vsel %vm24, %v4684, 0
    %v4782 = vsel %vm24, %v4685, 0
    %v4785 = vsel %vm24, %v4686, 0
    %v4788 = vsel %vm24, %v4687, 0
    %v4791 = vsel %vm24, %v4688, 0
    %v4794 = vsel %vm24, %v4689, 0
    %v4797 = vsel %vm24, %v4690, 0
    %v4800 = vsel %vm24, %v4691, 0
    %v4803 = vsel %vm24, %v4692, 0
    %v4806 = vsel %vm24, %v4693, 0
    %v4809 = vsel %vm24, %v4694, 0
    %4811 = vmatprep.subr.mxu0 0.0
    %4812 = vmatpush1.msra.mxu0 %v4695
    %4813 = vmatprep.subr.mxu0 0.0
    %4814 = vmatpush1.msra.mxu0 0.0
    %4815 = vmatprep.subr.mxu0 0.0
    %4816 = vmatpush1.msra.mxu0 0.0
    %4817 = vmatprep.subr.mxu0 0.0
    %4818 = vmatpush1.msra.mxu0 0.0
    %4819 = vmatprep.subr.mxu0 0.0
    %4820 = vmatpush1.msra.mxu0 0.0
    %4821 = vmatprep.subr.mxu0 0.0
    %4822 = vmatpush1.msra.mxu0 0.0
    %4823 = vmatprep.subr.mxu0 0.0
    %4824 = vmatpush1.msra.mxu0 0.0
    %4825 = vmatprep.subr.mxu0 0.0
    %4826 = vmatpush1.msra.mxu0 0.0
    %4827 = vmatprep.subr.mxu0 0.0
    %4828 = vmatpush1.msra.mxu0 0.0
    %4829 = vmatprep.subr.mxu0 0.0
    %4830 = vmatpush1.msra.mxu0 0.0
    %4831 = vmatprep.subr.mxu0 0.0
    %4832 = vmatpush1.msra.mxu0 0.0
    %4833 = vmatprep.subr.mxu0 0.0
    %4834 = vmatpush1.msra.mxu0 0.0
    %4835 = vmatprep.subr.mxu0 0.0
    %4836 = vmatpush1.msra.mxu0 0.0
    %4837 = vmatprep.subr.mxu0 0.0
    %4838 = vmatpush1.msra.mxu0 0.0
    %4839 = vmatprep.subr.mxu0 0.0
    %4840 = vmatpush1.msra.mxu0 0.0
    %4841 = vmatprep.subr.mxu0 0.0
    %4842 = vmatpush1.msra.mxu0 0.0
    %4843 = vmatprep.subr.mxu0 0.0
    %4844 = vmatpush1.msra.mxu0 0.0
    %4845 = vmatprep.subr.mxu0 0.0
    %4846 = vmatpush1.msra.mxu0 0.0
    %4847 = vmatprep.subr.mxu0 0.0
    %4848 = vmatpush1.msra.mxu0 0.0
    %4849 = vmatprep.subr.mxu0 0.0
    %4850 = vmatpush1.msra.mxu0 0.0
    %4851 = vmatprep.subr.mxu0 0.0
    %4852 = vmatpush1.msra.mxu0 0.0
    %4853 = vmatprep.subr.mxu0 0.0
    %4854 = vmatpush1.msra.mxu0 0.0
    %4855 = vmatprep.subr.mxu0 0.0
    %4856 = vmatpush1.msra.mxu0 0.0
    %4857 = vmatprep.subr.mxu0 0.0
    %4858 = vmatpush1.msra.mxu0 0.0
    %4859 = vmatprep.subr.mxu0 0.0
    %4860 = vmatpush1.msra.mxu0 0.0
    %4861 = vmatprep.subr.mxu0 0.0
    %4862 = vmatpush1.msra.mxu0 0.0
    %4863 = vmatprep.subr.mxu0 0.0
    %4864 = vmatpush1.msra.mxu0 0.0
    %4865 = vmatprep.subr.mxu0 0.0
    %4866 = vmatpush1.msra.mxu0 0.0
    %4867 = vmatprep.subr.mxu0 0.0
    %4868 = vmatpush1.msra.mxu0 0.0
    %4869 = vmatprep.subr.mxu0 0.0
    %4870 = vmatpush1.msra.mxu0 0.0
    %4871 = vmatprep.subr.mxu0 0.0
    %4872 = vmatpush1.msra.mxu0 0.0
    %4873 = vmatprep.subr.mxu0 0.0
    %4874 = vmatpush1.msra.mxu0 0.0
    %4875 = vmatprep.mubr.f32.mxu0 0.0
    %4876 = vmatmul.mubr.f32.gmra.mrb[0].mxu0 %v4704
    %v4877 = vpop.f32.mrb[0].mxu0
    %v4878 = vadd.f32 %v4701, %v4877
    %v4879 = vpop.f32.mrb[0].mxu0
    %4880 = vmatprep.mubr.f32.mxu0 0.0
    %4881 = vmatmul.mubr.f32.gmra.mrb[0].mxu0 %v4707
    %v4882 = vpop.f32.mrb[0].mxu0
    %v4883 = vadd.f32 %v4701, %v4882
    %v4884 = vpop.f32.mrb[0].mxu0
    %4885 = vmatprep.mubr.f32.mxu0 0.0
    %4886 = vmatmul.mubr.f32.gmra.mrb[0].mxu0 %v4710
    %v4887 = vpop.f32.mrb[0].mxu0
    %v4888 = vadd.f32 %v4701, %v4887
    %v4889 = vpop.f32.mrb[0].mxu0
    %4890 = vmatprep.mubr.f32.mxu0 0.0
    %4891 = vmatmul.mubr.f32.gmra.mrb[0].mxu0 %v4713
    %v4892 = vpop.f32.mrb[0].mxu0
    %v4893 = vadd.f32 %v4701, %v4892
    %v4894 = vpop.f32.mrb[0].mxu0
    %4895 = vmatprep.mubr.f32.mxu0 0.0
    %4896 = vmatmul.mubr.f32.gmra.mrb[0].mxu0 %v4716
    %v4897 = vpop.f32.mrb[0].mxu0
    %v4898 = vadd.f32 %v4701, %v4897
    %v4899 = vpop.f32.mrb[0].mxu0
    %4900 = vmatprep.mubr.f32.mxu0 0.0
    %4901 = vmatmul.mubr.f32.gmra.mrb[0].mxu0 %v4719
    %v4902 = vpop.f32.mrb[0].mxu0
    %v4903 = vadd.f32 %v4701, %v4902
    %v4904 = vpop.f32.mrb[0].mxu0
    %4905 = vmatprep.mubr.f32.mxu0 0.0
    %4906 = vmatmul.mubr.f32.gmra.mrb[0].mxu0 %v4722
    %v4907 = vpop.f32.mrb[0].mxu0
    %v4908 = vadd.f32 %v4701, %v4907
    %v4909 = vpop.f32.mrb[0].mxu0
    %4910 = vmatprep.mubr.f32.mxu0 0.0
    %4911 = vmatmul.mubr.f32.gmra.mrb[0].mxu0 %v4725
    %v4912 = vpop.f32.mrb[0].mxu0
    %v4913 = vadd.f32 %v4701, %v4912
    %v4914 = vpop.f32.mrb[0].mxu0
    %4915 = vmatprep.mubr.f32.mxu0 0.0
    %4916 = vmatmul.mubr.f32.gmra.mrb[0].mxu0 %v4728
    %v4917 = vpop.f32.mrb[0].mxu0
    %v4918 = vadd.f32 %v4701, %v4917
    %v4919 = vpop.f32.mrb[0].mxu0
    %4920 = vmatprep.mubr.f32.mxu0 0.0
    %4921 = vmatmul.mubr.f32.gmra.mrb[0].mxu0 %v4731
    %v4922 = vpop.f32.mrb[0].mxu0
    %v4923 = vadd.f32 %v4701, %v4922
    %v4924 = vpop.f32.mrb[0].mxu0
    %4925 = vmatprep.mubr.f32.mxu0 0.0
    %4926 = vmatmul.mubr.f32.gmra.mrb[0].mxu0 %v4734
    %v4927 = vpop.f32.mrb[0].mxu0
    %v4928 = vadd.f32 %v4701, %v4927
    %v4929 = vpop.f32.mrb[0].mxu0
    %4930 = vmatprep.mubr.f32.mxu0 0.0
    %4931 = vmatmul.mubr.f32.gmra.mrb[0].mxu0 %v4737
    %v4932 = vpop.f32.mrb[0].mxu0
    %v4933 = vadd.f32 %v4701, %v4932
    %v4934 = vpop.f32.mrb[0].mxu0
    %4935 = vmatprep.mubr.f32.mxu0 0.0
    %4936 = vmatmul.mubr.f32.gmra.mrb[0].mxu0 %v4740
    %v4937 = vpop.f32.mrb[0].mxu0
    %v4938 = vadd.f32 %v4701, %v4937
    %v4939 = vpop.f32.mrb[0].mxu0
    %4940 = vmatprep.mubr.f32.mxu0 0.0
    %4941 = vmatmul.mubr.f32.gmra.mrb[0].mxu0 %v4743
    %v4942 = vpop.f32.mrb[0].mxu0
    %v4943 = vadd.f32 %v4701, %v4942
    %v4944 = vpop.f32.mrb[0].mxu0
    %4945 = vmatprep.mubr.f32.mxu0 0.0
    %4946 = vmatmul.mubr.f32.gmra.mrb[0].mxu0 %v4746
    %v4947 = vpop.f32.mrb[0].mxu0
    %v4948 = vadd.f32 %v4701, %v4947
    %v4949 = vpop.f32.mrb[0].mxu0
    %4950 = vmatprep.mubr.f32.mxu0 0.0
    %4951 = vmatmul.mubr.f32.gmra.mrb[0].mxu0 %v4749
    %v4952 = vpop.f32.mrb[0].mxu0
    %v4953 = vadd.f32 %v4701, %v4952
    %v4954 = vpop.f32.mrb[0].mxu0
    %4955 = vmatprep.mubr.f32.mxu0 0.0
    %4956 = vmatmul.mubr.f32.gmra.mrb[0].mxu0 %v4752
    %v4957 = vpop.f32.mrb[0].mxu0
    %v4958 = vadd.f32 %v4701, %v4957
    %v4959 = vpop.f32.mrb[0].mxu0
    %4960 = vmatprep.mubr.f32.mxu0 0.0
    %4961 = vmatmul.mubr.f32.gmra.mrb[0].mxu0 %v4755
    %v4962 = vpop.f32.mrb[0].mxu0
    %v4963 = vadd.f32 %v4701, %v4962
    %v4964 = vpop.f32.mrb[0].mxu0
    %4965 = vmatprep.mubr.f32.mxu0 0.0
    %4966 = vmatmul.mubr.f32.gmra.mrb[0].mxu0 %v4758
    %v4967 = vpop.f32.mrb[0].mxu0
    %v4968 = vadd.f32 %v4701, %v4967
    %v4969 = vpop.f32.mrb[0].mxu0
    %4970 = vmatprep.mubr.f32.mxu0 0.0
    %4971 = vmatmul.mubr.f32.gmra.mrb[0].mxu0 %v4761
    %v4972 = vpop.f32.mrb[0].mxu0
    %v4973 = vadd.f32 %v4701, %v4972
    %v4974 = vpop.f32.mrb[0].mxu0
    %4975 = vmatprep.mubr.f32.mxu0 0.0
    %4976 = vmatmul.mubr.f32.gmra.mrb[0].mxu0 %v4764
    %v4977 = vpop.f32.mrb[0].mxu0
    %v4978 = vadd.f32 %v4701, %v4977
    %v4979 = vpop.f32.mrb[0].mxu0
    %4980 = vmatprep.mubr.f32.mxu0 0.0
    %4981 = vmatmul.mubr.f32.gmra.mrb[0].mxu0 %v4767
    %v4982 = vpop.f32.mrb[0].mxu0
    %v4983 = vadd.f32 %v4701, %v4982
    %v4984 = vpop.f32.mrb[0].mxu0
    %4985 = vmatprep.mubr.f32.mxu0 0.0
    %4986 = vmatmul.mubr.f32.gmra.mrb[0].mxu0 %v4770
    %v4987 = vpop.f32.mrb[0].mxu0
    %v4988 = vadd.f32 %v4701, %v4987
    %v4989 = vpop.f32.mrb[0].mxu0
    %4990 = vmatprep.mubr.f32.mxu0 0.0
    %4991 = vmatmul.mubr.f32.gmra.mrb[0].mxu0 %v4773
    %v4992 = vpop.f32.mrb[0].mxu0
    %v4993 = vadd.f32 %v4701, %v4992
    %v4994 = vpop.f32.mrb[0].mxu0
    %4995 = vmatprep.mubr.f32.mxu0 0.0
    %4996 = vmatmul.mubr.f32.gmra.mrb[0].mxu0 %v4776
    %v4997 = vpop.f32.mrb[0].mxu0
    %v4998 = vadd.f32 %v4701, %v4997
    %v4999 = vpop.f32.mrb[0].mxu0
    %5000 = vmatprep.mubr.f32.mxu0 0.0
    %5001 = vmatmul.mubr.f32.gmra.mrb[0].mxu0 %v4779
    %v5002 = vpop.f32.mrb[0].mxu0
    %v5003 = vadd.f32 %v4701, %v5002
    %v5004 = vpop.f32.mrb[0].mxu0
    %5005 = vmatprep.mubr.f32.mxu0 0.0
    %5006 = vmatmul.mubr.f32.gmra.mrb[0].mxu0 %v4782
    %v5007 = vpop.f32.mrb[0].mxu0
    %v5008 = vadd.f32 %v4701, %v5007
    %v5009 = vpop.f32.mrb[0].mxu0
    %5010 = vmatprep.mubr.f32.mxu0 0.0
    %5011 = vmatmul.mubr.f32.gmra.mrb[0].mxu0 %v4785
    %v5012 = vpop.f32.mrb[0].mxu0
    %v5013 = vadd.f32 %v4701, %v5012
    %v5014 = vpop.f32.mrb[0].mxu0
    %5015 = vmatprep.mubr.f32.mxu0 0.0
    %5016 = vmatmul.mubr.f32.gmra.mrb[0].mxu0 %v4788
    %v5017 = vpop.f32.mrb[0].mxu0
    %v5018 = vadd.f32 %v4701, %v5017
    %v5019 = vpop.f32.mrb[0].mxu0
    %5020 = vmatprep.mubr.f32.mxu0 0.0
    %5021 = vmatmul.mubr.f32.gmra.mrb[0].mxu0 %v4791
    %v5022 = vpop.f32.mrb[0].mxu0
    %v5023 = vadd.f32 %v4701, %v5022
    %v5024 = vpop.f32.mrb[0].mxu0
    %5025 = vmatprep.mubr.f32.mxu0 0.0
    %5026 = vmatmul.mubr.f32.gmra.mrb[0].mxu0 %v4794
    %v5027 = vpop.f32.mrb[0].mxu0
    %v5028 = vadd.f32 %v4701, %v5027
    %v5029 = vpop.f32.mrb[0].mxu0
    %5030 = vmatprep.mubr.f32.mxu0 0.0
    %5031 = vmatmul.mubr.f32.gmra.mrb[0].mxu0 %v4797
    %v5032 = vpop.f32.mrb[0].mxu0
    %v5033 = vadd.f32 %v4701, %v5032
    %v5034 = vpop.f32.mrb[0].mxu0
    %5035 = vmatprep.mubr.f32.mxu0 0.0
    %5036 = vmatmul.mubr.f32.gmra.mrb[0].mxu0 %v4800
    %v5037 = vpop.f32.mrb[0].mxu0
    %v5038 = vadd.f32 %v4701, %v5037
    %v5039 = vpop.f32.mrb[0].mxu0
    %5040 = vmatprep.mubr.f32.mxu0 0.0
    %5041 = vmatmul.mubr.f32.gmra.mrb[0].mxu0 %v4803
    %v5042 = vpop.f32.mrb[0].mxu0
    %v5043 = vadd.f32 %v4701, %v5042
    %v5044 = vpop.f32.mrb[0].mxu0
    %5045 = vmatprep.mubr.f32.mxu0 0.0
    %5046 = vmatmul.mubr.f32.gmra.mrb[0].mxu0 %v4806
    %v5047 = vpop.f32.mrb[0].mxu0
    %v5048 = vadd.f32 %v4701, %v5047
    %v5049 = vpop.f32.mrb[0].mxu0
    %5050 = vmatprep.mubr.f32.mxu0 0.0
    %5051 = vmatmul.mubr.f32.gmra.mrb[0].mxu0 %v4809
    %v5052 = vpop.f32.mrb[0].mxu0
    %v5053 = vadd.f32 %v4701, %v5052
    %v5054 = vpop.f32.mrb[0].mxu0
    %5055 = vdwg.mxu0
    %v5056 = vmul.f32 %v4878, %v4878
    %v5057 = vmul.f32 %v4883, %v4883
    %v5058 = vmul.f32 %v4888, %v4888
    %v5059 = vmul.f32 %v4893, %v4893
    %v5060 = vmul.f32 %v4898, %v4898
    %v5061 = vmul.f32 %v4903, %v4903
    %v5062 = vmul.f32 %v4908, %v4908
    %v5063 = vmul.f32 %v4913, %v4913
    %v5064 = vmul.f32 %v4918, %v4918
    %v5065 = vmul.f32 %v4923, %v4923
    %v5066 = vmul.f32 %v4928, %v4928
    %v5067 = vmul.f32 %v4933, %v4933
    %v5068 = vmul.f32 %v4938, %v4938
    %v5069 = vmul.f32 %v4943, %v4943
    %v5070 = vmul.f32 %v4948, %v4948
    %v5071 = vmul.f32 %v4953, %v4953
    %v5072 = vmul.f32 %v4958, %v4958
    %v5073 = vmul.f32 %v4963, %v4963
    %v5074 = vmul.f32 %v4968, %v4968
    %v5075 = vmul.f32 %v4973, %v4973
    %v5076 = vmul.f32 %v4978, %v4978
    %v5077 = vmul.f32 %v4983, %v4983
    %v5078 = vmul.f32 %v4988, %v4988
    %v5079 = vmul.f32 %v4993, %v4993
    %v5080 = vmul.f32 %v4998, %v4998
    %v5081 = vmul.f32 %v5003, %v5003
    %v5082 = vmul.f32 %v5008, %v5008
    %v5083 = vmul.f32 %v5013, %v5013
    %v5084 = vmul.f32 %v5018, %v5018
    %v5085 = vmul.f32 %v5023, %v5023
    %v5086 = vmul.f32 %v5028, %v5028
    %v5087 = vmul.f32 %v5033, %v5033
    %v5088 = vmul.f32 %v5038, %v5038
    %v5089 = vmul.f32 %v5043, %v5043
    %v5090 = vmul.f32 %v5048, %v5048
    %v5091 = vmul.f32 %v5053, %v5053
    %5092 = vadd.xlane.f32.xlu0 %v5056
    %v5093 = vpop.xlane.xlu0 %5092
    %5094 = vadd.xlane.f32.xlu0 %v5057
    %v5095 = vpop.xlane.xlu0 %5094
    %5096 = vadd.xlane.f32.xlu0 %v5058
    %v5097 = vpop.xlane.xlu0 %5096
    %5098 = vadd.xlane.f32.xlu0 %v5059
    %v5099 = vpop.xlane.xlu0 %5098
    %5100 = vadd.xlane.f32.xlu0 %v5060
    %v5101 = vpop.xlane.xlu0 %5100
    %5102 = vadd.xlane.f32.xlu0 %v5061
    %v5103 = vpop.xlane.xlu0 %5102
    %5104 = vadd.xlane.f32.xlu0 %v5062
    %v5105 = vpop.xlane.xlu0 %5104
    %5106 = vadd.xlane.f32.xlu0 %v5063
    %v5107 = vpop.xlane.xlu0 %5106
    %5108 = vadd.xlane.f32.xlu0 %v5064
    %v5109 = vpop.xlane.xlu0 %5108
    %5110 = vadd.xlane.f32.xlu0 %v5065
    %v5111 = vpop.xlane.xlu0 %5110
    %5112 = vadd.xlane.f32.xlu0 %v5066
    %v5113 = vpop.xlane.xlu0 %5112
    %5114 = vadd.xlane.f32.xlu0 %v5067
    %v5115 = vpop.xlane.xlu0 %5114
    %5116 = vadd.xlane.f32.xlu0 %v5068
    %v5117 = vpop.xlane.xlu0 %5116
    %5118 = vadd.xlane.f32.xlu0 %v5069
    %v5119 = vpop.xlane.xlu0 %5118
    %5120 = vadd.xlane.f32.xlu0 %v5070
    %v5121 = vpop.xlane.xlu0 %5120
    %5122 = vadd.xlane.f32.xlu0 %v5071
    %v5123 = vpop.xlane.xlu0 %5122
    %5124 = vadd.xlane.f32.xlu0 %v5072
    %v5125 = vpop.xlane.xlu0 %5124
    %5126 = vadd.xlane.f32.xlu0 %v5073
    %v5127 = vpop.xlane.xlu0 %5126
    %5128 = vadd.xlane.f32.xlu0 %v5074
    %v5129 = vpop.xlane.xlu0 %5128
    %5130 = vadd.xlane.f32.xlu0 %v5075
    %v5131 = vpop.xlane.xlu0 %5130
    %5132 = vadd.xlane.f32.xlu0 %v5076
    %v5133 = vpop.xlane.xlu0 %5132
    %5134 = vadd.xlane.f32.xlu0 %v5077
    %v5135 = vpop.xlane.xlu0 %5134
    %5136 = vadd.xlane.f32.xlu0 %v5078
    %v5137 = vpop.xlane.xlu0 %5136
    %5138 = vadd.xlane.f32.xlu0 %v5079
    %v5139 = vpop.xlane.xlu0 %5138
    %5140 = vadd.xlane.f32.xlu0 %v5080
    %v5141 = vpop.xlane.xlu0 %5140
    %5142 = vadd.xlane.f32.xlu0 %v5081
    %v5143 = vpop.xlane.xlu0 %5142
    %5144 = vadd.xlane.f32.xlu0 %v5082
    %v5145 = vpop.xlane.xlu0 %5144
    %5146 = vadd.xlane.f32.xlu0 %v5083
    %v5147 = vpop.xlane.xlu0 %5146
    %5148 = vadd.xlane.f32.xlu0 %v5084
    %v5149 = vpop.xlane.xlu0 %5148
    %5150 = vadd.xlane.f32.xlu0 %v5085
    %v5151 = vpop.xlane.xlu0 %5150
    %5152 = vadd.xlane.f32.xlu0 %v5086
    %v5153 = vpop.xlane.xlu0 %5152
    %5154 = vadd.xlane.f32.xlu0 %v5087
    %v5155 = vpop.xlane.xlu0 %5154
    %5156 = vadd.xlane.f32.xlu0 %v5088
    %v5157 = vpop.xlane.xlu0 %5156
    %5158 = vadd.xlane.f32.xlu0 %v5089
    %v5159 = vpop.xlane.xlu0 %5158
    %5160 = vadd.xlane.f32.xlu0 %v5090
    %v5161 = vpop.xlane.xlu0 %5160
    %5162 = vadd.xlane.f32.xlu0 %v5091
    %v5163 = vpop.xlane.xlu0 %5162
    %v5164 = vmax.f32 %v5093, 1e-24
    %v5165 = vmax.f32 %v5095, 1e-24
    %v5166 = vmax.f32 %v5097, 1e-24
    %v5167 = vmax.f32 %v5099, 1e-24
    %v5168 = vmax.f32 %v5101, 1e-24
    %v5169 = vmax.f32 %v5103, 1e-24
    %v5170 = vmax.f32 %v5105, 1e-24
    %v5171 = vmax.f32 %v5107, 1e-24
    %v5172 = vmax.f32 %v5109, 1e-24
    %v5173 = vmax.f32 %v5111, 1e-24
    %v5174 = vmax.f32 %v5113, 1e-24
    %v5175 = vmax.f32 %v5115, 1e-24
    %v5176 = vmax.f32 %v5117, 1e-24
    %v5177 = vmax.f32 %v5119, 1e-24
    %v5178 = vmax.f32 %v5121, 1e-24
    %v5179 = vmax.f32 %v5123, 1e-24
    %v5180 = vmax.f32 %v5125, 1e-24
    %v5181 = vmax.f32 %v5127, 1e-24
    %v5182 = vmax.f32 %v5129, 1e-24
    %v5183 = vmax.f32 %v5131, 1e-24
    %v5184 = vmax.f32 %v5133, 1e-24
    %v5185 = vmax.f32 %v5135, 1e-24
    %v5186 = vmax.f32 %v5137, 1e-24
    %v5187 = vmax.f32 %v5139, 1e-24
    %v5188 = vmax.f32 %v5141, 1e-24
    %v5189 = vmax.f32 %v5143, 1e-24
    %v5190 = vmax.f32 %v5145, 1e-24
    %v5191 = vmax.f32 %v5147, 1e-24
    %v5192 = vmax.f32 %v5149, 1e-24
    %v5193 = vmax.f32 %v5151, 1e-24
    %v5194 = vmax.f32 %v5153, 1e-24
    %v5195 = vmax.f32 %v5155, 1e-24
    %v5196 = vmax.f32 %v5157, 1e-24
    %v5197 = vmax.f32 %v5159, 1e-24
    %v5198 = vmax.f32 %v5161, 1e-24
    %v5199 = vmax.f32 %v5163, 1e-24
    %v5200 = vrsqrt.pop %v5164
    %v5201 = vrsqrt.pop %v5165
    %v5202 = vrsqrt.pop %v5166
    %v5203 = vrsqrt.pop %v5167
    %v5204 = vrsqrt.pop %v5168
    %v5205 = vrsqrt.pop %v5169
    %v5206 = vrsqrt.pop %v5170
    %v5207 = vrsqrt.pop %v5171
    %v5208 = vrsqrt.pop %v5172
    %v5209 = vrsqrt.pop %v5173
    %v5210 = vrsqrt.pop %v5174
    %v5211 = vrsqrt.pop %v5175
    %v5212 = vrsqrt.pop %v5176
    %v5213 = vrsqrt.pop %v5177
    %v5214 = vrsqrt.pop %v5178
    %v5215 = vrsqrt.pop %v5179
    %v5216 = vrsqrt.pop %v5180
    %v5217 = vrsqrt.pop %v5181
    %v5218 = vrsqrt.pop %v5182
    %v5219 = vrsqrt.pop %v5183
    %v5220 = vrsqrt.pop %v5184
    %v5221 = vrsqrt.pop %v5185
    %v5222 = vrsqrt.pop %v5186
    %v5223 = vrsqrt.pop %v5187
    %v5224 = vrsqrt.pop %v5188
    %v5225 = vrsqrt.pop %v5189
    %v5226 = vrsqrt.pop %v5190
    %v5227 = vrsqrt.pop %v5191
    %v5228 = vrsqrt.pop %v5192
    %v5229 = vrsqrt.pop %v5193
    %v5230 = vrsqrt.pop %v5194
    %v5231 = vrsqrt.pop %v5195
    %v5232 = vrsqrt.pop %v5196
    %v5233 = vrsqrt.pop %v5197
    %v5234 = vrsqrt.pop %v5198
    %v5235 = vrsqrt.pop %v5199
    %v5236 = vmul.f32 %v4878, %v5200
    %v5237 = vmul.f32 %v4883, %v5201
    %v5238 = vmul.f32 %v4888, %v5202
    %v5239 = vmul.f32 %v4893, %v5203
    %v5240 = vmul.f32 %v4898, %v5204
    %v5241 = vmul.f32 %v4903, %v5205
    %v5242 = vmul.f32 %v4908, %v5206
    %v5243 = vmul.f32 %v4913, %v5207
    %v5244 = vmul.f32 %v4918, %v5208
    %v5245 = vmul.f32 %v4923, %v5209
    %v5246 = vmul.f32 %v4928, %v5210
    %v5247 = vmul.f32 %v4933, %v5211
    %v5248 = vmul.f32 %v4938, %v5212
    %v5249 = vmul.f32 %v4943, %v5213
    %v5250 = vmul.f32 %v4948, %v5214
    %v5251 = vmul.f32 %v4953, %v5215
    %v5252 = vmul.f32 %v4958, %v5216
    %v5253 = vmul.f32 %v4963, %v5217
    %v5254 = vmul.f32 %v4968, %v5218
    %v5255 = vmul.f32 %v4973, %v5219
    %v5256 = vmul.f32 %v4978, %v5220
    %v5257 = vmul.f32 %v4983, %v5221
    %v5258 = vmul.f32 %v4988, %v5222
    %v5259 = vmul.f32 %v4993, %v5223
    %v5260 = vmul.f32 %v4998, %v5224
    %v5261 = vmul.f32 %v5003, %v5225
    %v5262 = vmul.f32 %v5008, %v5226
    %v5263 = vmul.f32 %v5013, %v5227
    %v5264 = vmul.f32 %v5018, %v5228
    %v5265 = vmul.f32 %v5023, %v5229
    %v5266 = vmul.f32 %v5028, %v5230
    %v5267 = vmul.f32 %v5033, %v5231
    %v5268 = vmul.f32 %v5038, %v5232
    %v5269 = vmul.f32 %v5043, %v5233
    %v5270 = vmul.f32 %v5048, %v5234
    %v5271 = vmul.f32 %v5053, %v5235
    %5272 = vst [vmem:[#allocation3] sm:$0xff] %v5236
    %5273 = vst [vmem:[#allocation3 + $0x8] sm:$0xff] %v5237
    %5274 = vst [vmem:[#allocation3 + $0x10] sm:$0xff] %v5238
    %5275 = vst [vmem:[#allocation3 + $0x18] sm:$0xff] %v5239
    %5276 = vst [vmem:[#allocation3 + $0x20] sm:$0xff] %v5240
    %5277 = vst [vmem:[#allocation3 + $0x28] sm:$0xff] %v5241
    %5278 = vst [vmem:[#allocation3 + $0x30] sm:$0xff] %v5242
    %5279 = vst [vmem:[#allocation3 + $0x38] sm:$0xff] %v5243
    %5280 = vst [vmem:[#allocation3 + $0x40] sm:$0xff] %v5244
    %5281 = vst [vmem:[#allocation3 + $0x48] sm:$0xff] %v5245
    %5282 = vst [vmem:[#allocation3 + $0x50] sm:$0xff] %v5246
    %5283 = vst [vmem:[#allocation3 + $0x58] sm:$0xff] %v5247
    %5284 = vst [vmem:[#allocation3 + $0x60] sm:$0xff] %v5248
    %5285 = vst [vmem:[#allocation3 + $0x68] sm:$0xff] %v5249
    %5286 = vst [vmem:[#allocation3 + $0x70] sm:$0xff] %v5250
    %5287 = vst [vmem:[#allocation3 + $0x78] sm:$0xff] %v5251
    %5288 = vst [vmem:[#allocation3 + $0x80] sm:$0xff] %v5252
    %5289 = vst [vmem:[#allocation3 + $0x88] sm:$0xff] %v5253
    %5290 = vst [vmem:[#allocation3 + $0x90] sm:$0xff] %v5254
    %5291 = vst [vmem:[#allocation3 + $0x98] sm:$0xff] %v5255
    %5292 = vst [vmem:[#allocation3 + $0xa0] sm:$0xff] %v5256
    %5293 = vst [vmem:[#allocation3 + $0xa8] sm:$0xff] %v5257
    %5294 = vst [vmem:[#allocation3 + $0xb0] sm:$0xff] %v5258
    %5295 = vst [vmem:[#allocation3 + $0xb8] sm:$0xff] %v5259
    %5296 = vst [vmem:[#allocation3 + $0xc0] sm:$0xff] %v5260
    %5297 = vst [vmem:[#allocation3 + $0xc8] sm:$0xff] %v5261
    %5298 = vst [vmem:[#allocation3 + $0xd0] sm:$0xff] %v5262
    %5299 = vst [vmem:[#allocation3 + $0xd8] sm:$0xff] %v5263
    %5300 = vst [vmem:[#allocation3 + $0xe0] sm:$0xff] %v5264
    %5301 = vst [vmem:[#allocation3 + $0xe8] sm:$0xff] %v5265
    %5302 = vst [vmem:[#allocation3 + $0xf0] sm:$0xff] %v5266
    %5303 = vst [vmem:[#allocation3 + $0xf8] sm:$0xff] %v5267
    %5304 = vst [vmem:[#allocation3 + $0x100] sm:$0xff] %v5268
    %5305 = vst [vmem:[#allocation3 + $0x108] sm:$0xff] %v5269
    %5306 = vst [vmem:[#allocation3 + $0x110] sm:$0xff] %v5270
    %5307 = vst [vmem:[#allocation3 + $0x118] sm:$0xff] %v5271
    %v5308 = vld [vmem:[%s5] sm:$0xff]
    %v5309 = vadd.f32 %v5308, 1.0
    %v5310 = vmul.f32 %v5309, 16.0
    %v5311 = vsub.f32 %v5310, 1.0
    %v5312 = vmul.f32 %v5311, 0.5
    %v5313 = vfloor.f32 %v5312
    %v5314 = vsub.f32 %v5312, %v5313
    %v5315 = vsub.f32 1.0, %v5314
    %v5316 = vcvt.f32.s32.to.zero.pseudo %v5313
    %v5317 = vlaneseq
    %v5318 = vand.u32 %v5317, 127
    %v5319 = vadd.s32 %v5318, 128
    %v5320 = vadd.s32 %v5318, 256
    %5322 = vrot.lane.b32.xlu0 %v5315, 1
    %v5323 = vpop.permute.xlu0 %5322
    %v5325 = vmul.f32 %v5315, %v5323
    %vm5326 = vcmp.ge.s32.totalorder %v5316, 0
    %vm5327 = vcmp.lt.s32.totalorder %v5316, 16
    %vm5328 = vmand %vm5326, %vm5327
    %v5329 = vsel %vm5326, 1, 0
    %5330 = vrot.lane.b32.xlu0 %v5329, 127
    %v5331 = vpop.permute.xlu0 %5330
    %vm5332 = vcmp.ne.s32.totalorder %v5331, 0
    %vm5333 = vmand %vm5328, %vm5332
    %v5334 = vsel %vm5327, 1, 0
    %5335 = vrot.lane.b32.xlu0 %v5334, 127
    %v5336 = vpop.permute.xlu0 %5335
    %vm5337 = vcmp.ne.s32.totalorder %v5336, 0
    %vm5338 = vmand %vm5333, %vm5337
    %v5339 = vsel %vm5338, 1, 0
    %v5340 = vcvt.s32.f32 %v5339
    %vm5341 = vcmp.gt.s32.totalorder %v5316, 0
    %v5342 = vsel %vm5341, %v5316, 0
    %vm5343 = vcmp.lt.s32.totalorder %v5342, 15
    %v5344 = vsel %vm5343, %v5342, 15
    %v5345 = vmul.u32 %v5344, 18
    %5346 = vrot.lane.b32.xlu0 %v5344, 1
    %v5347 = vpop.permute.xlu0 %5346
    %v5348 = vadd.s32 %v5345, %v5347
    %5349 = vset.pattern.permute.xlu0 1
    %5350 = vperm.xlu0 %5349, %v5348
    %v5351 = vpop.permute.xlu0 %5350
    %vm5352 = vcmp.eq.s32.totalorder %v5318, %v5351
    %vm5353 = vcmp.eq.s32.totalorder %v5319, %v5351
    %vm5354 = vcmp.eq.s32.totalorder %v5320, %v5351
    %v5355 = vsel %vm5352, 1, 0
    %v5356 = vsel %vm5353, 1, 0
    %v5357 = vsel %vm5354, 1, 0
    %v5358 = vcvt.s32.f32 %v5355
    %v5359 = vcvt.s32.f32 %v5356
    %v5360 = vcvt.s32.f32 %v5357
    %5362 = vrot.lane.b32.xlu0 %v5340, 1
    %v5363 = vpop.permute.xlu0 %5362
    %v5365 = vmul.f32 %v5325, %v5363
    %5367 = vset.pattern.permute.xlu0 1
    %5368 = vperm.xlu0 %5367, %v5365
    %v5369 = vpop.permute.xlu0 %5368
    %v5371 = vmul.f32 %v5358, %v5369
    %v5372 = vmul.f32 %v5359, %v5369
    %v5373 = vmul.f32 %v5360, %v5369
    %v5374 = vadd.s32 %v5316, 1
    %5376 = vrot.lane.b32.xlu0 %v5314, 1
    %v5377 = vpop.permute.xlu0 %5376
    %v5379 = vmul.f32 %v5315, %v5377
    %vm5380 = vcmp.ge.s32.totalorder %v5374, 0
    %vm5381 = vcmp.lt.s32.totalorder %v5374, 16
    %vm5382 = vmand %vm5380, %vm5381
    %vm5383 = vmand %vm5382, %vm5332
    %vm5384 = vmand %vm5383, %vm5337
    %v5385 = vsel %vm5384, 1, 0
    %v5386 = vcvt.s32.f32 %v5385
    %vm5387 = vcmp.gt.s32.totalorder %v5374, 0
    %v5388 = vsel %vm5387, %v5374, 0
    %vm5389 = vcmp.lt.s32.totalorder %v5388, 15
    %v5390 = vsel %vm5389, %v5388, 15
    %5391 = vrot.lane.b32.xlu0 %v5390, 1
    %v5392 = vpop.permute.xlu0 %5391
    %v5393 = vadd.s32 %v5345, %v5392
    %5394 = vset.pattern.permute.xlu0 1
    %5395 = vperm.xlu0 %5394, %v5393
    %v5396 = vpop.permute.xlu0 %5395
    %vm5397 = vcmp.eq.s32.totalorder %v5318, %v5396
    %vm5398 = vcmp.eq.s32.totalorder %v5319, %v5396
    %vm5399 = vcmp.eq.s32.totalorder %v5320, %v5396
    %v5400 = vsel %vm5397, 1, 0
    %v5401 = vsel %vm5398, 1, 0
    %v5402 = vsel %vm5399, 1, 0
    %v5403 = vcvt.s32.f32 %v5400
    %v5404 = vcvt.s32.f32 %v5401
    %v5405 = vcvt.s32.f32 %v5402
    %5407 = vrot.lane.b32.xlu0 %v5386, 1
    %v5408 = vpop.permute.xlu0 %5407
    %v5410 = vmul.f32 %v5379, %v5408
    %5412 = vset.pattern.permute.xlu0 1
    %5413 = vperm.xlu0 %5412, %v5410
    %v5414 = vpop.permute.xlu0 %5413
    %v5416 = vmul.f32 %v5403, %v5414
    %v5417 = vmul.f32 %v5404, %v5414
    %v5418 = vmul.f32 %v5405, %v5414
    %v5419 = vadd.f32 %v5371, %v5416
    %v5420 = vadd.f32 %v5372, %v5417
    %v5421 = vadd.f32 %v5373, %v5418
    %v5422 = vmul.f32 %v5314, %v5323
    %v5423 = vsel %vm5380, 1, 0
    %5424 = vrot.lane.b32.xlu0 %v5423, 127
    %v5425 = vpop.permute.xlu0 %5424
    %vm5426 = vcmp.ne.s32.totalorder %v5425, 0
    %vm5427 = vmand %vm5328, %vm5426
    %v5428 = vsel %vm5381, 1, 0
    %5429 = vrot.lane.b32.xlu0 %v5428, 127
    %v5430 = vpop.permute.xlu0 %5429
    %vm5431 = vcmp.ne.s32.totalorder %v5430, 0
    %vm5432 = vmand %vm5427, %vm5431
    %v5433 = vsel %vm5432, 1, 0
    %v5434 = vcvt.s32.f32 %v5433
    %v5435 = vmul.u32 %v5390, 18
    %v5436 = vadd.s32 %v5435, %v5347
    %5437 = vset.pattern.permute.xlu0 1
    %5438 = vperm.xlu0 %5437, %v5436
    %v5439 = vpop.permute.xlu0 %5438
    %vm5440 = vcmp.eq.s32.totalorder %v5318, %v5439
    %vm5441 = vcmp.eq.s32.totalorder %v5319, %v5439
    %vm5442 = vcmp.eq.s32.totalorder %v5320, %v5439
    %v5443 = vsel %vm5440, 1, 0
    %v5444 = vsel %vm5441, 1, 0
    %v5445 = vsel %vm5442, 1, 0
    %v5446 = vcvt.s32.f32 %v5443
    %v5447 = vcvt.s32.f32 %v5444
    %v5448 = vcvt.s32.f32 %v5445
    %5450 = vrot.lane.b32.xlu0 %v5434, 1
    %v5451 = vpop.permute.xlu0 %5450
    %v5453 = vmul.f32 %v5422, %v5451
    %5455 = vset.pattern.permute.xlu0 1
    %5456 = vperm.xlu0 %5455, %v5453
    %v5457 = vpop.permute.xlu0 %5456
    %v5459 = vmul.f32 %v5446, %v5457
    %v5460 = vmul.f32 %v5447, %v5457
    %v5461 = vmul.f32 %v5448, %v5457
    %v5462 = vadd.f32 %v5419, %v5459
    %v5463 = vadd.f32 %v5420, %v5460
    %v5464 = vadd.f32 %v5421, %v5461
    %v5465 = vmul.f32 %v5314, %v5377
    %vm5466 = vmand %vm5382, %vm5426
    %vm5467 = vmand %vm5466, %vm5431
    %v5468 = vsel %vm5467, 1, 0
    %v5469 = vcvt.s32.f32 %v5468
    %v5470 = vadd.s32 %v5435, %v5392
    %5471 = vset.pattern.permute.xlu0 1
    %5472 = vperm.xlu0 %5471, %v5470
    %v5473 = vpop.permute.xlu0 %5472
    %vm5474 = vcmp.eq.s32.totalorder %v5318, %v5473
    %vm5475 = vcmp.eq.s32.totalorder %v5319, %v5473
    %vm5476 = vcmp.eq.s32.totalorder %v5320, %v5473
    %v5477 = vsel %vm5474, 1, 0
    %v5478 = vsel %vm5475, 1, 0
    %v5479 = vsel %vm5476, 1, 0
    %v5480 = vcvt.s32.f32 %v5477
    %v5481 = vcvt.s32.f32 %v5478
    %v5482 = vcvt.s32.f32 %v5479
    %5484 = vrot.lane.b32.xlu0 %v5469, 1
    %v5485 = vpop.permute.xlu0 %5484
    %v5487 = vmul.f32 %v5465, %v5485
    %5489 = vset.pattern.permute.xlu0 1
    %5490 = vperm.xlu0 %5489, %v5487
    %v5491 = vpop.permute.xlu0 %5490
    %v5493 = vmul.f32 %v5480, %v5491
    %v5494 = vmul.f32 %v5481, %v5491
    %v5495 = vmul.f32 %v5482, %v5491
    %v5496 = vadd.f32 %v5462, %v5493
    %v5497 = vadd.f32 %v5463, %v5494
    %v5498 = vadd.f32 %v5464, %v5495
    %v5499 = vld [vmem:[#allocation3] sm:$0xff]
    %v5500 = vld [vmem:[#allocation3 + $0x8] sm:$0xff]
    %v5501 = vld [vmem:[#allocation3 + $0x10] sm:$0xff]
    %v5502 = vld [vmem:[#allocation3 + $0x18] sm:$0xff]
    %v5503 = vld [vmem:[#allocation3 + $0x20] sm:$0xff]
    %v5504 = vld [vmem:[#allocation3 + $0x28] sm:$0xff]
    %v5505 = vld [vmem:[#allocation3 + $0x30] sm:$0xff]
    %v5506 = vld [vmem:[#allocation3 + $0x38] sm:$0xff]
    %v5507 = vld [vmem:[#allocation3 + $0x40] sm:$0xff]
    %v5508 = vld [vmem:[#allocation3 + $0x48] sm:$0xff]
    %v5509 = vld [vmem:[#allocation3 + $0x50] sm:$0xff]
    %v5510 = vld [vmem:[#allocation3 + $0x58] sm:$0xff]
    %v5511 = vld [vmem:[#allocation3 + $0x60] sm:$0xff]
    %v5512 = vld [vmem:[#allocation3 + $0x68] sm:$0xff]
    %v5513 = vld [vmem:[#allocation3 + $0x70] sm:$0xff]
    %v5514 = vld [vmem:[#allocation3 + $0x78] sm:$0xff]
    %v5515 = vld [vmem:[#allocation3 + $0x80] sm:$0xff]
    %v5516 = vld [vmem:[#allocation3 + $0x88] sm:$0xff]
    %v5517 = vld [vmem:[#allocation3 + $0x90] sm:$0xff]
    %v5518 = vld [vmem:[#allocation3 + $0x98] sm:$0xff]
    %v5519 = vld [vmem:[#allocation3 + $0xa0] sm:$0xff]
    %v5520 = vld [vmem:[#allocation3 + $0xa8] sm:$0xff]
    %v5521 = vld [vmem:[#allocation3 + $0xb0] sm:$0xff]
    %v5522 = vld [vmem:[#allocation3 + $0xb8] sm:$0xff]
    %v5523 = vld [vmem:[#allocation3 + $0xc0] sm:$0xff]
    %v5524 = vld [vmem:[#allocation3 + $0xc8] sm:$0xff]
    %v5525 = vld [vmem:[#allocation3 + $0xd0] sm:$0xff]
    %v5526 = vld [vmem:[#allocation3 + $0xd8] sm:$0xff]
    %v5527 = vld [vmem:[#allocation3 + $0xe0] sm:$0xff]
    %v5528 = vld [vmem:[#allocation3 + $0xe8] sm:$0xff]
    %v5529 = vld [vmem:[#allocation3 + $0xf0] sm:$0xff]
    %v5530 = vld [vmem:[#allocation3 + $0xf8] sm:$0xff]
    %v5531 = vld [vmem:[#allocation3 + $0x100] sm:$0xff]
    %v5532 = vld [vmem:[#allocation3 + $0x108] sm:$0xff]
    %v5533 = vld [vmem:[#allocation3 + $0x110] sm:$0xff]
    %v5534 = vld [vmem:[#allocation3 + $0x118] sm:$0xff]
    %vm5535 = vcmask 261120
    %v5537 = vsel %vm5535, %v5498, 0
    %5539 = vmatprep.subr.mxu0 0.0
    %5540 = vmatpush1.msra.mxu0 %v5499
    %5541 = vmatprep.subr.mxu0 0.0
    %5542 = vmatpush1.msra.mxu0 %v5500
    %5543 = vmatprep.subr.mxu0 0.0
    %5544 = vmatpush1.msra.mxu0 %v5501
    %5545 = vmatprep.subr.mxu0 0.0
    %5546 = vmatpush1.msra.mxu0 %v5502
    %5547 = vmatprep.subr.mxu0 0.0
    %5548 = vmatpush1.msra.mxu0 %v5503
    %5549 = vmatprep.subr.mxu0 0.0
    %5550 = vmatpush1.msra.mxu0 %v5504
    %5551 = vmatprep.subr.mxu0 0.0
    %5552 = vmatpush1.msra.mxu0 %v5505
    %5553 = vmatprep.subr.mxu0 0.0
    %5554 = vmatpush1.msra.mxu0 %v5506
    %5555 = vmatprep.subr.mxu0 0.0
    %5556 = vmatpush1.msra.mxu0 %v5507
    %5557 = vmatprep.subr.mxu0 0.0
    %5558 = vmatpush1.msra.mxu0 %v5508
    %5559 = vmatprep.subr.mxu0 0.0
    %5560 = vmatpush1.msra.mxu0 %v5509
    %5561 = vmatprep.subr.mxu0 0.0
    %5562 = vmatpush1.msra.mxu0 %v5510
    %5563 = vmatprep.subr.mxu0 0.0
    %5564 = vmatpush1.msra.mxu0 %v5511
    %5565 = vmatprep.subr.mxu0 0.0
    %5566 = vmatpush1.msra.mxu0 %v5512
    %5567 = vmatprep.subr.mxu0 0.0
    %5568 = vmatpush1.msra.mxu0 %v5513
    %5569 = vmatprep.subr.mxu0 0.0
    %5570 = vmatpush1.msra.mxu0 %v5514
    %5571 = vmatprep.subr.mxu0 0.0
    %5572 = vmatpush1.msra.mxu0 %v5515
    %5573 = vmatprep.subr.mxu0 0.0
    %5574 = vmatpush1.msra.mxu0 %v5516
    %5575 = vmatprep.subr.mxu0 0.0
    %5576 = vmatpush1.msra.mxu0 %v5517
    %5577 = vmatprep.subr.mxu0 0.0
    %5578 = vmatpush1.msra.mxu0 %v5518
    %5579 = vmatprep.subr.mxu0 0.0
    %5580 = vmatpush1.msra.mxu0 %v5519
    %5581 = vmatprep.subr.mxu0 0.0
    %5582 = vmatpush1.msra.mxu0 %v5520
    %5583 = vmatprep.subr.mxu0 0.0
    %5584 = vmatpush1.msra.mxu0 %v5521
    %5585 = vmatprep.subr.mxu0 0.0
    %5586 = vmatpush1.msra.mxu0 %v5522
    %5587 = vmatprep.subr.mxu0 0.0
    %5588 = vmatpush1.msra.mxu0 %v5523
    %5589 = vmatprep.subr.mxu0 0.0
    %5590 = vmatpush1.msra.mxu0 %v5524
    %5591 = vmatprep.subr.mxu0 0.0
    %5592 = vmatpush1.msra.mxu0 %v5525
    %5593 = vmatprep.subr.mxu0 0.0
    %5594 = vmatpush1.msra.mxu0 %v5526
    %5595 = vmatprep.subr.mxu0 0.0
    %5596 = vmatpush1.msra.mxu0 %v5527
    %5597 = vmatprep.subr.mxu0 0.0
    %5598 = vmatpush1.msra.mxu0 %v5528
    %5599 = vmatprep.subr.mxu0 0.0
    %5600 = vmatpush1.msra.mxu0 %v5529
    %5601 = vmatprep.subr.mxu0 0.0
    %5602 = vmatpush1.msra.mxu0 %v5530
    %5603 = vmatprep.mubr.f32.mxu0 %v5497
    %5604 = vmatmul.mubr.f32.gmra.mrb[0].mxu0 %v5496
    %v5605 = vpop.f32.mrb[0].mxu0
    %v5606 = vadd.f32 0.0, %v5605
    %v5607 = vpop.f32.mrb[0].mxu0
    %5608 = vdwg.mxu0
    %5609 = vmatprep.subr.mxu0 0.0
    %5610 = vmatpush1.msra.mxu0 %v5531
    %5611 = vmatprep.subr.mxu0 0.0
    %5612 = vmatpush1.msra.mxu0 %v5532
    %5613 = vmatprep.subr.mxu0 0.0
    %5614 = vmatpush1.msra.mxu0 %v5533
    %5615 = vmatprep.subr.mxu0 0.0
    %5616 = vmatpush1.msra.mxu0 %v5534
    %5617 = vmatprep.subr.mxu0 0.0
    %5618 = vmatpush1.msra.mxu0 0.0
    %5619 = vmatprep.subr.mxu0 0.0
    %5620 = vmatpush1.msra.mxu0 0.0
    %5621 = vmatprep.subr.mxu0 0.0
    %5622 = vmatpush1.msra.mxu0 0.0
    %5623 = vmatprep.subr.mxu0 0.0
    %5624 = vmatpush1.msra.mxu0 0.0
    %5625 = vmatprep.subr.mxu0 0.0
    %5626 = vmatpush1.msra.mxu0 0.0
    %5627 = vmatprep.subr.mxu0 0.0
    %5628 = vmatpush1.msra.mxu0 0.0
    %5629 = vmatprep.subr.mxu0 0.0
    %5630 = vmatpush1.msra.mxu0 0.0
    %5631 = vmatprep.subr.mxu0 0.0
    %5632 = vmatpush1.msra.mxu0 0.0
    %5633 = vmatprep.subr.mxu0 0.0
    %5634 = vmatpush1.msra.mxu0 0.0
    %5635 = vmatprep.subr.mxu0 0.0
    %5636 = vmatpush1.msra.mxu0 0.0
    %5637 = vmatprep.subr.mxu0 0.0
    %5638 = vmatpush1.msra.mxu0 0.0
    %5639 = vmatprep.subr.mxu0 0.0
    %5640 = vmatpush1.msra.mxu0 0.0
    %5641 = vmatprep.subr.mxu0 0.0
    %5642 = vmatpush1.msra.mxu0 0.0
    %5643 = vmatprep.subr.mxu0 0.0
    %5644 = vmatpush1.msra.mxu0 0.0
    %5645 = vmatprep.subr.mxu0 0.0
    %5646 = vmatpush1.msra.mxu0 0.0
    %5647 = vmatprep.subr.mxu0 0.0
    %5648 = vmatpush1.msra.mxu0 0.0
    %5649 = vmatprep.subr.mxu0 0.0
    %5650 = vmatpush1.msra.mxu0 0.0
    %5651 = vmatprep.subr.mxu0 0.0
    %5652 = vmatpush1.msra.mxu0 0.0
    %5653 = vmatprep.subr.mxu0 0.0
    %5654 = vmatpush1.msra.mxu0 0.0
    %5655 = vmatprep.subr.mxu0 0.0
    %5656 = vmatpush1.msra.mxu0 0.0
    %5657 = vmatprep.subr.mxu0 0.0
    %5658 = vmatpush1.msra.mxu0 0.0
    %5659 = vmatprep.subr.mxu0 0.0
    %5660 = vmatpush1.msra.mxu0 0.0
    %5661 = vmatprep.subr.mxu0 0.0
    %5662 = vmatpush1.msra.mxu0 0.0
    %5663 = vmatprep.subr.mxu0 0.0
    %5664 = vmatpush1.msra.mxu0 0.0
    %5665 = vmatprep.subr.mxu0 0.0
    %5666 = vmatpush1.msra.mxu0 0.0
    %5667 = vmatprep.subr.mxu0 0.0
    %5668 = vmatpush1.msra.mxu0 0.0
    %5669 = vmatprep.subr.mxu0 0.0
    %5670 = vmatpush1.msra.mxu0 0.0
    %5671 = vmatprep.subr.mxu0 0.0
    %5672 = vmatpush1.msra.mxu0 0.0
    %5673 = vmatprep.mubr.f32.mxu0 0.0
    %5674 = vmatmul.mubr.f32.gmra.mrb[0].mxu0 %v5537
    %v5675 = vpop.f32.mrb[0].mxu0
    %v5676 = vadd.f32 %v5606, %v5675
    %v5677 = vpop.f32.mrb[0].mxu0
    %5678 = vdwg.mxu0
    %v5679 = vmul.f32 %v5676, %v5676
    %5680 = vadd.xlane.f32.xlu0 %v5679
    %v5681 = vpop.xlane.xlu0 %5680
    %v5682 = vmax.f32 %v5681, 1e-24
    %v5683 = vrsqrt.pop %v5682
    %v5684 = vmul.f32 %v5676, %v5683
    %5685 = vst [vmem:[#allocation4] sm:$0xff] %v5684
    // Predicated region
    $region26: #{sp_descriptor_forward.1} parent=1 // pred_check
      _
    $region27: #{sp_descriptor_forward.1} parent=1 // pred_check_branch
      %5687 = sbr.rel (0) target = $region29
    $region28: #{sp_descriptor_forward.1} parent=1 // pred_region
      %s5689 = ssub.s32 128, 128
      %5690 = vsyncadd [#allocation5], %s5689
      %s5692 = sshll.u32 [#allocation4], 4
      %s5693 = int_to_ptr.vmem [resolvable:$true] %s5692
      %5695 = dma.vmem_to_hbm [thread:$0]  %s5693, 128, %s6, [#allocation5]
    $region29: #{sp_descriptor_forward.1} parent=1 // pred_fallthru
      _
    // Predicated region
    $region30: #{sp_descriptor_forward.1} parent=1 // pred_check
      _
    $region31: #{sp_descriptor_forward.1} parent=1 // pred_check_branch
      %5697 = sbr.rel (0) target = $region33
    $region32: #{sp_descriptor_forward.1} parent=1 // pred_region
      %5698 = dma.done [#allocation5], 128
    $region33: #{sp_descriptor_forward.1} parent=1 // pred_fallthru
      _
    %5699 = vsyncpa [#allocation5], 1

</llo_original>
